<compile_context>
chip_gen: v5e
topology: v5e:2x2
jax: 0.10.0
libtpu: 0.0.40
codegen_flags: <defaults>
</compile_context>

<pallas_src>
import math

import jax
import jax.numpy as jnp
from jax.experimental import pallas as pl
from jax.experimental.pallas import tpu as pltpu

NEG_SLOPE = 0.2          # PyG GATConv leaky_relu default
NEG_INF = -1e30          # masked-edge score; stays finite in f32, underflows in exp


def _leaky_relu(x):
    return jnp.where(x > 0, x, NEG_SLOPE * x)


def _elu(x):
    # Clamp the exp argument so the (discarded) negative branch never overflows to inf.
    return jnp.where(x > 0, x, jnp.exp(jnp.minimum(x, 0.0)) - 1.0)


def _round_up(v, m):
    return -(-v // m) * m


# --------------------------------------------------------------------------------------
# Layer 1: projecting GATConv (+ ELU) whose epilogue also emits layer-2's projections.
#   waug1  = [W1 | W1 a_src1 | W1 a_dst1]            (c_in,  c_out + 2)
#   wnext  = [W2 | W2 a_src2 | W2 a_dst2]            (c_out, c_out2 + 2)
#   output = ELU(conv1(x)) @ wnext                    (n_pad, c_out2 + 2)
# --------------------------------------------------------------------------------------
def _make_layer1_kernel(c_out):
    def kernel(xq_ref, xk_ref, adj_ref, waug_ref, b_ref, wnext_ref, o_ref,
               m_sc, l_sc, acc_sc, d_sc):
        ki = pl.program_id(1)
        nk = pl.num_programs(1)
        wa = waug_ref[...]                                   # (c_in, c_out + 2)

        @pl.when(ki == 0)
        def _init():
            # d_i = x_i @ (W a_dst): once per row block.
            d_sc[...] = jnp.dot(xq_ref[...], wa[:, c_out + 1:c_out + 2],
                                preferred_element_type=jnp.float32)
            m_sc[...] = jnp.full(m_sc.shape, -jnp.inf, jnp.float32)
            l_sc[...] = jnp.zeros(l_sc.shape, jnp.float32)
            acc_sc[...] = jnp.zeros(acc_sc.shape, jnp.float32)

        # One MXU pass gives projected neighbors AND their source scores.
        hs = jnp.dot(xk_ref[...], wa, preferred_element_type=jnp.float32)  # (tk, c_out+2)
        h_k = hs[:, :c_out]                                  # (tk, c_out)
        s_k = hs[:, c_out:c_out + 1]                         # (tk, 1)

        # int8 adjacency -> in-kernel select (no dense f32 bias in HBM).
        mask = adj_ref[...].astype(jnp.int32) > 0
        e = jnp.where(mask, _leaky_relu(d_sc[...] + jnp.transpose(s_k)), NEG_INF)

        # Online (flash-style) softmax accumulation over neighbor blocks.
        m_new = jnp.maximum(m_sc[...], jnp.max(e, axis=-1, keepdims=True))
        scale = jnp.exp(m_sc[...] - m_new)
        p = jnp.exp(e - m_new)
        l_sc[...] = scale * l_sc[...] + jnp.sum(p, axis=-1, keepdims=True)
        # bf16 operands halve the biggest live intermediate; accumulation stays f32.
        acc_sc[...] = scale * acc_sc[...] + jnp.dot(
            p.astype(jnp.bfloat16), h_k.astype(jnp.bfloat16),
            preferred_element_type=jnp.float32)
        m_sc[...] = m_new

        @pl.when(ki == nk - 1)
        def _finish():
            inv_l = pl.reciprocal(l_sc[...], approx=True)            # EUP slot, ~free
            h1 = _elu(acc_sc[...] * inv_l + b_ref[...])              # dropout = identity (eval)
            # Fused layer-2 projection: emit [H2 | H2 a_src2 | H2 a_dst2].
            o_ref[...] = jnp.dot(h1, wnext_ref[...],
                                 preferred_element_type=jnp.float32)

    return kernel


def _gat_layer1(x, adj_i8, waug, b, wnext, *, tq, tk):
    n_pad, c_in = x.shape
    c_out = waug.shape[1] - 2
    c_next = wnext.shape[1]

    return pl.pallas_call(
        _make_layer1_kernel(c_out),
        out_shape=jax.ShapeDtypeStruct((n_pad, c_next), jnp.float32),
        grid_spec=pltpu.PrefetchScalarGridSpec(
            num_scalar_prefetch=0,
            grid=(n_pad // tq, n_pad // tk),
            in_specs=[
                pl.BlockSpec((tq, c_in), lambda qi, ki: (qi, 0)),   # destination rows
                pl.BlockSpec((tk, c_in), lambda qi, ki: (ki, 0)),   # neighbor rows
                pl.BlockSpec((tq, tk), lambda qi, ki: (qi, ki)),    # int8 adjacency tile
                pl.BlockSpec(waug.shape, lambda qi, ki: (0, 0)),    # [W1 | W1 a_s | W1 a_d]
                pl.BlockSpec(b.shape, lambda qi, ki: (0, 0)),       # conv1 bias
                pl.BlockSpec(wnext.shape, lambda qi, ki: (0, 0)),   # [W2 | W2 a_s | W2 a_d]
            ],
            out_specs=pl.BlockSpec((tq, c_next), lambda qi, ki: (qi, 0)),
            scratch_shapes=[
                pltpu.VMEM((tq, 1), jnp.float32),        # m (running max)
                pltpu.VMEM((tq, 1), jnp.float32),        # l (running denom)
                pltpu.VMEM((tq, c_out), jnp.float32),    # acc (weighted sum)
                pltpu.VMEM((tq, 1), jnp.float32),        # d (dst attention score)
            ],
        ),
        compiler_params=pltpu.CompilerParams(
            dimension_semantics=("parallel", "arbitrary"),
            vmem_limit_bytes=32 * 1024 * 1024,
        ),
    )(x, x, adj_i8, waug, b, wnext)


# --------------------------------------------------------------------------------------
# Layer 2: GATConv on pre-projected features (+ ELU + Linear(8,1) + sigmoid head).
# Input rows are [H2 | s2 | d2] (c_out + 2 floats) — no per-tile projection matmul.
# Output: (n_blocks, 1, tq) lane-dense sigmoid rows (column layout = node index within block).
# --------------------------------------------------------------------------------------
def _make_layer2_kernel(c_out):
    def kernel(aq_ref, ak_ref, adj_ref, b_ref, wl_ref, bl_ref, o_ref,
               m_sc, l_sc, acc_sc):
        ki = pl.program_id(1)
        nk = pl.num_programs(1)

        @pl.when(ki == 0)
        def _init():
            m_sc[...] = jnp.full(m_sc.shape, -jnp.inf, jnp.float32)
            l_sc[...] = jnp.zeros(l_sc.shape, jnp.float32)
            acc_sc[...] = jnp.zeros(acc_sc.shape, jnp.float32)

        h_k = ak_ref[:, :c_out]                              # (tk, c_out)
        s_k = ak_ref[:, c_out:c_out + 1]                     # (tk, 1)
        d_q = aq_ref[:, c_out + 1:c_out + 2]                 # (tq, 1)

        mask = adj_ref[...].astype(jnp.int32) > 0
        e = jnp.where(mask, _leaky_relu(d_q + jnp.transpose(s_k)), NEG_INF)

        m_new = jnp.maximum(m_sc[...], jnp.max(e, axis=-1, keepdims=True))
        scale = jnp.exp(m_sc[...] - m_new)
        p = jnp.exp(e - m_new)
        l_sc[...] = scale * l_sc[...] + jnp.sum(p, axis=-1, keepdims=True)
        acc_sc[...] = scale * acc_sc[...] + jnp.dot(
            p.astype(jnp.bfloat16), h_k.astype(jnp.bfloat16),
            preferred_element_type=jnp.float32)
        m_sc[...] = m_new

        @pl.when(ki == nk - 1)
        def _finish():
            inv_l = pl.reciprocal(l_sc[...], approx=True)
            h2 = _elu(acc_sc[...] * inv_l + b_ref[...])          # dropout = identity (eval)
            logits = jnp.dot(h2, wl_ref[...],
                             preferred_element_type=jnp.float32) + bl_ref[...]   # (tq, 1)
            sig = 1.0 / (1.0 + jnp.exp(-logits))
            # Transposed lane-dense store: (tq,1) -> (1,tq), 128x less writeback than a
            # broadcast slab and the store stays unmasked.
            o_ref[...] = jnp.transpose(sig).reshape(o_ref.shape)

    return kernel


def _gat_layer2_head(aug, adj_i8, b, wl, bl, *, tq, tk):
    n_pad, caug = aug.shape
    c_out = caug - 2
    nq = n_pad // tq

    out = pl.pallas_call(
        _make_layer2_kernel(c_out),
        out_shape=jax.ShapeDtypeStruct((nq, 1, tq), jnp.float32),
        grid_spec=pltpu.PrefetchScalarGridSpec(
            num_scalar_prefetch=0,
            grid=(nq, n_pad // tk),
            in_specs=[
                pl.BlockSpec((tq, caug), lambda qi, ki: (qi, 0)),   # destination rows
                pl.BlockSpec((tk, caug), lambda qi, ki: (ki, 0)),   # neighbor rows
                pl.BlockSpec((tq, tk), lambda qi, ki: (qi, ki)),    # int8 adjacency tile
                pl.BlockSpec(b.shape, lambda qi, ki: (0, 0)),       # conv2 bias
                pl.BlockSpec(wl.shape, lambda qi, ki: (0, 0)),      # Linear weight (8,1)
                pl.BlockSpec(bl.shape, lambda qi, ki: (0, 0)),      # Linear bias (1,1)
            ],
            out_specs=pl.BlockSpec((1, 1, tq), lambda qi, ki: (qi, 0, 0)),
            scratch_shapes=[
                pltpu.VMEM((tq, 1), jnp.float32),        # m
                pltpu.VMEM((tq, 1), jnp.float32),        # l
                pltpu.VMEM((tq, c_out), jnp.float32),    # acc
            ],
        ),
        compiler_params=pltpu.CompilerParams(
            dimension_semantics=("parallel", "arbitrary"),
            vmem_limit_bytes=32 * 1024 * 1024,
        ),
    )(aug, aug, adj_i8, b, wl, bl)
    return out.reshape(n_pad, 1)


# --------------------------------------------------------------------------------------
# Full forward.
# --------------------------------------------------------------------------------------
def gat_forward(x, adj, params, *, tq=256, tk=512):
    """Full GAT forward.  adj[i, j] = 1 iff edge j -> i (self-loops included)."""
    n, _ = x.shape
    n128 = _round_up(n, 128)
    # Keep >= 2 row blocks so the "parallel" axis still shards across TensorCores (v7x),
    # and never tile past the padded problem size.  Both tiles stay multiples of 128.
    tq = max(128, min(tq, (n128 // 2) // 128 * 128 if n128 >= 256 else 128))
    tk = max(128, min(tk, n128))
    n_pad = _round_up(n, tq * tk // math.gcd(tq, tk))
    pad = n_pad - n

    xp = jnp.pad(x.astype(jnp.float32), ((0, pad), (0, 0)))
    # int8 adjacency: 4x less HBM traffic than an f32 additive bias; shared by both layers.
    adj_i8 = (jnp.pad(adj, ((0, pad), (0, pad))) > 0).astype(jnp.int8)

    # Fold attention vectors into the projections: [W | W a_src | W a_dst].
    waug1 = jnp.concatenate(
        [params["w1"], params["w1"] @ params["as1"], params["w1"] @ params["ad1"]], axis=1)
    waug2 = jnp.concatenate(
        [params["w2"], params["w2"] @ params["as2"], params["w2"] @ params["ad2"]], axis=1)

    # Layer 1 (its epilogue already applies layer-2's projection -> 10 floats/row).
    aug = _gat_layer1(xp, adj_i8, waug1, params["b1"], waug2, tq=tq, tk=tk)
    # Layer 2 + fused Linear(8,1) + sigmoid head, transposed lane-dense output.
    out_pad = _gat_layer2_head(aug, adj_i8, params["b2"], params["wl"], params["bl"],
                               tq=tq, tk=tk)
    return out_pad[:n, :]


def gat_reference(x, adj, p):
    """Pure-JAX reference (the mathematical spec) for correctness checking."""
    def layer(h_in, w, a_s, a_d, b):
        h = h_in @ w
        s = h @ a_s
        d = h @ a_d
        e = _leaky_relu(d + s.T)
        e = jnp.where(adj > 0, e, NEG_INF)
        a = jax.nn.softmax(e, axis=-1)
        return a @ h + b

    h = _elu(layer(x, p["w1"], p["as1"], p["ad1"], p["b1"]))
    h = _elu(layer(h, p["w2"], p["as2"], p["ad2"], p["b2"]))
    return jax.nn.sigmoid(h @ p["wl"] + p["bl"])


def make_params(key, num_features=16, hidden=32, mid=8):
    ks = jax.random.split(key, 10)

    def glorot(k, shape):
        fan_in, fan_out = shape[0], shape[-1]
        lim = jnp.sqrt(6.0 / (fan_in + fan_out))
        return jax.random.uniform(k, shape, jnp.float32, -lim, lim)

    return {
        # conv1: GATConv(num_features, hidden)
        "w1":  glorot(ks[0], (num_features, hidden)),
        "as1": glorot(ks[1], (hidden, 1)),
        "ad1": glorot(ks[2], (hidden, 1)),
        "b1":  0.1 * jax.random.normal(ks[3], (1, hidden), jnp.float32),
        # conv2: GATConv(hidden, 8)
        "w2":  glorot(ks[4], (hidden, mid)),
        "as2": glorot(ks[5], (mid, 1)),
        "ad2": glorot(ks[6], (mid, 1)),
        "b2":  0.1 * jax.random.normal(ks[7], (1, mid), jnp.float32),
        # linear: Linear(8, 1)
        "wl":  glorot(ks[8], (mid, 1)),
        "bl":  0.1 * jax.random.normal(ks[9], (1, 1), jnp.float32),
    }


if __name__ == "__main__":
    # N=200 pads to 256 -> grid (2, 1): multi-row-block (megacore-shardable), padding,
    # online softmax across a 256-wide neighbor tile, fused projection handoff and head.
    N, NUM_FEATURES, HIDDEN, MID = 200, 16, 32, 8

    key = jax.random.PRNGKey(0)
    k_x, k_adj, k_p = jax.random.split(key, 3)

    x = jax.random.normal(k_x, (N, NUM_FEATURES), dtype=jnp.float32)

    # Random sparse directed graph + self loops (dense mask adj[i, j]: edge j -> i).
    adj = jax.random.bernoulli(k_adj, p=0.05, shape=(N, N)).astype(jnp.float32)
    adj = jnp.maximum(adj, jnp.eye(N, dtype=jnp.float32))

    params = make_params(k_p, NUM_FEATURES, HIDDEN, MID)

    out = jax.block_until_ready(jax.jit(gat_forward)(x, adj, params))
    ref = gat_reference(x, adj, params)

    assert out.shape == (N, 1)
    assert bool(jnp.all(jnp.isfinite(out)))
    # Tolerance budget: bf16 probability/feature operands in the attention matmuls
    # (~0.4% relative) + approx EUP reciprocal in the softmax denominators; both are
    # intentional perf trades and keep the sigmoid outputs within ~1e-2 of the f32 spec.
    assert jnp.allclose(out, ref, atol=1e-2, rtol=0.0), "mismatch vs JAX reference"

    print("KERNEL_OK")
</pallas_src>

<mosaic_0001>
module attributes {stable_mosaic.version = 11 : i64} {
  func.func @kernel(%arg0: i32, %arg1: i32, %arg2: memref<128x16xf32, #tpu.memory_space<vmem>>, %arg3: memref<256x16xf32, #tpu.memory_space<vmem>>, %arg4: memref<128x256xi8, #tpu.memory_space<vmem>>, %arg5: memref<16x34xf32, #tpu.memory_space<vmem>>, %arg6: memref<1x32xf32, #tpu.memory_space<vmem>>, %arg7: memref<32x10xf32, #tpu.memory_space<vmem>>, %arg8: memref<128x10xf32, #tpu.memory_space<vmem>>, %arg9: memref<128x1xf32, #tpu.memory_space<vmem>>, %arg10: memref<128x1xf32, #tpu.memory_space<vmem>>, %arg11: memref<128x32xf32, #tpu.memory_space<vmem>>, %arg12: memref<128x1xf32, #tpu.memory_space<vmem>>) attributes {dimension_semantics = [#tpu.dimension_semantics<parallel>, #tpu.dimension_semantics<arbitrary>], iteration_bounds = array<i64: 2, 1>, scalar_prefetch = 0 : i64, scratch_operands = 4 : i64, tpu.core_type = #tpu.core_type<tc>, window_params = [{transform_indices = @transform_0, window_bounds = array<i64: 128, 16>}, {transform_indices = @transform_1, window_bounds = array<i64: 256, 16>}, {transform_indices = @transform_2, window_bounds = array<i64: 128, 256>}, {pipeline_mode = #tpu.pipeline_mode<synchronous>, transform_indices = @transform_3, window_bounds = array<i64: 16, 34>}, {pipeline_mode = #tpu.pipeline_mode<synchronous>, transform_indices = @transform_4, window_bounds = array<i64: 1, 32>}, {pipeline_mode = #tpu.pipeline_mode<synchronous>, transform_indices = @transform_5, window_bounds = array<i64: 32, 10>}, {transform_indices = @transform_6, window_bounds = array<i64: 128, 10>}]} {
    %c0 = arith.constant 0 : index
    %c0_0 = arith.constant 0 : index
    %0 = vector.load %arg5[%c0, %c0_0] : memref<16x34xf32, #tpu.memory_space<vmem>>, vector<16x34xf32>
    %c0_i32 = arith.constant 0 : i32
    %1 = arith.cmpi eq, %arg1, %c0_i32 : i32
    %2 = arith.extui %1 : i1 to i32
    %c0_i32_1 = arith.constant 0 : i32
    %3 = arith.cmpi ne, %2, %c0_i32_1 : i32
    scf.if %3 {
      %c0_31 = arith.constant 0 : index
      %c0_32 = arith.constant 0 : index
      %52 = vector.load %arg2[%c0_31, %c0_32] : memref<128x16xf32, #tpu.memory_space<vmem>>, vector<128x16xf32>
      %53 = vector.extract_strided_slice %0 {offsets = [0, 33], sizes = [16, 1], strides = [1, 1]} : vector<16x34xf32> to vector<16x1xf32>
      %cst_33 = arith.constant dense<0.000000e+00> : vector<128x1xf32>
      %54 = tpu.matmul %52, %53, %cst_33 {dimension_numbers = #tpu.dot_dimension_numbers<[1], [0], [0], [1], [0, 0, 1, 1], [], []>} : vector<128x16xf32>, vector<16x1xf32>, vector<128x1xf32> -> vector<128x1xf32>
      %c0_34 = arith.constant 0 : index
      %c0_35 = arith.constant 0 : index
      %55 = vector.load %arg12[%c0_34, %c0_35] : memref<128x1xf32, #tpu.memory_space<vmem>>, vector<128x1xf32>
      tpu.vector_store %arg12[%c0_34, %c0_35], %54 {strides = array<i32>} : memref<128x1xf32, #tpu.memory_space<vmem>>, vector<128x1xf32>,
      %cst_36 = arith.constant 0xFF800000 : f32
      %56 = vector.broadcast %cst_36 : f32 to vector<128x1xf32>
      %c0_37 = arith.constant 0 : index
      %c0_38 = arith.constant 0 : index
      %57 = vector.load %arg9[%c0_37, %c0_38] : memref<128x1xf32, #tpu.memory_space<vmem>>, vector<128x1xf32>
      tpu.vector_store %arg9[%c0_37, %c0_38], %56 {strides = array<i32>} : memref<128x1xf32, #tpu.memory_space<vmem>>, vector<128x1xf32>,
      %cst_39 = arith.constant 0.000000e+00 : f32
      %58 = vector.broadcast %cst_39 : f32 to vector<128x1xf32>
      %c0_40 = arith.constant 0 : index
      %c0_41 = arith.constant 0 : index
      %59 = vector.load %arg10[%c0_40, %c0_41] : memref<128x1xf32, #tpu.memory_space<vmem>>, vector<128x1xf32>
      tpu.vector_store %arg10[%c0_40, %c0_41], %58 {strides = array<i32>} : memref<128x1xf32, #tpu.memory_space<vmem>>, vector<128x1xf32>,
      %cst_42 = arith.constant 0.000000e+00 : f32
      %60 = vector.broadcast %cst_42 : f32 to vector<128x32xf32>
      %c0_43 = arith.constant 0 : index
      %c0_44 = arith.constant 0 : index
      %61 = vector.load %arg11[%c0_43, %c0_44] : memref<128x32xf32, #tpu.memory_space<vmem>>, vector<128x32xf32>
      tpu.vector_store %arg11[%c0_43, %c0_44], %60 {strides = array<i32>} : memref<128x32xf32, #tpu.memory_space<vmem>>, vector<128x32xf32>,
    } else {
    }
    %c0_2 = arith.constant 0 : index
    %c0_3 = arith.constant 0 : index
    %4 = vector.load %arg3[%c0_2, %c0_3] : memref<256x16xf32, #tpu.memory_space<vmem>>, vector<256x16xf32>
    %cst = arith.constant dense<0.000000e+00> : vector<256x34xf32>
    %5 = tpu.matmul %4, %0, %cst {dimension_numbers = #tpu.dot_dimension_numbers<[1], [0], [0], [1], [0, 0, 1, 1], [], []>} : vector<256x16xf32>, vector<16x34xf32>, vector<256x34xf32> -> vector<256x34xf32>
    %6 = vector.extract_strided_slice %5 {offsets = [0, 0], sizes = [256, 32], strides = [1, 1]} : vector<256x34xf32> to vector<256x32xf32>
    %7 = vector.extract_strided_slice %5 {offsets = [0, 32], sizes = [256, 1], strides = [1, 1]} : vector<256x34xf32> to vector<256x1xf32>
    %c0_4 = arith.constant 0 : index
    %c0_5 = arith.constant 0 : index
    %8 = vector.load %arg4[%c0_4, %c0_5] : memref<128x256xi8, #tpu.memory_space<vmem>>, vector<128x256xi8>
    %9 = arith.extsi %8 : vector<128x256xi8> to vector<128x256xi32>
    %c0_i32_6 = arith.constant 0 : i32
    %10 = vector.broadcast %c0_i32_6 : i32 to vector<128x256xi32>
    %11 = arith.cmpi sgt, %9, %10 : vector<128x256xi32>
    %c0_7 = arith.constant 0 : index
    %c0_8 = arith.constant 0 : index
    %12 = vector.load %arg12[%c0_7, %c0_8] : memref<128x1xf32, #tpu.memory_space<vmem>>, vector<128x1xf32>
    %13 = tpu.transpose %7, [1, 0] : vector<256x1xf32> -> vector<1x256xf32>
    %14 = vector.broadcast %12 : vector<128x1xf32> to vector<128x256xf32>
    %15 = vector.broadcast %13 : vector<1x256xf32> to vector<128x256xf32>
    %16 = arith.addf %14, %15 : vector<128x256xf32>
    %cst_9 = arith.constant 0.000000e+00 : f32
    %17 = vector.broadcast %cst_9 : f32 to vector<128x256xf32>
    %18 = arith.cmpf ogt, %16, %17 : vector<128x256xf32>
    %cst_10 = arith.constant 2.000000e-01 : f32
    %19 = vector.broadcast %cst_10 : f32 to vector<128x256xf32>
    %20 = arith.mulf %19, %16 : vector<128x256xf32>
    %21 = arith.select %18, %16, %20 : vector<128x256xi1>, vector<128x256xf32>
    %cst_11 = arith.constant -1.000000e+30 : f32
    %22 = vector.broadcast %cst_11 : f32 to vector<128x256xf32>
    %23 = arith.select %11, %21, %22 : vector<128x256xi1>, vector<128x256xf32>
    %c0_12 = arith.constant 0 : index
    %c0_13 = arith.constant 0 : index
    %24 = vector.load %arg9[%c0_12, %c0_13] : memref<128x1xf32, #tpu.memory_space<vmem>>, vector<128x1xf32>
    %cst_14 = arith.constant dense<0xFF800000> : vector<128xf32>
    %25 = vector.multi_reduction <maximumf>, %23, %cst_14 [1] : vector<128x256xf32> to vector<128xf32>
    %26 = vector.shape_cast %25 : vector<128xf32> to vector<128x1xf32>
    %27 = arith.maximumf %24, %26 : vector<128x1xf32>
    %c0_15 = arith.constant 0 : index
    %c0_16 = arith.constant 0 : index
    %28 = vector.load %arg9[%c0_15, %c0_16] : memref<128x1xf32, #tpu.memory_space<vmem>>, vector<128x1xf32>
    %29 = arith.subf %28, %27 : vector<128x1xf32>
    %30 = math.exp %29 : vector<128x1xf32>
    %31 = vector.broadcast %27 : vector<128x1xf32> to vector<128x256xf32>
    %32 = arith.subf %23, %31 : vector<128x256xf32>
    %33 = math.exp %32 : vector<128x256xf32>
    %c0_17 = arith.constant 0 : index
    %c0_18 = arith.constant 0 : index
    %34 = vector.load %arg10[%c0_17, %c0_18] : memref<128x1xf32, #tpu.memory_space<vmem>>, vector<128x1xf32>
    %35 = arith.mulf %30, %34 : vector<128x1xf32>
    %cst_19 = arith.constant dense<0.000000e+00> : vector<128xf32>
    %36 = vector.multi_reduction <add>, %33, %cst_19 [1] : vector<128x256xf32> to vector<128xf32>
    %37 = vector.shape_cast %36 : vector<128xf32> to vector<128x1xf32>
    %38 = arith.addf %35, %37 : vector<128x1xf32>
    %c0_20 = arith.constant 0 : index
    %c0_21 = arith.constant 0 : index
    %39 = vector.load %arg10[%c0_20, %c0_21] : memref<128x1xf32, #tpu.memory_space<vmem>>, vector<128x1xf32>
    tpu.vector_store %arg10[%c0_20, %c0_21], %38 {strides = array<i32>} : memref<128x1xf32, #tpu.memory_space<vmem>>, vector<128x1xf32>,
    %c0_22 = arith.constant 0 : index
    %c0_23 = arith.constant 0 : index
    %40 = vector.load %arg11[%c0_22, %c0_23] : memref<128x32xf32, #tpu.memory_space<vmem>>, vector<128x32xf32>
    %41 = vector.broadcast %30 : vector<128x1xf32> to vector<128x32xf32>
    %42 = arith.mulf %41, %40 : vector<128x32xf32>
    %43 = arith.truncf %33 : vector<128x256xf32> to vector<128x256xbf16>
    %44 = arith.truncf %6 : vector<256x32xf32> to vector<256x32xbf16>
    %cst_24 = arith.constant dense<0.000000e+00> : vector<128x32xf32>
    %45 = tpu.matmul %43, %44, %cst_24 {dimension_numbers = #tpu.dot_dimension_numbers<[1], [0], [0], [1], [0, 0, 1, 1], [], []>} : vector<128x256xbf16>, vector<256x32xbf16>, vector<128x32xf32> -> vector<128x32xf32>
    %46 = arith.addf %42, %45 : vector<128x32xf32>
    %c0_25 = arith.constant 0 : index
    %c0_26 = arith.constant 0 : index
    %47 = vector.load %arg11[%c0_25, %c0_26] : memref<128x32xf32, #tpu.memory_space<vmem>>, vector<128x32xf32>
    tpu.vector_store %arg11[%c0_25, %c0_26], %46 {strides = array<i32>} : memref<128x32xf32, #tpu.memory_space<vmem>>, vector<128x32xf32>,
    %c0_27 = arith.constant 0 : index
    %c0_28 = arith.constant 0 : index
    %48 = vector.load %arg9[%c0_27, %c0_28] : memref<128x1xf32, #tpu.memory_space<vmem>>, vector<128x1xf32>
    tpu.vector_store %arg9[%c0_27, %c0_28], %27 {strides = array<i32>} : memref<128x1xf32, #tpu.memory_space<vmem>>, vector<128x1xf32>,
    %c0_i32_29 = arith.constant 0 : i32
    %49 = arith.cmpi eq, %arg1, %c0_i32_29 : i32
    %50 = arith.extui %49 : i1 to i32
    %c0_i32_30 = arith.constant 0 : i32
    %51 = arith.cmpi ne, %50, %c0_i32_30 : i32
    scf.if %51 {
      %c0_31 = arith.constant 0 : index
      %c0_32 = arith.constant 0 : index
      %52 = vector.load %arg10[%c0_31, %c0_32] : memref<128x1xf32, #tpu.memory_space<vmem>>, vector<128x1xf32>
      %53 = tpu.reciprocal %52 {approx = true} : vector<128x1xf32> -> vector<128x1xf32>
      %c0_33 = arith.constant 0 : index
      %c0_34 = arith.constant 0 : index
      %54 = vector.load %arg11[%c0_33, %c0_34] : memref<128x32xf32, #tpu.memory_space<vmem>>, vector<128x32xf32>
      %55 = vector.broadcast %53 : vector<128x1xf32> to vector<128x32xf32>
      %56 = arith.mulf %54, %55 : vector<128x32xf32>
      %c0_35 = arith.constant 0 : index
      %c0_36 = arith.constant 0 : index
      %57 = vector.load %arg6[%c0_35, %c0_36] : memref<1x32xf32, #tpu.memory_space<vmem>>, vector<1x32xf32>
      %58 = vector.broadcast %57 : vector<1x32xf32> to vector<128x32xf32>
      %59 = arith.addf %56, %58 : vector<128x32xf32>
      %cst_37 = arith.constant 0.000000e+00 : f32
      %60 = vector.broadcast %cst_37 : f32 to vector<128x32xf32>
      %61 = arith.cmpf ogt, %59, %60 : vector<128x32xf32>
      %cst_38 = arith.constant 0.000000e+00 : f32
      %62 = vector.broadcast %cst_38 : f32 to vector<128x32xf32>
      %63 = arith.minimumf %59, %62 : vector<128x32xf32>
      %64 = math.exp %63 : vector<128x32xf32>
      %cst_39 = arith.constant 1.000000e+00 : f32
      %65 = vector.broadcast %cst_39 : f32 to vector<128x32xf32>
      %66 = arith.subf %64, %65 : vector<128x32xf32>
      %67 = arith.select %61, %59, %66 : vector<128x32xi1>, vector<128x32xf32>
      %c0_40 = arith.constant 0 : index
      %c0_41 = arith.constant 0 : index
      %68 = vector.load %arg7[%c0_40, %c0_41] : memref<32x10xf32, #tpu.memory_space<vmem>>, vector<32x10xf32>
      %cst_42 = arith.constant dense<0.000000e+00> : vector<128x10xf32>
      %69 = tpu.matmul %67, %68, %cst_42 {dimension_numbers = #tpu.dot_dimension_numbers<[1], [0], [0], [1], [0, 0, 1, 1], [], []>} : vector<128x32xf32>, vector<32x10xf32>, vector<128x10xf32> -> vector<128x10xf32>
      %c0_43 = arith.constant 0 : index
      %c0_44 = arith.constant 0 : index
      %70 = vector.load %arg8[%c0_43, %c0_44] : memref<128x10xf32, #tpu.memory_space<vmem>>, vector<128x10xf32>
      tpu.vector_store %arg8[%c0_43, %c0_44], %69 {strides = array<i32>} : memref<128x10xf32, #tpu.memory_space<vmem>>, vector<128x10xf32>,
    } else {
    }
    return
  }
  func.func @transform_0(%arg0: i32, %arg1: i32) -> (i32, i32) {
    %c0_i32 = arith.constant 0 : i32
    %c0_i32_0 = arith.constant 0 : i32
    return %arg0, %c0_i32 : i32, i32
  }
  func.func @transform_1(%arg0: i32, %arg1: i32) -> (i32, i32) {
    %c0_i32 = arith.constant 0 : i32
    %c0_i32_0 = arith.constant 0 : i32
    return %arg1, %c0_i32 : i32, i32
  }
  func.func @transform_2(%arg0: i32, %arg1: i32) -> (i32, i32) {
    %c0_i32 = arith.constant 0 : i32
    return %arg0, %arg1 : i32, i32
  }
  func.func @transform_3(%arg0: i32, %arg1: i32) -> (i32, i32) {
    %c0_i32 = arith.constant 0 : i32
    %c0_i32_0 = arith.constant 0 : i32
    %c0_i32_1 = arith.constant 0 : i32
    return %c0_i32, %c0_i32_0 : i32, i32
  }
  func.func @transform_4(%arg0: i32, %arg1: i32) -> (i32, i32) {
    %c0_i32 = arith.constant 0 : i32
    %c0_i32_0 = arith.constant 0 : i32
    %c0_i32_1 = arith.constant 0 : i32
    return %c0_i32, %c0_i32_0 : i32, i32
  }
  func.func @transform_5(%arg0: i32, %arg1: i32) -> (i32, i32) {
    %c0_i32 = arith.constant 0 : i32
    %c0_i32_0 = arith.constant 0 : i32
    %c0_i32_1 = arith.constant 0 : i32
    return %c0_i32, %c0_i32_0 : i32, i32
  }
  func.func @transform_6(%arg0: i32, %arg1: i32) -> (i32, i32) {
    %c0_i32 = arith.constant 0 : i32
    %c0_i32_0 = arith.constant 0 : i32
    return %arg0, %c0_i32 : i32, i32
  }
}

module attributes {stable_mosaic.version = 11 : i64} {
  func.func @kernel(%arg0: i32, %arg1: i32, %arg2: memref<128x10xf32, #tpu.memory_space<vmem>>, %arg3: memref<256x10xf32, #tpu.memory_space<vmem>>, %arg4: memref<128x256xi8, #tpu.memory_space<vmem>>, %arg5: memref<1x8xf32, #tpu.memory_space<vmem>>, %arg6: memref<8x1xf32, #tpu.memory_space<vmem>>, %arg7: memref<1x1xf32, #tpu.memory_space<vmem>>, %arg8: memref<1x1x128xf32, #tpu.memory_space<vmem>>, %arg9: memref<128x1xf32, #tpu.memory_space<vmem>>, %arg10: memref<128x1xf32, #tpu.memory_space<vmem>>, %arg11: memref<128x8xf32, #tpu.memory_space<vmem>>) attributes {dimension_semantics = [#tpu.dimension_semantics<parallel>, #tpu.dimension_semantics<arbitrary>], iteration_bounds = array<i64: 2, 1>, scalar_prefetch = 0 : i64, scratch_operands = 3 : i64, tpu.core_type = #tpu.core_type<tc>, window_params = [{transform_indices = @transform_0, window_bounds = array<i64: 128, 10>}, {transform_indices = @transform_1, window_bounds = array<i64: 256, 10>}, {transform_indices = @transform_2, window_bounds = array<i64: 128, 256>}, {pipeline_mode = #tpu.pipeline_mode<synchronous>, transform_indices = @transform_3, window_bounds = array<i64: 1, 8>}, {pipeline_mode = #tpu.pipeline_mode<synchronous>, transform_indices = @transform_4, window_bounds = array<i64: 8, 1>}, {pipeline_mode = #tpu.pipeline_mode<synchronous>, transform_indices = @transform_5, window_bounds = array<i64: 1, 1>}, {transform_indices = @transform_6, window_bounds = array<i64: 1, 1, 128>}]} {
    %c0_i32 = arith.constant 0 : i32
    %0 = arith.cmpi eq, %arg1, %c0_i32 : i32
    %1 = arith.extui %0 : i1 to i32
    %c0_i32_0 = arith.constant 0 : i32
    %2 = arith.cmpi ne, %1, %c0_i32_0 : i32
    scf.if %2 {
      %cst_28 = arith.constant 0xFF800000 : f32
      %49 = vector.broadcast %cst_28 : f32 to vector<128x1xf32>
      %c0_29 = arith.constant 0 : index
      %c0_30 = arith.constant 0 : index
      %50 = vector.load %arg9[%c0_29, %c0_30] : memref<128x1xf32, #tpu.memory_space<vmem>>, vector<128x1xf32>
      tpu.vector_store %arg9[%c0_29, %c0_30], %49 {strides = array<i32>} : memref<128x1xf32, #tpu.memory_space<vmem>>, vector<128x1xf32>,
      %cst_31 = arith.constant 0.000000e+00 : f32
      %51 = vector.broadcast %cst_31 : f32 to vector<128x1xf32>
      %c0_32 = arith.constant 0 : index
      %c0_33 = arith.constant 0 : index
      %52 = vector.load %arg10[%c0_32, %c0_33] : memref<128x1xf32, #tpu.memory_space<vmem>>, vector<128x1xf32>
      tpu.vector_store %arg10[%c0_32, %c0_33], %51 {strides = array<i32>} : memref<128x1xf32, #tpu.memory_space<vmem>>, vector<128x1xf32>,
      %cst_34 = arith.constant 0.000000e+00 : f32
      %53 = vector.broadcast %cst_34 : f32 to vector<128x8xf32>
      %c0_35 = arith.constant 0 : index
      %c0_36 = arith.constant 0 : index
      %54 = vector.load %arg11[%c0_35, %c0_36] : memref<128x8xf32, #tpu.memory_space<vmem>>, vector<128x8xf32>
      tpu.vector_store %arg11[%c0_35, %c0_36], %53 {strides = array<i32>} : memref<128x8xf32, #tpu.memory_space<vmem>>, vector<128x8xf32>,
    } else {
    }
    %c0 = arith.constant 0 : index
    %c0_1 = arith.constant 0 : index
    %3 = vector.load %arg3[%c0, %c0_1] : memref<256x10xf32, #tpu.memory_space<vmem>>, vector<256x8xf32>
    %c0_2 = arith.constant 0 : index
    %c8 = arith.constant 8 : index
    %4 = vector.load %arg3[%c0_2, %c8] : memref<256x10xf32, #tpu.memory_space<vmem>>, vector<256x1xf32>
    %c0_3 = arith.constant 0 : index
    %c9 = arith.constant 9 : index
    %5 = vector.load %arg2[%c0_3, %c9] : memref<128x10xf32, #tpu.memory_space<vmem>>, vector<128x1xf32>
    %c0_4 = arith.constant 0 : index
    %c0_5 = arith.constant 0 : index
    %6 = vector.load %arg4[%c0_4, %c0_5] : memref<128x256xi8, #tpu.memory_space<vmem>>, vector<128x256xi8>
    %7 = arith.extsi %6 : vector<128x256xi8> to vector<128x256xi32>
    %c0_i32_6 = arith.constant 0 : i32
    %8 = vector.broadcast %c0_i32_6 : i32 to vector<128x256xi32>
    %9 = arith.cmpi sgt, %7, %8 : vector<128x256xi32>
    %10 = tpu.transpose %4, [1, 0] : vector<256x1xf32> -> vector<1x256xf32>
    %11 = vector.broadcast %5 : vector<128x1xf32> to vector<128x256xf32>
    %12 = vector.broadcast %10 : vector<1x256xf32> to vector<128x256xf32>
    %13 = arith.addf %11, %12 : vector<128x256xf32>
    %cst = arith.constant 0.000000e+00 : f32
    %14 = vector.broadcast %cst : f32 to vector<128x256xf32>
    %15 = arith.cmpf ogt, %13, %14 : vector<128x256xf32>
    %cst_7 = arith.constant 2.000000e-01 : f32
    %16 = vector.broadcast %cst_7 : f32 to vector<128x256xf32>
    %17 = arith.mulf %16, %13 : vector<128x256xf32>
    %18 = arith.select %15, %13, %17 : vector<128x256xi1>, vector<128x256xf32>
    %cst_8 = arith.constant -1.000000e+30 : f32
    %19 = vector.broadcast %cst_8 : f32 to vector<128x256xf32>
    %20 = arith.select %9, %18, %19 : vector<128x256xi1>, vector<128x256xf32>
    %c0_9 = arith.constant 0 : index
    %c0_10 = arith.constant 0 : index
    %21 = vector.load %arg9[%c0_9, %c0_10] : memref<128x1xf32, #tpu.memory_space<vmem>>, vector<128x1xf32>
    %cst_11 = arith.constant dense<0xFF800000> : vector<128xf32>
    %22 = vector.multi_reduction <maximumf>, %20, %cst_11 [1] : vector<128x256xf32> to vector<128xf32>
    %23 = vector.shape_cast %22 : vector<128xf32> to vector<128x1xf32>
    %24 = arith.maximumf %21, %23 : vector<128x1xf32>
    %c0_12 = arith.constant 0 : index
    %c0_13 = arith.constant 0 : index
    %25 = vector.load %arg9[%c0_12, %c0_13] : memref<128x1xf32, #tpu.memory_space<vmem>>, vector<128x1xf32>
    %26 = arith.subf %25, %24 : vector<128x1xf32>
    %27 = math.exp %26 : vector<128x1xf32>
    %28 = vector.broadcast %24 : vector<128x1xf32> to vector<128x256xf32>
    %29 = arith.subf %20, %28 : vector<128x256xf32>
    %30 = math.exp %29 : vector<128x256xf32>
    %c0_14 = arith.constant 0 : index
    %c0_15 = arith.constant 0 : index
    %31 = vector.load %arg10[%c0_14, %c0_15] : memref<128x1xf32, #tpu.memory_space<vmem>>, vector<128x1xf32>
    %32 = arith.mulf %27, %31 : vector<128x1xf32>
    %cst_16 = arith.constant dense<0.000000e+00> : vector<128xf32>
    %33 = vector.multi_reduction <add>, %30, %cst_16 [1] : vector<128x256xf32> to vector<128xf32>
    %34 = vector.shape_cast %33 : vector<128xf32> to vector<128x1xf32>
    %35 = arith.addf %32, %34 : vector<128x1xf32>
    %c0_17 = arith.constant 0 : index
    %c0_18 = arith.constant 0 : index
    %36 = vector.load %arg10[%c0_17, %c0_18] : memref<128x1xf32, #tpu.memory_space<vmem>>, vector<128x1xf32>
    tpu.vector_store %arg10[%c0_17, %c0_18], %35 {strides = array<i32>} : memref<128x1xf32, #tpu.memory_space<vmem>>, vector<128x1xf32>,
    %c0_19 = arith.constant 0 : index
    %c0_20 = arith.constant 0 : index
    %37 = vector.load %arg11[%c0_19, %c0_20] : memref<128x8xf32, #tpu.memory_space<vmem>>, vector<128x8xf32>
    %38 = vector.broadcast %27 : vector<128x1xf32> to vector<128x8xf32>
    %39 = arith.mulf %38, %37 : vector<128x8xf32>
    %40 = arith.truncf %30 : vector<128x256xf32> to vector<128x256xbf16>
    %41 = arith.truncf %3 : vector<256x8xf32> to vector<256x8xbf16>
    %cst_21 = arith.constant dense<0.000000e+00> : vector<128x8xf32>
    %42 = tpu.matmul %40, %41, %cst_21 {dimension_numbers = #tpu.dot_dimension_numbers<[1], [0], [0], [1], [0, 0, 1, 1], [], []>} : vector<128x256xbf16>, vector<256x8xbf16>, vector<128x8xf32> -> vector<128x8xf32>
    %43 = arith.addf %39, %42 : vector<128x8xf32>
    %c0_22 = arith.constant 0 : index
    %c0_23 = arith.constant 0 : index
    %44 = vector.load %arg11[%c0_22, %c0_23] : memref<128x8xf32, #tpu.memory_space<vmem>>, vector<128x8xf32>
    tpu.vector_store %arg11[%c0_22, %c0_23], %43 {strides = array<i32>} : memref<128x8xf32, #tpu.memory_space<vmem>>, vector<128x8xf32>,
    %c0_24 = arith.constant 0 : index
    %c0_25 = arith.constant 0 : index
    %45 = vector.load %arg9[%c0_24, %c0_25] : memref<128x1xf32, #tpu.memory_space<vmem>>, vector<128x1xf32>
    tpu.vector_store %arg9[%c0_24, %c0_25], %24 {strides = array<i32>} : memref<128x1xf32, #tpu.memory_space<vmem>>, vector<128x1xf32>,
    %c0_i32_26 = arith.constant 0 : i32
    %46 = arith.cmpi eq, %arg1, %c0_i32_26 : i32
    %47 = arith.extui %46 : i1 to i32
    %c0_i32_27 = arith.constant 0 : i32
    %48 = arith.cmpi ne, %47, %c0_i32_27 : i32
    scf.if %48 {
      %c0_28 = arith.constant 0 : index
      %c0_29 = arith.constant 0 : index
      %49 = vector.load %arg10[%c0_28, %c0_29] : memref<128x1xf32, #tpu.memory_space<vmem>>, vector<128x1xf32>
      %50 = tpu.reciprocal %49 {approx = true} : vector<128x1xf32> -> vector<128x1xf32>
      %c0_30 = arith.constant 0 : index
      %c0_31 = arith.constant 0 : index
      %51 = vector.load %arg11[%c0_30, %c0_31] : memref<128x8xf32, #tpu.memory_space<vmem>>, vector<128x8xf32>
      %52 = vector.broadcast %50 : vector<128x1xf32> to vector<128x8xf32>
      %53 = arith.mulf %51, %52 : vector<128x8xf32>
      %c0_32 = arith.constant 0 : index
      %c0_33 = arith.constant 0 : index
      %54 = vector.load %arg5[%c0_32, %c0_33] : memref<1x8xf32, #tpu.memory_space<vmem>>, vector<1x8xf32>
      %55 = vector.broadcast %54 : vector<1x8xf32> to vector<128x8xf32>
      %56 = arith.addf %53, %55 : vector<128x8xf32>
      %cst_34 = arith.constant 0.000000e+00 : f32
      %57 = vector.broadcast %cst_34 : f32 to vector<128x8xf32>
      %58 = arith.cmpf ogt, %56, %57 : vector<128x8xf32>
      %cst_35 = arith.constant 0.000000e+00 : f32
      %59 = vector.broadcast %cst_35 : f32 to vector<128x8xf32>
      %60 = arith.minimumf %56, %59 : vector<128x8xf32>
      %61 = math.exp %60 : vector<128x8xf32>
      %cst_36 = arith.constant 1.000000e+00 : f32
      %62 = vector.broadcast %cst_36 : f32 to vector<128x8xf32>
      %63 = arith.subf %61, %62 : vector<128x8xf32>
      %64 = arith.select %58, %56, %63 : vector<128x8xi1>, vector<128x8xf32>
      %c0_37 = arith.constant 0 : index
      %c0_38 = arith.constant 0 : index
      %65 = vector.load %arg6[%c0_37, %c0_38] : memref<8x1xf32, #tpu.memory_space<vmem>>, vector<8x1xf32>
      %cst_39 = arith.constant dense<0.000000e+00> : vector<128x1xf32>
      %66 = tpu.matmul %64, %65, %cst_39 {dimension_numbers = #tpu.dot_dimension_numbers<[1], [0], [0], [1], [0, 0, 1, 1], [], []>} : vector<128x8xf32>, vector<8x1xf32>, vector<128x1xf32> -> vector<128x1xf32>
      %c0_40 = arith.constant 0 : index
      %c0_41 = arith.constant 0 : index
      %67 = vector.load %arg7[%c0_40, %c0_41] : memref<1x1xf32, #tpu.memory_space<vmem>>, vector<1x1xf32>
      %68 = vector.broadcast %67 : vector<1x1xf32> to vector<128x1xf32>
      %69 = arith.addf %66, %68 : vector<128x1xf32>
      %cst_42 = arith.constant 0.000000e+00 : f32
      %70 = vector.broadcast %cst_42 : f32 to vector<128x1xf32>
      %71 = arith.subf %70, %69 : vector<128x1xf32>
      %72 = math.exp %71 : vector<128x1xf32>
      %cst_43 = arith.constant 1.000000e+00 : f32
      %73 = vector.broadcast %cst_43 : f32 to vector<128x1xf32>
      %74 = arith.addf %73, %72 : vector<128x1xf32>
      %cst_44 = arith.constant 1.000000e+00 : f32
      %75 = vector.broadcast %cst_44 : f32 to vector<128x1xf32>
      %76 = arith.divf %75, %74 : vector<128x1xf32>
      %77 = tpu.transpose %76, [1, 0] : vector<128x1xf32> -> vector<1x128xf32>
      %78 = vector.shape_cast %77 : vector<1x128xf32> to vector<1x1x128xf32>
      %c0_45 = arith.constant 0 : index
      %c0_46 = arith.constant 0 : index
      %c0_47 = arith.constant 0 : index
      %79 = vector.load %arg8[%c0_45, %c0_46, %c0_47] : memref<1x1x128xf32, #tpu.memory_space<vmem>>, vector<1x1x128xf32>
      tpu.vector_store %arg8[%c0_45, %c0_46, %c0_47], %78 {strides = array<i32>} : memref<1x1x128xf32, #tpu.memory_space<vmem>>, vector<1x1x128xf32>,
    } else {
    }
    return
  }
  func.func @transform_0(%arg0: i32, %arg1: i32) -> (i32, i32) {
    %c0_i32 = arith.constant 0 : i32
    %c0_i32_0 = arith.constant 0 : i32
    return %arg0, %c0_i32 : i32, i32
  }
  func.func @transform_1(%arg0: i32, %arg1: i32) -> (i32, i32) {
    %c0_i32 = arith.constant 0 : i32
    %c0_i32_0 = arith.constant 0 : i32
    return %arg1, %c0_i32 : i32, i32
  }
  func.func @transform_2(%arg0: i32, %arg1: i32) -> (i32, i32) {
    %c0_i32 = arith.constant 0 : i32
    return %arg0, %arg1 : i32, i32
  }
  func.func @transform_3(%arg0: i32, %arg1: i32) -> (i32, i32) {
    %c0_i32 = arith.constant 0 : i32
    %c0_i32_0 = arith.constant 0 : i32
    %c0_i32_1 = arith.constant 0 : i32
    return %c0_i32, %c0_i32_0 : i32, i32
  }
  func.func @transform_4(%arg0: i32, %arg1: i32) -> (i32, i32) {
    %c0_i32 = arith.constant 0 : i32
    %c0_i32_0 = arith.constant 0 : i32
    %c0_i32_1 = arith.constant 0 : i32
    return %c0_i32, %c0_i32_0 : i32, i32
  }
  func.func @transform_5(%arg0: i32, %arg1: i32) -> (i32, i32) {
    %c0_i32 = arith.constant 0 : i32
    %c0_i32_0 = arith.constant 0 : i32
    %c0_i32_1 = arith.constant 0 : i32
    return %c0_i32, %c0_i32_0 : i32, i32
  }
  func.func @transform_6(%arg0: i32, %arg1: i32) -> (i32, i32, i32) {
    %c0_i32 = arith.constant 0 : i32
    %c0_i32_0 = arith.constant 0 : i32
    %c0_i32_1 = arith.constant 0 : i32
    return %arg0, %c0_i32, %c0_i32_0 : i32, i32, i32
  }
}

</mosaic_0001>

<llo_original>
// kernel: gat_forward.3
$region0: #{gat_forward.3}
  #allocation0 [shape = 'u32[]', space=smem, size = 0x4, offset = 0x4, fixed_abs, tag = 'smem constant byte address 0x4 - core index']
  #allocation1 [shape = 'u32[72,128]{1,0:T(1,128)}', space=vmem, size = 0x9000, scoped, tag = 'internal scratch']
  #allocation2 [shape = 'f32[128,1]{1,0:T(8,128)}', space=vmem, size = 0x10000, scoped, tag = 'scratch operand']
  #allocation3 [shape = 'f32[128,1]{1,0:T(8,128)}', space=vmem, size = 0x10000, scoped, tag = 'scratch operand']
  #allocation4 [shape = 'f32[128,8]{1,0:T(8,128)}', space=vmem, size = 0x10000, scoped, tag = 'scratch operand']
  #allocation5 [shape = 'f32[1,1]{1,0:T(1,128)S(1)}', space=vmem, size = 0x200, scoped, tag = 'scoped memory for gat_forward.3']
  %s0 = inlined_call_operand.vmem [shape: f32[256,10], index: 0, kind: input, shape index: {}, may-alias: {0,1}]
  %s1 = inlined_call_operand.vmem [shape: f32[256,10], index: 1, kind: input, shape index: {}, may-alias: {0,1}]
  %s2 = inlined_call_operand.vmem [shape: s8[256,256], index: 2, kind: input, shape index: {}]
  %s3 = inlined_call_operand.vmem [shape: f32[1,8], index: 3, kind: input, shape index: {}]
  %s4 = inlined_call_operand.vmem [shape: f32[8,1], index: 4, kind: input, shape index: {}]
  %s5 = inlined_call_operand.<no memory space> [shape: f32[1,1], index: 5, kind: input, shape index: {}]
  %s6 = inlined_call_operand.hbm [shape: f32[2,1,128], index: 6, kind: output, shape index: {}]
  %s7 = sld [smem:[#allocation0]]
  $region65: #{gat_forward.3} parent=0
    _
  %s9 = ssub.s32 1, %s7
  %s10 = scalar_select 0, %s9, %s7
  %v11 = vstv %s5
  %12 = vst [vmem:[#allocation5] sm:$0x1] %v11
  $region1: #{gat_forward.3} parent=0
    #allocation6 [shape = 'u8[1024]{0}', space=vmem, size = 0x400, scoped, tag = 'output window, operand 0']
    #allocation7 [shape = 's32[2]{0}', space=sflag, size = 0x8, scoped, tag = 'scoped memory for gat_forward.3']
    %13 = vsyncpa [#allocation7], 0
    %s14 = scalar_lea.sflag [#allocation7], 1
    %15 = vsyncpa %s14, 0
    loop: start=0, step=1, limit=4
    $region2: #{gat_forward.3} parent=1 // loop_pre_header
      _
    $region3: #{gat_forward.3} parent=1 // loop_header
      %s17 = sphi 0, %s21
      %p18 = scmp.ge.s32.totalorder %s17, 4
      %s24 = sphi 0, %s36
      %s25 = sphi 0, %s32
      %s26 = sphi 0, %s24
      %s27 = sphi 0, %s25
      %s28 = sphi 0, %s26
      %s29 = sphi 0, %s27
      %s39 = sphi 0, %s41
      %s42 = sphi 0, %s39
      %s43 = sphi 0, %s42
      %s59 = sphi 0, %s43
      %s65 = sphi 0, %s67
      %s68 = sphi 0, %s65
      %s69 = sphi 0, %s68
      %s85 = sphi 0, %s69
      %s93 = sphi 0, %s95
      %s96 = sphi 0, %s93
      %s97 = sphi 0, %s96
      %s113 = sphi 0, %s97
      %s117 = sphi 0, %s117
      %s119 = sphi 0, %s117
      %s120 = sphi 0, %s119
      %s134 = sphi 0, %s120
      %s138 = sphi 0, %s138
      %s140 = sphi 0, %s138
      %s141 = sphi 0, %s140
      %s155 = sphi 0, %s141
      %s159 = sphi 0, %s159
      %s161 = sphi 0, %s159
      %s162 = sphi 0, %s161
      %s176 = sphi 0, %s162
      %s182 = sphi 0, %s184
      %s185 = sphi 0, %s182
      %s186 = sphi 0, %s185
      %s202 = sphi 0, %s186
    $region4: #{gat_forward.3} parent=1 // loop_header_branch
      %20 = sbr.rel (%p18) target = $region8
    $region5: #{gat_forward.3} parent=1 // loop_body
      %s22 = ssub.s32 %s17, 1
      %s23 = ssub.s32 %s17, 2
      %s30 = sadd.s32 1, %s25
      %p31 = scmp.ge.s32.totalorder %s30, 1
      %s32 = scalar_select %p31, 0, %s30
      %s33 = sadd.s32 1, %s24
      %s34 = scalar_select %p31, %s33, %s24
      %p35 = scmp.ge.s32.totalorder %s34, 2
      %s36 = scalar_select %p35, 0, %s34
      %s37 = ssub.s32 %s24, %s36
      %p38 = scmp.eq.s32.totalorder %s37, 0
      %s40 = sadd.s32 %s39, 1
      %s41 = scalar_select %p38, %s39, %s40
      %p44 = pneg %p38
      %p45 = scmp.eq.s32.totalorder %s17, 1
      %p46 = por %p44, %p45
      %p47 = scmp.ne.s32.totalorder %s39, %s42
      %p48 = scmp.eq.s32.totalorder %s17, 0
      %p49 = por %p47, %p48
      %p50 = scmp.ne.s32.totalorder %s39, %s42
      %p51 = scmp.eq.s32.totalorder %s22, 1
      %p52 = por %p50, %p51
      %p53 = scmp.ne.s32.totalorder %s42, %s43
      %p54 = scmp.eq.s32.totalorder %s22, 0
      %p55 = por %p53, %p54
      %p56 = scmp.ne.s32.totalorder %s42, %s43
      %p57 = scmp.eq.s32.totalorder %s23, 1
      %p58 = por %p56, %p57
      %p60 = scmp.ne.s32.totalorder %s43, %s59
      %p61 = scmp.eq.s32.totalorder %s23, 0
      %p62 = por %p60, %p61
      %s63 = ssub.s32 %s25, %s32
      %p64 = scmp.eq.s32.totalorder %s63, 0
      %s66 = sadd.s32 %s65, 1
      %s67 = scalar_select %p64, %s65, %s66
      %p70 = pneg %p64
      %p71 = scmp.eq.s32.totalorder %s17, 1
      %p72 = por %p70, %p71
      %p73 = scmp.ne.s32.totalorder %s65, %s68
      %p74 = scmp.eq.s32.totalorder %s17, 0
      %p75 = por %p73, %p74
      %p76 = scmp.ne.s32.totalorder %s65, %s68
      %p77 = scmp.eq.s32.totalorder %s22, 1
      %p78 = por %p76, %p77
      %p79 = scmp.ne.s32.totalorder %s68, %s69
      %p80 = scmp.eq.s32.totalorder %s22, 0
      %p81 = por %p79, %p80
      %p82 = scmp.ne.s32.totalorder %s68, %s69
      %p83 = scmp.eq.s32.totalorder %s23, 1
      %p84 = por %p82, %p83
      %p86 = scmp.ne.s32.totalorder %s69, %s85
      %p87 = scmp.eq.s32.totalorder %s23, 0
      %p88 = por %p86, %p87
      %s89 = ssub.s32 %s24, %s36
      %s90 = ssub.s32 %s25, %s32
      %s91 = sor.u32 %s89, %s90
      %p92 = scmp.eq.s32.totalorder %s91, 0
      %s94 = sadd.s32 %s93, 1
      %s95 = scalar_select %p92, %s93, %s94
      %p98 = pneg %p92
      %p99 = scmp.eq.s32.totalorder %s17, 1
      %p100 = por %p98, %p99
      %p101 = scmp.ne.s32.totalorder %s93, %s96
      %p102 = scmp.eq.s32.totalorder %s17, 0
      %p103 = por %p101, %p102
      %p104 = scmp.ne.s32.totalorder %s93, %s96
      %p105 = scmp.eq.s32.totalorder %s22, 1
      %p106 = por %p104, %p105
      %p107 = scmp.ne.s32.totalorder %s96, %s97
      %p108 = scmp.eq.s32.totalorder %s22, 0
      %p109 = por %p107, %p108
      %p110 = scmp.ne.s32.totalorder %s96, %s97
      %p111 = scmp.eq.s32.totalorder %s23, 1
      %p112 = por %p110, %p111
      %p114 = scmp.ne.s32.totalorder %s97, %s113
      %p115 = scmp.eq.s32.totalorder %s23, 0
      %p116 = por %p114, %p115
      %s118 = sadd.s32 %s117, 1
      %p121 = scmp.eq.s32.totalorder %s17, 1
      %p122 = scmp.ne.s32.totalorder %s117, %s119
      %p123 = scmp.eq.s32.totalorder %s17, 0
      %p124 = por %p122, %p123
      %p125 = scmp.ne.s32.totalorder %s117, %s119
      %p126 = scmp.eq.s32.totalorder %s22, 1
      %p127 = por %p125, %p126
      %p128 = scmp.ne.s32.totalorder %s119, %s120
      %p129 = scmp.eq.s32.totalorder %s22, 0
      %p130 = por %p128, %p129
      %p131 = scmp.ne.s32.totalorder %s119, %s120
      %p132 = scmp.eq.s32.totalorder %s23, 1
      %p133 = por %p131, %p132
      %p135 = scmp.ne.s32.totalorder %s120, %s134
      %p136 = scmp.eq.s32.totalorder %s23, 0
      %p137 = por %p135, %p136
      %s139 = sadd.s32 %s138, 1
      %p142 = scmp.eq.s32.totalorder %s17, 1
      %p143 = scmp.ne.s32.totalorder %s138, %s140
      %p144 = scmp.eq.s32.totalorder %s17, 0
      %p145 = por %p143, %p144
      %p146 = scmp.ne.s32.totalorder %s138, %s140
      %p147 = scmp.eq.s32.totalorder %s22, 1
      %p148 = por %p146, %p147
      %p149 = scmp.ne.s32.totalorder %s140, %s141
      %p150 = scmp.eq.s32.totalorder %s22, 0
      %p151 = por %p149, %p150
      %p152 = scmp.ne.s32.totalorder %s140, %s141
      %p153 = scmp.eq.s32.totalorder %s23, 1
      %p154 = por %p152, %p153
      %p156 = scmp.ne.s32.totalorder %s141, %s155
      %p157 = scmp.eq.s32.totalorder %s23, 0
      %p158 = por %p156, %p157
      %s160 = sadd.s32 %s159, 1
      %p163 = scmp.eq.s32.totalorder %s17, 1
      %p164 = scmp.ne.s32.totalorder %s159, %s161
      %p165 = scmp.eq.s32.totalorder %s17, 0
      %p166 = por %p164, %p165
      %p167 = scmp.ne.s32.totalorder %s159, %s161
      %p168 = scmp.eq.s32.totalorder %s22, 1
      %p169 = por %p167, %p168
      %p170 = scmp.ne.s32.totalorder %s161, %s162
      %p171 = scmp.eq.s32.totalorder %s22, 0
      %p172 = por %p170, %p171
      %p173 = scmp.ne.s32.totalorder %s161, %s162
      %p174 = scmp.eq.s32.totalorder %s23, 1
      %p175 = por %p173, %p174
      %p177 = scmp.ne.s32.totalorder %s162, %s176
      %p178 = scmp.eq.s32.totalorder %s23, 0
      %p179 = por %p177, %p178
      %s180 = ssub.s32 %s24, %s36
      %p181 = scmp.eq.s32.totalorder %s180, 0
      %s183 = sadd.s32 %s182, 1
      %s184 = scalar_select %p181, %s182, %s183
      %p187 = pneg %p181
      %p188 = scmp.eq.s32.totalorder %s17, 1
      %p189 = por %p187, %p188
      %p190 = scmp.ne.s32.totalorder %s182, %s185
      %p191 = scmp.eq.s32.totalorder %s17, 0
      %p192 = por %p190, %p191
      %p193 = scmp.ne.s32.totalorder %s182, %s185
      %p194 = scmp.eq.s32.totalorder %s22, 1
      %p195 = por %p193, %p194
      %p196 = scmp.ne.s32.totalorder %s185, %s186
      %p197 = scmp.eq.s32.totalorder %s22, 0
      %p198 = por %p196, %p197
      %p199 = scmp.ne.s32.totalorder %s185, %s186
      %p200 = scmp.eq.s32.totalorder %s23, 1
      %p201 = por %p199, %p200
      %p203 = scmp.ne.s32.totalorder %s186, %s202
      %p204 = scmp.eq.s32.totalorder %s23, 0
      %p205 = por %p203, %p204
      %p206 = scmp.le.s32.totalorder 1, %s17
      %p207 = scmp.lt.s32.totalorder %s17, 3
      %p208 = pnand %p206, %p207
      %p209 = pneg %p208
      // Predicated region
      $region9: #{gat_forward.3} parent=5 // pred_check
        _
      $region10: #{gat_forward.3} parent=5 // pred_check_branch
        %211 = sbr.rel (%p208) target = $region12
      $region11: #{gat_forward.3} parent=5 // pred_region
        %s212 = ssub.s32 %s17, 1
        // Predicated region
        $region13: #{gat_forward.3} parent=11 // pred_check
          %p213 = pneg %p81
        $region14: #{gat_forward.3} parent=11 // pred_check_branch
          %215 = sbr.rel (%p213) target = $region16
        $region15: #{gat_forward.3} parent=11 // pred_region
          %s216 = smul.u32 32, %s27
          %p217 = scmp.lt.s32.totalorder %s216, 31
          %s218 = scalar_select %p217, %s216, 31
          %s219 = smul.addr %s218, 8
          %s220 = scalar_lea.vmem %s1, %s219
          %s221 = smul.u32 32, %s27
        $region16: #{gat_forward.3} parent=11 // pred_fallthru
          _
        // Predicated region
        $region17: #{gat_forward.3} parent=11 // pred_check
          %p222 = pneg %p130
        $region18: #{gat_forward.3} parent=11 // pred_check_branch
          %224 = sbr.rel (%p222) target = $region20
        $region19: #{gat_forward.3} parent=11 // pred_region
          _
        $region20: #{gat_forward.3} parent=11 // pred_fallthru
          _
        // Predicated region
        $region21: #{gat_forward.3} parent=11 // pred_check
          %p225 = pneg %p151
        $region22: #{gat_forward.3} parent=11 // pred_check_branch
          %227 = sbr.rel (%p225) target = $region24
        $region23: #{gat_forward.3} parent=11 // pred_region
          _
        $region24: #{gat_forward.3} parent=11 // pred_fallthru
          _
        // Predicated region
        $region25: #{gat_forward.3} parent=11 // pred_check
          %p228 = pneg %p172
        $region26: #{gat_forward.3} parent=11 // pred_check_branch
          %230 = sbr.rel (%p228) target = $region28
        $region27: #{gat_forward.3} parent=11 // pred_region
          _
        $region28: #{gat_forward.3} parent=11 // pred_fallthru
          _
      $region12: #{gat_forward.3} parent=5 // pred_fallthru
        _
      %p231 = scmp.lt.s32.totalorder %s17, 2
      // Predicated region
      $region29: #{gat_forward.3} parent=5 // pred_check
        %p232 = pneg %p231
      $region30: #{gat_forward.3} parent=5 // pred_check_branch
        %234 = sbr.rel (%p232) target = $region32
      $region31: #{gat_forward.3} parent=5 // pred_region
        // Predicated region
        $region33: #{gat_forward.3} parent=31 // pred_check
          %p235 = pneg %p49
        $region34: #{gat_forward.3} parent=31 // pred_check_branch
          %237 = sbr.rel (%p235) target = $region36
        $region35: #{gat_forward.3} parent=31 // pred_region
          %s238 = smul.u32 16, %s24
          %p239 = scmp.lt.s32.totalorder %s238, 31
          %s240 = scalar_select %p239, %s238, 31
          %s241 = smul.addr %s240, 8
          %s242 = scalar_lea.vmem %s0, %s241
          %s243 = smul.u32 16, %s24
        $region36: #{gat_forward.3} parent=31 // pred_fallthru
          _
        // Predicated region
        $region37: #{gat_forward.3} parent=31 // pred_check
          %p244 = pneg %p103
        $region38: #{gat_forward.3} parent=31 // pred_check_branch
          %246 = sbr.rel (%p244) target = $region40
        $region39: #{gat_forward.3} parent=31 // pred_region
          %s247 = smul.u32 4, %s24
          %s248 = smul.u32 2, %s25
          %p249 = scmp.lt.s32.totalorder %s247, 7
          %s250 = scalar_select %p249, %s247, 7
          %p251 = scmp.lt.s32.totalorder %s248, 1
          %s252 = scalar_select %p251, %s248, 1
          %s253 = smul.addr %s250, 2
          %s254 = sadd.s32 %s252, %s253
          %s255 = smul.addr %s254, 8
          %s256 = scalar_lea.vmem %s2, %s255
          %s257 = smul.u32 4, %s24
          %s258 = smul.u32 2, %s25
        $region40: #{gat_forward.3} parent=31 // pred_fallthru
          _
      $region32: #{gat_forward.3} parent=5 // pred_fallthru
        _
      %p259 = scmp.le.s32.totalorder 1, %s17
      %p260 = scmp.lt.s32.totalorder %s17, 3
      %p261 = pnand %p259, %p260
      %p262 = pneg %p261
      // Predicated region
      $region41: #{gat_forward.3} parent=5 // pred_check
        _
      $region42: #{gat_forward.3} parent=5 // pred_check_branch
        %264 = sbr.rel (%p261) target = $region44
      $region43: #{gat_forward.3} parent=5 // pred_region
        %s265 = ssub.s32 %s17, 1
        %s266 = smul.u32 16, %s26
        %p267 = scmp.lt.s32.totalorder %s266, 31
        %s268 = scalar_select %p267, %s266, 31
        %s269 = smul.addr %s268, 8
        %s270 = scalar_lea.vmem %s0, %s269
        %p271 = pneg %p55
        %p272 = pneg %p52
        %s273 = smul.u32 32, %s27
        %p274 = scmp.lt.s32.totalorder %s273, 31
        %s275 = scalar_select %p274, %s273, 31
        %s276 = smul.addr %s275, 8
        %s277 = scalar_lea.vmem %s1, %s276
        %p278 = pneg %p81
        %p279 = pneg %p78
        %s280 = smul.u32 4, %s26
        %s281 = smul.u32 2, %s27
        %p282 = scmp.lt.s32.totalorder %s280, 7
        %s283 = scalar_select %p282, %s280, 7
        %p284 = scmp.lt.s32.totalorder %s281, 1
        %s285 = scalar_select %p284, %s281, 1
        %s286 = smul.addr %s283, 2
        %s287 = sadd.s32 %s285, %s286
        %s288 = smul.addr %s287, 8
        %s289 = scalar_lea.vmem %s2, %s288
        %p290 = pneg %p109
        %p291 = pneg %p106
        %p292 = pneg %p130
        %p293 = pneg %p127
        %p294 = pneg %p151
        %p295 = pneg %p148
        %p296 = pneg %p172
        %p297 = pneg %p169
        %p298 = pneg %p198
        %p299 = pneg %p195
        %s300 = sand.u32 %s185, 1
        %s301 = scalar_lea.sflag [#allocation7], %s300
        %s302 = sand.u32 %s185, 1
        %s303 = scalar_lea.vmem [#allocation6], %s302
        %s304 = smul.u32 16, %s26
        %p305 = scmp.lt.s32.totalorder %s304, 31
        %s306 = scalar_select %p305, %s304, 31
        %s307 = smul.addr %s306, 8
        %s308 = scalar_lea.vmem %s0, %s307
        %s309 = smul.u32 16, %s26
        %s310 = smul.u32 32, %s27
        %p311 = scmp.lt.s32.totalorder %s310, 31
        %s312 = scalar_select %p311, %s310, 31
        %s313 = smul.addr %s312, 8
        %s314 = scalar_lea.vmem %s1, %s313
        %s315 = smul.u32 32, %s27
        %s316 = smul.u32 4, %s26
        %s317 = smul.u32 2, %s27
        %p318 = scmp.lt.s32.totalorder %s316, 7
        %s319 = scalar_select %p318, %s316, 7
        %p320 = scmp.lt.s32.totalorder %s317, 1
        %s321 = scalar_select %p320, %s317, 1
        %s322 = smul.addr %s319, 2
        %s323 = sadd.s32 %s321, %s322
        %s324 = smul.addr %s323, 8
        %s325 = scalar_lea.vmem %s2, %s324
        %s326 = smul.u32 4, %s26
        %s327 = smul.u32 2, %s27
        %p328 = scmp.eq.s32.totalorder %s27, 0
        // Predicated region
        $region45: #{gat_forward.3} parent=43 // pred_check
          %p329 = pneg %p328
        $region46: #{gat_forward.3} parent=43 // pred_check_branch
          %331 = sbr.rel (%p329) target = $region48
        $region47: #{gat_forward.3} parent=43 // pred_region
          %vm332 = vcmask 7168
          %333 = vst.msk [vmem:[#allocation2] sm:$0xff] %vm332, -inf
          %334 = vst.msk [vmem:[#allocation2 + $0x8] sm:$0xff] %vm332, -inf
          %335 = vst.msk [vmem:[#allocation2 + $0x10] sm:$0xff] %vm332, -inf
          %336 = vst.msk [vmem:[#allocation2 + $0x18] sm:$0xff] %vm332, -inf
          %337 = vst.msk [vmem:[#allocation2 + $0x20] sm:$0xff] %vm332, -inf
          %338 = vst.msk [vmem:[#allocation2 + $0x28] sm:$0xff] %vm332, -inf
          %339 = vst.msk [vmem:[#allocation2 + $0x30] sm:$0xff] %vm332, -inf
          %340 = vst.msk [vmem:[#allocation2 + $0x38] sm:$0xff] %vm332, -inf
          %341 = vst.msk [vmem:[#allocation2 + $0x40] sm:$0xff] %vm332, -inf
          %342 = vst.msk [vmem:[#allocation2 + $0x48] sm:$0xff] %vm332, -inf
          %343 = vst.msk [vmem:[#allocation2 + $0x50] sm:$0xff] %vm332, -inf
          %344 = vst.msk [vmem:[#allocation2 + $0x58] sm:$0xff] %vm332, -inf
          %345 = vst.msk [vmem:[#allocation2 + $0x60] sm:$0xff] %vm332, -inf
          %346 = vst.msk [vmem:[#allocation2 + $0x68] sm:$0xff] %vm332, -inf
          %347 = vst.msk [vmem:[#allocation2 + $0x70] sm:$0xff] %vm332, -inf
          %348 = vst.msk [vmem:[#allocation2 + $0x78] sm:$0xff] %vm332, -inf
          %349 = vst.msk [vmem:[#allocation3] sm:$0xff] %vm332, 0.0
          %350 = vst.msk [vmem:[#allocation3 + $0x8] sm:$0xff] %vm332, 0.0
          %351 = vst.msk [vmem:[#allocation3 + $0x10] sm:$0xff] %vm332, 0.0
          %352 = vst.msk [vmem:[#allocation3 + $0x18] sm:$0xff] %vm332, 0.0
          %353 = vst.msk [vmem:[#allocation3 + $0x20] sm:$0xff] %vm332, 0.0
          %354 = vst.msk [vmem:[#allocation3 + $0x28] sm:$0xff] %vm332, 0.0
          %355 = vst.msk [vmem:[#allocation3 + $0x30] sm:$0xff] %vm332, 0.0
          %356 = vst.msk [vmem:[#allocation3 + $0x38] sm:$0xff] %vm332, 0.0
          %357 = vst.msk [vmem:[#allocation3 + $0x40] sm:$0xff] %vm332, 0.0
          %358 = vst.msk [vmem:[#allocation3 + $0x48] sm:$0xff] %vm332, 0.0
          %359 = vst.msk [vmem:[#allocation3 + $0x50] sm:$0xff] %vm332, 0.0
          %360 = vst.msk [vmem:[#allocation3 + $0x58] sm:$0xff] %vm332, 0.0
          %361 = vst.msk [vmem:[#allocation3 + $0x60] sm:$0xff] %vm332, 0.0
          %362 = vst.msk [vmem:[#allocation3 + $0x68] sm:$0xff] %vm332, 0.0
          %363 = vst.msk [vmem:[#allocation3 + $0x70] sm:$0xff] %vm332, 0.0
          %364 = vst.msk [vmem:[#allocation3 + $0x78] sm:$0xff] %vm332, 0.0
          %vm365 = vcmask 64512
          %366 = vst.msk [vmem:[#allocation4] sm:$0xff] %vm365, 0.0
          %367 = vst.msk [vmem:[#allocation4 + $0x8] sm:$0xff] %vm365, 0.0
          %368 = vst.msk [vmem:[#allocation4 + $0x10] sm:$0xff] %vm365, 0.0
          %369 = vst.msk [vmem:[#allocation4 + $0x18] sm:$0xff] %vm365, 0.0
          %370 = vst.msk [vmem:[#allocation4 + $0x20] sm:$0xff] %vm365, 0.0
          %371 = vst.msk [vmem:[#allocation4 + $0x28] sm:$0xff] %vm365, 0.0
          %372 = vst.msk [vmem:[#allocation4 + $0x30] sm:$0xff] %vm365, 0.0
          %373 = vst.msk [vmem:[#allocation4 + $0x38] sm:$0xff] %vm365, 0.0
          %374 = vst.msk [vmem:[#allocation4 + $0x40] sm:$0xff] %vm365, 0.0
          %375 = vst.msk [vmem:[#allocation4 + $0x48] sm:$0xff] %vm365, 0.0
          %376 = vst.msk [vmem:[#allocation4 + $0x50] sm:$0xff] %vm365, 0.0
          %377 = vst.msk [vmem:[#allocation4 + $0x58] sm:$0xff] %vm365, 0.0
          %378 = vst.msk [vmem:[#allocation4 + $0x60] sm:$0xff] %vm365, 0.0
          %379 = vst.msk [vmem:[#allocation4 + $0x68] sm:$0xff] %vm365, 0.0
          %380 = vst.msk [vmem:[#allocation4 + $0x70] sm:$0xff] %vm365, 0.0
          %381 = vst.msk [vmem:[#allocation4 + $0x78] sm:$0xff] %vm365, 0.0
        $region48: #{gat_forward.3} parent=43 // pred_fallthru
          _
        %v382 = vld [vmem:[%s314] sm:$0xff]
        %v383 = vld [vmem:[%s314 + $0x8] sm:$0xff]
        %v384 = vld [vmem:[%s314 + $0x10] sm:$0xff]
        %v385 = vld [vmem:[%s314 + $0x18] sm:$0xff]
        %v386 = vld [vmem:[%s314 + $0x20] sm:$0xff]
        %v387 = vld [vmem:[%s314 + $0x28] sm:$0xff]
        %v388 = vld [vmem:[%s314 + $0x30] sm:$0xff]
        %v389 = vld [vmem:[%s314 + $0x38] sm:$0xff]
        %v390 = vld [vmem:[%s314 + $0x40] sm:$0xff]
        %v391 = vld [vmem:[%s314 + $0x48] sm:$0xff]
        %v392 = vld [vmem:[%s314 + $0x50] sm:$0xff]
        %v393 = vld [vmem:[%s314 + $0x58] sm:$0xff]
        %v394 = vld [vmem:[%s314 + $0x60] sm:$0xff]
        %v395 = vld [vmem:[%s314 + $0x68] sm:$0xff]
        %v396 = vld [vmem:[%s314 + $0x70] sm:$0xff]
        %v397 = vld [vmem:[%s314 + $0x78] sm:$0xff]
        %v398 = vld [vmem:[%s314 + $0x80] sm:$0xff]
        %v399 = vld [vmem:[%s314 + $0x88] sm:$0xff]
        %v400 = vld [vmem:[%s314 + $0x90] sm:$0xff]
        %v401 = vld [vmem:[%s314 + $0x98] sm:$0xff]
        %v402 = vld [vmem:[%s314 + $0xa0] sm:$0xff]
        %v403 = vld [vmem:[%s314 + $0xa8] sm:$0xff]
        %v404 = vld [vmem:[%s314 + $0xb0] sm:$0xff]
        %v405 = vld [vmem:[%s314 + $0xb8] sm:$0xff]
        %v406 = vld [vmem:[%s314 + $0xc0] sm:$0xff]
        %v407 = vld [vmem:[%s314 + $0xc8] sm:$0xff]
        %v408 = vld [vmem:[%s314 + $0xd0] sm:$0xff]
        %v409 = vld [vmem:[%s314 + $0xd8] sm:$0xff]
        %v410 = vld [vmem:[%s314 + $0xe0] sm:$0xff]
        %v411 = vld [vmem:[%s314 + $0xe8] sm:$0xff]
        %v412 = vld [vmem:[%s314 + $0xf0] sm:$0xff]
        %v413 = vld [vmem:[%s314 + $0xf8] sm:$0xff]
        %v414 = vld [vmem:[%s308] sm:$0xff]
        %v415 = vld [vmem:[%s308 + $0x8] sm:$0xff]
        %v416 = vld [vmem:[%s308 + $0x10] sm:$0xff]
        %v417 = vld [vmem:[%s308 + $0x18] sm:$0xff]
        %v418 = vld [vmem:[%s308 + $0x20] sm:$0xff]
        %v419 = vld [vmem:[%s308 + $0x28] sm:$0xff]
        %v420 = vld [vmem:[%s308 + $0x30] sm:$0xff]
        %v421 = vld [vmem:[%s308 + $0x38] sm:$0xff]
        %v422 = vld [vmem:[%s308 + $0x40] sm:$0xff]
        %v423 = vld [vmem:[%s308 + $0x48] sm:$0xff]
        %v424 = vld [vmem:[%s308 + $0x50] sm:$0xff]
        %v425 = vld [vmem:[%s308 + $0x58] sm:$0xff]
        %v426 = vld [vmem:[%s308 + $0x60] sm:$0xff]
        %v427 = vld [vmem:[%s308 + $0x68] sm:$0xff]
        %v428 = vld [vmem:[%s308 + $0x70] sm:$0xff]
        %v429 = vld [vmem:[%s308 + $0x78] sm:$0xff]
        %v430 = vld [vmem:[%s325] sm:$0xff]
        %v431 = vld [vmem:[%s325 + $0x8] sm:$0xff]
        %v432 = vld [vmem:[%s325 + $0x10] sm:$0xff]
        %v433 = vld [vmem:[%s325 + $0x18] sm:$0xff]
        %v434 = vld [vmem:[%s325 + $0x20] sm:$0xff]
        %v435 = vld [vmem:[%s325 + $0x28] sm:$0xff]
        %v436 = vld [vmem:[%s325 + $0x30] sm:$0xff]
        %v437 = vld [vmem:[%s325 + $0x38] sm:$0xff]
        %v438 = vunpack.c.0.s8 %v430
        %v439 = vunpack.c.0.s8 %v431
        %v440 = vunpack.c.1.s8 %v430
        %v441 = vunpack.c.1.s8 %v431
        %v442 = vunpack.c.2.s8 %v430
        %v443 = vunpack.c.2.s8 %v431
        %v444 = vunpack.c.3.s8 %v430
        %v445 = vunpack.c.3.s8 %v431
        %v446 = vunpack.c.0.s8 %v432
        %v447 = vunpack.c.0.s8 %v433
        %v448 = vunpack.c.1.s8 %v432
        %v449 = vunpack.c.1.s8 %v433
        %v450 = vunpack.c.2.s8 %v432
        %v451 = vunpack.c.2.s8 %v433
        %v452 = vunpack.c.3.s8 %v432
        %v453 = vunpack.c.3.s8 %v433
        %v454 = vunpack.c.0.s8 %v434
        %v455 = vunpack.c.0.s8 %v435
        %v456 = vunpack.c.1.s8 %v434
        %v457 = vunpack.c.1.s8 %v435
        %v458 = vunpack.c.2.s8 %v434
        %v459 = vunpack.c.2.s8 %v435
        %v460 = vunpack.c.3.s8 %v434
        %v461 = vunpack.c.3.s8 %v435
        %v462 = vunpack.c.0.s8 %v436
        %v463 = vunpack.c.0.s8 %v437
        %v464 = vunpack.c.1.s8 %v436
        %v465 = vunpack.c.1.s8 %v437
        %v466 = vunpack.c.2.s8 %v436
        %v467 = vunpack.c.2.s8 %v437
        %v468 = vunpack.c.3.s8 %v436
        %v469 = vunpack.c.3.s8 %v437
        %vm470 = vcmp.gt.s32.totalorder %v438, 0
        %vm471 = vcmp.gt.s32.totalorder %v439, 0
        %vm472 = vcmp.gt.s32.totalorder %v440, 0
        %vm473 = vcmp.gt.s32.totalorder %v441, 0
        %vm474 = vcmp.gt.s32.totalorder %v442, 0
        %vm475 = vcmp.gt.s32.totalorder %v443, 0
        %vm476 = vcmp.gt.s32.totalorder %v444, 0
        %vm477 = vcmp.gt.s32.totalorder %v445, 0
        %vm478 = vcmp.gt.s32.totalorder %v446, 0
        %vm479 = vcmp.gt.s32.totalorder %v447, 0
        %vm480 = vcmp.gt.s32.totalorder %v448, 0
        %vm481 = vcmp.gt.s32.totalorder %v449, 0
        %vm482 = vcmp.gt.s32.totalorder %v450, 0
        %vm483 = vcmp.gt.s32.totalorder %v451, 0
        %vm484 = vcmp.gt.s32.totalorder %v452, 0
        %vm485 = vcmp.gt.s32.totalorder %v453, 0
        %vm486 = vcmp.gt.s32.totalorder %v454, 0
        %vm487 = vcmp.gt.s32.totalorder %v455, 0
        %vm488 = vcmp.gt.s32.totalorder %v456, 0
        %vm489 = vcmp.gt.s32.totalorder %v457, 0
        %vm490 = vcmp.gt.s32.totalorder %v458, 0
        %vm491 = vcmp.gt.s32.totalorder %v459, 0
        %vm492 = vcmp.gt.s32.totalorder %v460, 0
        %vm493 = vcmp.gt.s32.totalorder %v461, 0
        %vm494 = vcmp.gt.s32.totalorder %v462, 0
        %vm495 = vcmp.gt.s32.totalorder %v463, 0
        %vm496 = vcmp.gt.s32.totalorder %v464, 0
        %vm497 = vcmp.gt.s32.totalorder %v465, 0
        %vm498 = vcmp.gt.s32.totalorder %v466, 0
        %vm499 = vcmp.gt.s32.totalorder %v467, 0
        %vm500 = vcmp.gt.s32.totalorder %v468, 0
        %vm501 = vcmp.gt.s32.totalorder %v469, 0
        %534 = vrot.lane.b32.xlu0 %v382, 120
        %v535 = vpop.permute.xlu0 %534
        %536 = vrot.lane.b32.xlu0 %v383, 120
        %v537 = vpop.permute.xlu0 %536
        %538 = vrot.lane.b32.xlu0 %v384, 120
        %v539 = vpop.permute.xlu0 %538
        %540 = vrot.lane.b32.xlu0 %v385, 120
        %v541 = vpop.permute.xlu0 %540
        %542 = vrot.lane.b32.xlu0 %v386, 120
        %v543 = vpop.permute.xlu0 %542
        %544 = vrot.lane.b32.xlu0 %v387, 120
        %v545 = vpop.permute.xlu0 %544
        %546 = vrot.lane.b32.xlu0 %v388, 120
        %v547 = vpop.permute.xlu0 %546
        %548 = vrot.lane.b32.xlu0 %v389, 120
        %v549 = vpop.permute.xlu0 %548
        %550 = vrot.lane.b32.xlu0 %v390, 120
        %v551 = vpop.permute.xlu0 %550
        %552 = vrot.lane.b32.xlu0 %v391, 120
        %v553 = vpop.permute.xlu0 %552
        %554 = vrot.lane.b32.xlu0 %v392, 120
        %v555 = vpop.permute.xlu0 %554
        %556 = vrot.lane.b32.xlu0 %v393, 120
        %v557 = vpop.permute.xlu0 %556
        %558 = vrot.lane.b32.xlu0 %v394, 120
        %v559 = vpop.permute.xlu0 %558
        %560 = vrot.lane.b32.xlu0 %v395, 120
        %v561 = vpop.permute.xlu0 %560
        %562 = vrot.lane.b32.xlu0 %v396, 120
        %v563 = vpop.permute.xlu0 %562
        %564 = vrot.lane.b32.xlu0 %v397, 120
        %v565 = vpop.permute.xlu0 %564
        %566 = vrot.lane.b32.xlu0 %v398, 120
        %v567 = vpop.permute.xlu0 %566
        %568 = vrot.lane.b32.xlu0 %v399, 120
        %v569 = vpop.permute.xlu0 %568
        %570 = vrot.lane.b32.xlu0 %v400, 120
        %v571 = vpop.permute.xlu0 %570
        %572 = vrot.lane.b32.xlu0 %v401, 120
        %v573 = vpop.permute.xlu0 %572
        %574 = vrot.lane.b32.xlu0 %v402, 120
        %v575 = vpop.permute.xlu0 %574
        %576 = vrot.lane.b32.xlu0 %v403, 120
        %v577 = vpop.permute.xlu0 %576
        %578 = vrot.lane.b32.xlu0 %v404, 120
        %v579 = vpop.permute.xlu0 %578
        %580 = vrot.lane.b32.xlu0 %v405, 120
        %v581 = vpop.permute.xlu0 %580
        %582 = vrot.lane.b32.xlu0 %v406, 120
        %v583 = vpop.permute.xlu0 %582
        %584 = vrot.lane.b32.xlu0 %v407, 120
        %v585 = vpop.permute.xlu0 %584
        %586 = vrot.lane.b32.xlu0 %v408, 120
        %v587 = vpop.permute.xlu0 %586
        %588 = vrot.lane.b32.xlu0 %v409, 120
        %v589 = vpop.permute.xlu0 %588
        %590 = vrot.lane.b32.xlu0 %v410, 120
        %v591 = vpop.permute.xlu0 %590
        %592 = vrot.lane.b32.xlu0 %v411, 120
        %v593 = vpop.permute.xlu0 %592
        %594 = vrot.lane.b32.xlu0 %v412, 120
        %v595 = vpop.permute.xlu0 %594
        %596 = vrot.lane.b32.xlu0 %v413, 120
        %v597 = vpop.permute.xlu0 %596
        %630 = vxpose.xlu0.b32.start [1/16] %v535, 128
        %631 = vxpose.xlu0.b32.cont [2/16] %v537, 128
        %632 = vxpose.xlu0.b32.cont [3/16] %v539, 128
        %633 = vxpose.xlu0.b32.cont [4/16] %v541, 128
        %634 = vxpose.xlu0.b32.cont [5/16] %v543, 128
        %635 = vxpose.xlu0.b32.cont [6/16] %v545, 128
        %636 = vxpose.xlu0.b32.cont [7/16] %v547, 128
        %637 = vxpose.xlu0.b32.cont [8/16] %v549, 128
        %638 = vxpose.xlu0.b32.cont [9/16] %v551, 128
        %639 = vxpose.xlu0.b32.cont [10/16] %v553, 128
        %640 = vxpose.xlu0.b32.cont [11/16] %v555, 128
        %641 = vxpose.xlu0.b32.cont [12/16] %v557, 128
        %642 = vxpose.xlu0.b32.cont [13/16] %v559, 128
        %643 = vxpose.xlu0.b32.cont [14/16] %v561, 128
        %644 = vxpose.xlu0.b32.cont [15/16] %v563, 128
        %645 = vxpose.xlu0.b32.end [16/16] %v565, 128
        %v646 = vpop.trf.xlu0
        %v647 = vpop.trf.xlu0
        %v648 = vpop.trf.xlu0
        %v649 = vpop.trf.xlu0
        %v650 = vpop.trf.xlu0
        %v651 = vpop.trf.xlu0
        %v652 = vpop.trf.xlu0
        %v653 = vpop.trf.xlu0
        %v654 = vpop.trf.xlu0
        %v655 = vpop.trf.xlu0
        %v656 = vpop.trf.xlu0
        %v657 = vpop.trf.xlu0
        %v658 = vpop.trf.xlu0
        %v659 = vpop.trf.xlu0
        %v660 = vpop.trf.xlu0
        %v661 = vpop.trf.xlu0
        %662 = vxpose.xlu0.b32.start [1/16] %v567, 128
        %663 = vxpose.xlu0.b32.cont [2/16] %v569, 128
        %664 = vxpose.xlu0.b32.cont [3/16] %v571, 128
        %665 = vxpose.xlu0.b32.cont [4/16] %v573, 128
        %666 = vxpose.xlu0.b32.cont [5/16] %v575, 128
        %667 = vxpose.xlu0.b32.cont [6/16] %v577, 128
        %668 = vxpose.xlu0.b32.cont [7/16] %v579, 128
        %669 = vxpose.xlu0.b32.cont [8/16] %v581, 128
        %670 = vxpose.xlu0.b32.cont [9/16] %v583, 128
        %671 = vxpose.xlu0.b32.cont [10/16] %v585, 128
        %672 = vxpose.xlu0.b32.cont [11/16] %v587, 128
        %673 = vxpose.xlu0.b32.cont [12/16] %v589, 128
        %674 = vxpose.xlu0.b32.cont [13/16] %v591, 128
        %675 = vxpose.xlu0.b32.cont [14/16] %v593, 128
        %676 = vxpose.xlu0.b32.cont [15/16] %v595, 128
        %677 = vxpose.xlu0.b32.end [16/16] %v597, 128
        %v678 = vpop.trf.xlu0
        %v679 = vpop.trf.xlu0
        %v680 = vpop.trf.xlu0
        %v681 = vpop.trf.xlu0
        %v682 = vpop.trf.xlu0
        %v683 = vpop.trf.xlu0
        %v684 = vpop.trf.xlu0
        %v685 = vpop.trf.xlu0
        %v686 = vpop.trf.xlu0
        %v687 = vpop.trf.xlu0
        %v688 = vpop.trf.xlu0
        %v689 = vpop.trf.xlu0
        %v690 = vpop.trf.xlu0
        %v691 = vpop.trf.xlu0
        %v692 = vpop.trf.xlu0
        %v693 = vpop.trf.xlu0
        %695 = vset.pattern.permute.xlu0 9
        %696 = vperm.xlu0 %695, %v414
        %v697 = vpop.permute.xlu0 %696
        %700 = vset.pattern.permute.xlu0 9
        %701 = vperm.xlu0 %700, %v415
        %v702 = vpop.permute.xlu0 %701
        %705 = vset.pattern.permute.xlu0 9
        %706 = vperm.xlu0 %705, %v416
        %v707 = vpop.permute.xlu0 %706
        %710 = vset.pattern.permute.xlu0 9
        %711 = vperm.xlu0 %710, %v417
        %v712 = vpop.permute.xlu0 %711
        %715 = vset.pattern.permute.xlu0 9
        %716 = vperm.xlu0 %715, %v418
        %v717 = vpop.permute.xlu0 %716
        %720 = vset.pattern.permute.xlu0 9
        %721 = vperm.xlu0 %720, %v419
        %v722 = vpop.permute.xlu0 %721
        %725 = vset.pattern.permute.xlu0 9
        %726 = vperm.xlu0 %725, %v420
        %v727 = vpop.permute.xlu0 %726
        %730 = vset.pattern.permute.xlu0 9
        %731 = vperm.xlu0 %730, %v421
        %v732 = vpop.permute.xlu0 %731
        %735 = vset.pattern.permute.xlu0 9
        %736 = vperm.xlu0 %735, %v422
        %v737 = vpop.permute.xlu0 %736
        %740 = vset.pattern.permute.xlu0 9
        %741 = vperm.xlu0 %740, %v423
        %v742 = vpop.permute.xlu0 %741
        %745 = vset.pattern.permute.xlu0 9
        %746 = vperm.xlu0 %745, %v424
        %v747 = vpop.permute.xlu0 %746
        %750 = vset.pattern.permute.xlu0 9
        %751 = vperm.xlu0 %750, %v425
        %v752 = vpop.permute.xlu0 %751
        %755 = vset.pattern.permute.xlu0 9
        %756 = vperm.xlu0 %755, %v426
        %v757 = vpop.permute.xlu0 %756
        %760 = vset.pattern.permute.xlu0 9
        %761 = vperm.xlu0 %760, %v427
        %v762 = vpop.permute.xlu0 %761
        %765 = vset.pattern.permute.xlu0 9
        %766 = vperm.xlu0 %765, %v428
        %v767 = vpop.permute.xlu0 %766
        %770 = vset.pattern.permute.xlu0 9
        %771 = vperm.xlu0 %770, %v429
        %v772 = vpop.permute.xlu0 %771
        %v774 = vperm.slane %v646, 0
        %v775 = vperm.slane %v678, 0
        %v776 = vadd.f32 %v697, %v774
        %v777 = vadd.f32 %v697, %v775
        %v778 = vadd.f32 %v702, %v774
        %v779 = vadd.f32 %v702, %v775
        %v780 = vadd.f32 %v707, %v774
        %v781 = vadd.f32 %v707, %v775
        %v782 = vadd.f32 %v712, %v774
        %v783 = vadd.f32 %v712, %v775
        %v784 = vadd.f32 %v717, %v774
        %v785 = vadd.f32 %v717, %v775
        %v786 = vadd.f32 %v722, %v774
        %v787 = vadd.f32 %v722, %v775
        %v788 = vadd.f32 %v727, %v774
        %v789 = vadd.f32 %v727, %v775
        %v790 = vadd.f32 %v732, %v774
        %v791 = vadd.f32 %v732, %v775
        %v792 = vadd.f32 %v737, %v774
        %v793 = vadd.f32 %v737, %v775
        %v794 = vadd.f32 %v742, %v774
        %v795 = vadd.f32 %v742, %v775
        %v796 = vadd.f32 %v747, %v774
        %v797 = vadd.f32 %v747, %v775
        %v798 = vadd.f32 %v752, %v774
        %v799 = vadd.f32 %v752, %v775
        %v800 = vadd.f32 %v757, %v774
        %v801 = vadd.f32 %v757, %v775
        %v802 = vadd.f32 %v762, %v774
        %v803 = vadd.f32 %v762, %v775
        %v804 = vadd.f32 %v767, %v774
        %v805 = vadd.f32 %v767, %v775
        %v806 = vadd.f32 %v772, %v774
        %v807 = vadd.f32 %v772, %v775
        %vm808 = vcmp.gt.f32.partialorder %v776, 0.0
        %vm809 = vcmp.gt.f32.partialorder %v777, 0.0
        %vm810 = vcmp.gt.f32.partialorder %v778, 0.0
        %vm811 = vcmp.gt.f32.partialorder %v779, 0.0
        %vm812 = vcmp.gt.f32.partialorder %v780, 0.0
        %vm813 = vcmp.gt.f32.partialorder %v781, 0.0
        %vm814 = vcmp.gt.f32.partialorder %v782, 0.0
        %vm815 = vcmp.gt.f32.partialorder %v783, 0.0
        %vm816 = vcmp.gt.f32.partialorder %v784, 0.0
        %vm817 = vcmp.gt.f32.partialorder %v785, 0.0
        %vm818 = vcmp.gt.f32.partialorder %v786, 0.0
        %vm819 = vcmp.gt.f32.partialorder %v787, 0.0
        %vm820 = vcmp.gt.f32.partialorder %v788, 0.0
        %vm821 = vcmp.gt.f32.partialorder %v789, 0.0
        %vm822 = vcmp.gt.f32.partialorder %v790, 0.0
        %vm823 = vcmp.gt.f32.partialorder %v791, 0.0
        %vm824 = vcmp.gt.f32.partialorder %v792, 0.0
        %vm825 = vcmp.gt.f32.partialorder %v793, 0.0
        %vm826 = vcmp.gt.f32.partialorder %v794, 0.0
        %vm827 = vcmp.gt.f32.partialorder %v795, 0.0
        %vm828 = vcmp.gt.f32.partialorder %v796, 0.0
        %vm829 = vcmp.gt.f32.partialorder %v797, 0.0
        %vm830 = vcmp.gt.f32.partialorder %v798, 0.0
        %vm831 = vcmp.gt.f32.partialorder %v799, 0.0
        %vm832 = vcmp.gt.f32.partialorder %v800, 0.0
        %vm833 = vcmp.gt.f32.partialorder %v801, 0.0
        %vm834 = vcmp.gt.f32.partialorder %v802, 0.0
        %vm835 = vcmp.gt.f32.partialorder %v803, 0.0
        %vm836 = vcmp.gt.f32.partialorder %v804, 0.0
        %vm837 = vcmp.gt.f32.partialorder %v805, 0.0
        %vm838 = vcmp.gt.f32.partialorder %v806, 0.0
        %vm839 = vcmp.gt.f32.partialorder %v807, 0.0
        %v840 = vmul.f32 %v776, 0.2
        %v841 = vmul.f32 %v777, 0.2
        %v842 = vmul.f32 %v778, 0.2
        %v843 = vmul.f32 %v779, 0.2
        %v844 = vmul.f32 %v780, 0.2
        %v845 = vmul.f32 %v781, 0.2
        %v846 = vmul.f32 %v782, 0.2
        %v847 = vmul.f32 %v783, 0.2
        %v848 = vmul.f32 %v784, 0.2
        %v849 = vmul.f32 %v785, 0.2
        %v850 = vmul.f32 %v786, 0.2
        %v851 = vmul.f32 %v787, 0.2
        %v852 = vmul.f32 %v788, 0.2
        %v853 = vmul.f32 %v789, 0.2
        %v854 = vmul.f32 %v790, 0.2
        %v855 = vmul.f32 %v791, 0.2
        %v856 = vmul.f32 %v792, 0.2
        %v857 = vmul.f32 %v793, 0.2
        %v858 = vmul.f32 %v794, 0.2
        %v859 = vmul.f32 %v795, 0.2
        %v860 = vmul.f32 %v796, 0.2
        %v861 = vmul.f32 %v797, 0.2
        %v862 = vmul.f32 %v798, 0.2
        %v863 = vmul.f32 %v799, 0.2
        %v864 = vmul.f32 %v800, 0.2
        %v865 = vmul.f32 %v801, 0.2
        %v866 = vmul.f32 %v802, 0.2
        %v867 = vmul.f32 %v803, 0.2
        %v868 = vmul.f32 %v804, 0.2
        %v869 = vmul.f32 %v805, 0.2
        %v870 = vmul.f32 %v806, 0.2
        %v871 = vmul.f32 %v807, 0.2
        %v872 = vsel %vm808, %v776, %v840
        %v873 = vsel %vm809, %v777, %v841
        %v874 = vsel %vm810, %v778, %v842
        %v875 = vsel %vm811, %v779, %v843
        %v876 = vsel %vm812, %v780, %v844
        %v877 = vsel %vm813, %v781, %v845
        %v878 = vsel %vm814, %v782, %v846
        %v879 = vsel %vm815, %v783, %v847
        %v880 = vsel %vm816, %v784, %v848
        %v881 = vsel %vm817, %v785, %v849
        %v882 = vsel %vm818, %v786, %v850
        %v883 = vsel %vm819, %v787, %v851
        %v884 = vsel %vm820, %v788, %v852
        %v885 = vsel %vm821, %v789, %v853
        %v886 = vsel %vm822, %v790, %v854
        %v887 = vsel %vm823, %v791, %v855
        %v888 = vsel %vm824, %v792, %v856
        %v889 = vsel %vm825, %v793, %v857
        %v890 = vsel %vm826, %v794, %v858
        %v891 = vsel %vm827, %v795, %v859
        %v892 = vsel %vm828, %v796, %v860
        %v893 = vsel %vm829, %v797, %v861
        %v894 = vsel %vm830, %v798, %v862
        %v895 = vsel %vm831, %v799, %v863
        %v896 = vsel %vm832, %v800, %v864
        %v897 = vsel %vm833, %v801, %v865
        %v898 = vsel %vm834, %v802, %v866
        %v899 = vsel %vm835, %v803, %v867
        %v900 = vsel %vm836, %v804, %v868
        %v901 = vsel %vm837, %v805, %v869
        %v902 = vsel %vm838, %v806, %v870
        %v903 = vsel %vm839, %v807, %v871
        %v904 = vsel %vm470, %v872, -1e+30
        %v905 = vsel %vm471, %v873, -1e+30
        %v906 = vsel %vm472, %v874, -1e+30
        %v907 = vsel %vm473, %v875, -1e+30
        %v908 = vsel %vm474, %v876, -1e+30
        %v909 = vsel %vm475, %v877, -1e+30
        %v910 = vsel %vm476, %v878, -1e+30
        %v911 = vsel %vm477, %v879, -1e+30
        %v912 = vsel %vm478, %v880, -1e+30
        %v913 = vsel %vm479, %v881, -1e+30
        %v914 = vsel %vm480, %v882, -1e+30
        %v915 = vsel %vm481, %v883, -1e+30
        %v916 = vsel %vm482, %v884, -1e+30
        %v917 = vsel %vm483, %v885, -1e+30
        %v918 = vsel %vm484, %v886, -1e+30
        %v919 = vsel %vm485, %v887, -1e+30
        %v920 = vsel %vm486, %v888, -1e+30
        %v921 = vsel %vm487, %v889, -1e+30
        %v922 = vsel %vm488, %v890, -1e+30
        %v923 = vsel %vm489, %v891, -1e+30
        %v924 = vsel %vm490, %v892, -1e+30
        %v925 = vsel %vm491, %v893, -1e+30
        %v926 = vsel %vm492, %v894, -1e+30
        %v927 = vsel %vm493, %v895, -1e+30
        %v928 = vsel %vm494, %v896, -1e+30
        %v929 = vsel %vm495, %v897, -1e+30
        %v930 = vsel %vm496, %v898, -1e+30
        %v931 = vsel %vm497, %v899, -1e+30
        %v932 = vsel %vm498, %v900, -1e+30
        %v933 = vsel %vm499, %v901, -1e+30
        %v934 = vsel %vm500, %v902, -1e+30
        %v935 = vsel %vm501, %v903, -1e+30
        %v936 = vld [vmem:[#allocation2] sm:$0xff]
        %v937 = vld [vmem:[#allocation2 + $0x8] sm:$0xff]
        %v938 = vld [vmem:[#allocation2 + $0x10] sm:$0xff]
        %v939 = vld [vmem:[#allocation2 + $0x18] sm:$0xff]
        %v940 = vld [vmem:[#allocation2 + $0x20] sm:$0xff]
        %v941 = vld [vmem:[#allocation2 + $0x28] sm:$0xff]
        %v942 = vld [vmem:[#allocation2 + $0x30] sm:$0xff]
        %v943 = vld [vmem:[#allocation2 + $0x38] sm:$0xff]
        %v944 = vld [vmem:[#allocation2 + $0x40] sm:$0xff]
        %v945 = vld [vmem:[#allocation2 + $0x48] sm:$0xff]
        %v946 = vld [vmem:[#allocation2 + $0x50] sm:$0xff]
        %v947 = vld [vmem:[#allocation2 + $0x58] sm:$0xff]
        %v948 = vld [vmem:[#allocation2 + $0x60] sm:$0xff]
        %v949 = vld [vmem:[#allocation2 + $0x68] sm:$0xff]
        %v950 = vld [vmem:[#allocation2 + $0x70] sm:$0xff]
        %v951 = vld [vmem:[#allocation2 + $0x78] sm:$0xff]
        %v952 = vmax.f32 %v904, %v905
        %953 = vmax.xlane.f32.xlu0 %v952
        %v954 = vpop.xlane.xlu0 %953
        %v955 = vmax.f32 %v906, %v907
        %956 = vmax.xlane.f32.xlu0 %v955
        %v957 = vpop.xlane.xlu0 %956
        %v958 = vmax.f32 %v908, %v909
        %959 = vmax.xlane.f32.xlu0 %v958
        %v960 = vpop.xlane.xlu0 %959
        %v961 = vmax.f32 %v910, %v911
        %962 = vmax.xlane.f32.xlu0 %v961
        %v963 = vpop.xlane.xlu0 %962
        %v964 = vmax.f32 %v912, %v913
        %965 = vmax.xlane.f32.xlu0 %v964
        %v966 = vpop.xlane.xlu0 %965
        %v967 = vmax.f32 %v914, %v915
        %968 = vmax.xlane.f32.xlu0 %v967
        %v969 = vpop.xlane.xlu0 %968
        %v970 = vmax.f32 %v916, %v917
        %971 = vmax.xlane.f32.xlu0 %v970
        %v972 = vpop.xlane.xlu0 %971
        %v973 = vmax.f32 %v918, %v919
        %974 = vmax.xlane.f32.xlu0 %v973
        %v975 = vpop.xlane.xlu0 %974
        %v976 = vmax.f32 %v920, %v921
        %977 = vmax.xlane.f32.xlu0 %v976
        %v978 = vpop.xlane.xlu0 %977
        %v979 = vmax.f32 %v922, %v923
        %980 = vmax.xlane.f32.xlu0 %v979
        %v981 = vpop.xlane.xlu0 %980
        %v982 = vmax.f32 %v924, %v925
        %983 = vmax.xlane.f32.xlu0 %v982
        %v984 = vpop.xlane.xlu0 %983
        %v985 = vmax.f32 %v926, %v927
        %986 = vmax.xlane.f32.xlu0 %v985
        %v987 = vpop.xlane.xlu0 %986
        %v988 = vmax.f32 %v928, %v929
        %989 = vmax.xlane.f32.xlu0 %v988
        %v990 = vpop.xlane.xlu0 %989
        %v991 = vmax.f32 %v930, %v931
        %992 = vmax.xlane.f32.xlu0 %v991
        %v993 = vpop.xlane.xlu0 %992
        %v994 = vmax.f32 %v932, %v933
        %995 = vmax.xlane.f32.xlu0 %v994
        %v996 = vpop.xlane.xlu0 %995
        %v997 = vmax.f32 %v934, %v935
        %998 = vmax.xlane.f32.xlu0 %v997
        %v999 = vpop.xlane.xlu0 %998
        %v1000 = vmax.f32 %v936, %v954
        %v1001 = vmax.f32 %v937, %v957
        %v1002 = vmax.f32 %v938, %v960
        %v1003 = vmax.f32 %v939, %v963
        %v1004 = vmax.f32 %v940, %v966
        %v1005 = vmax.f32 %v941, %v969
        %v1006 = vmax.f32 %v942, %v972
        %v1007 = vmax.f32 %v943, %v975
        %v1008 = vmax.f32 %v944, %v978
        %v1009 = vmax.f32 %v945, %v981
        %v1010 = vmax.f32 %v946, %v984
        %v1011 = vmax.f32 %v947, %v987
        %v1012 = vmax.f32 %v948, %v990
        %v1013 = vmax.f32 %v949, %v993
        %v1014 = vmax.f32 %v950, %v996
        %v1015 = vmax.f32 %v951, %v999
        %v1016 = vsub.f32 %v936, %v1000
        %v1017 = vsub.f32 %v937, %v1001
        %v1018 = vsub.f32 %v938, %v1002
        %v1019 = vsub.f32 %v939, %v1003
        %v1020 = vsub.f32 %v940, %v1004
        %v1021 = vsub.f32 %v941, %v1005
        %v1022 = vsub.f32 %v942, %v1006
        %v1023 = vsub.f32 %v943, %v1007
        %v1024 = vsub.f32 %v944, %v1008
        %v1025 = vsub.f32 %v945, %v1009
        %v1026 = vsub.f32 %v946, %v1010
        %v1027 = vsub.f32 %v947, %v1011
        %v1028 = vsub.f32 %v948, %v1012
        %v1029 = vsub.f32 %v949, %v1013
        %v1030 = vsub.f32 %v950, %v1014
        %v1031 = vsub.f32 %v951, %v1015
        %v1032 = vmul.f32 %v1016, 1.442695
        %v1033 = vpow.pop %v1032
        %v1034 = vmul.f32 %v1017, 1.442695
        %v1035 = vpow.pop %v1034
        %v1036 = vmul.f32 %v1018, 1.442695
        %v1037 = vpow.pop %v1036
        %v1038 = vmul.f32 %v1019, 1.442695
        %v1039 = vpow.pop %v1038
        %v1040 = vmul.f32 %v1020, 1.442695
        %v1041 = vpow.pop %v1040
        %v1042 = vmul.f32 %v1021, 1.442695
        %v1043 = vpow.pop %v1042
        %v1044 = vmul.f32 %v1022, 1.442695
        %v1045 = vpow.pop %v1044
        %v1046 = vmul.f32 %v1023, 1.442695
        %v1047 = vpow.pop %v1046
        %v1048 = vmul.f32 %v1024, 1.442695
        %v1049 = vpow.pop %v1048
        %v1050 = vmul.f32 %v1025, 1.442695
        %v1051 = vpow.pop %v1050
        %v1052 = vmul.f32 %v1026, 1.442695
        %v1053 = vpow.pop %v1052
        %v1054 = vmul.f32 %v1027, 1.442695
        %v1055 = vpow.pop %v1054
        %v1056 = vmul.f32 %v1028, 1.442695
        %v1057 = vpow.pop %v1056
        %v1058 = vmul.f32 %v1029, 1.442695
        %v1059 = vpow.pop %v1058
        %v1060 = vmul.f32 %v1030, 1.442695
        %v1061 = vpow.pop %v1060
        %v1062 = vmul.f32 %v1031, 1.442695
        %v1063 = vpow.pop %v1062
        %1065 = vset.pattern.permute.xlu0 0
        %1066 = vperm.xlu0 %1065, %v1000
        %v1067 = vpop.permute.xlu0 %1066
        %1070 = vset.pattern.permute.xlu0 0
        %1071 = vperm.xlu0 %1070, %v1001
        %v1072 = vpop.permute.xlu0 %1071
        %1075 = vset.pattern.permute.xlu0 0
        %1076 = vperm.xlu0 %1075, %v1002
        %v1077 = vpop.permute.xlu0 %1076
        %1080 = vset.pattern.permute.xlu0 0
        %1081 = vperm.xlu0 %1080, %v1003
        %v1082 = vpop.permute.xlu0 %1081
        %1085 = vset.pattern.permute.xlu0 0
        %1086 = vperm.xlu0 %1085, %v1004
        %v1087 = vpop.permute.xlu0 %1086
        %1090 = vset.pattern.permute.xlu0 0
        %1091 = vperm.xlu0 %1090, %v1005
        %v1092 = vpop.permute.xlu0 %1091
        %1095 = vset.pattern.permute.xlu0 0
        %1096 = vperm.xlu0 %1095, %v1006
        %v1097 = vpop.permute.xlu0 %1096
        %1100 = vset.pattern.permute.xlu0 0
        %1101 = vperm.xlu0 %1100, %v1007
        %v1102 = vpop.permute.xlu0 %1101
        %1105 = vset.pattern.permute.xlu0 0
        %1106 = vperm.xlu0 %1105, %v1008
        %v1107 = vpop.permute.xlu0 %1106
        %1110 = vset.pattern.permute.xlu0 0
        %1111 = vperm.xlu0 %1110, %v1009
        %v1112 = vpop.permute.xlu0 %1111
        %1115 = vset.pattern.permute.xlu0 0
        %1116 = vperm.xlu0 %1115, %v1010
        %v1117 = vpop.permute.xlu0 %1116
        %1120 = vset.pattern.permute.xlu0 0
        %1121 = vperm.xlu0 %1120, %v1011
        %v1122 = vpop.permute.xlu0 %1121
        %1125 = vset.pattern.permute.xlu0 0
        %1126 = vperm.xlu0 %1125, %v1012
        %v1127 = vpop.permute.xlu0 %1126
        %1130 = vset.pattern.permute.xlu0 0
        %1131 = vperm.xlu0 %1130, %v1013
        %v1132 = vpop.permute.xlu0 %1131
        %1135 = vset.pattern.permute.xlu0 0
        %1136 = vperm.xlu0 %1135, %v1014
        %v1137 = vpop.permute.xlu0 %1136
        %1140 = vset.pattern.permute.xlu0 0
        %1141 = vperm.xlu0 %1140, %v1015
        %v1142 = vpop.permute.xlu0 %1141
        %v1144 = vsub.f32 %v904, %v1067
        %v1145 = vsub.f32 %v905, %v1067
        %v1146 = vsub.f32 %v906, %v1072
        %v1147 = vsub.f32 %v907, %v1072
        %v1148 = vsub.f32 %v908, %v1077
        %v1149 = vsub.f32 %v909, %v1077
        %v1150 = vsub.f32 %v910, %v1082
        %v1151 = vsub.f32 %v911, %v1082
        %v1152 = vsub.f32 %v912, %v1087
        %v1153 = vsub.f32 %v913, %v1087
        %v1154 = vsub.f32 %v914, %v1092
        %v1155 = vsub.f32 %v915, %v1092
        %v1156 = vsub.f32 %v916, %v1097
        %v1157 = vsub.f32 %v917, %v1097
        %v1158 = vsub.f32 %v918, %v1102
        %v1159 = vsub.f32 %v919, %v1102
        %v1160 = vsub.f32 %v920, %v1107
        %v1161 = vsub.f32 %v921, %v1107
        %v1162 = vsub.f32 %v922, %v1112
        %v1163 = vsub.f32 %v923, %v1112
        %v1164 = vsub.f32 %v924, %v1117
        %v1165 = vsub.f32 %v925, %v1117
        %v1166 = vsub.f32 %v926, %v1122
        %v1167 = vsub.f32 %v927, %v1122
        %v1168 = vsub.f32 %v928, %v1127
        %v1169 = vsub.f32 %v929, %v1127
        %v1170 = vsub.f32 %v930, %v1132
        %v1171 = vsub.f32 %v931, %v1132
        %v1172 = vsub.f32 %v932, %v1137
        %v1173 = vsub.f32 %v933, %v1137
        %v1174 = vsub.f32 %v934, %v1142
        %v1175 = vsub.f32 %v935, %v1142
        %v1176 = vmul.f32 %v1144, 1.442695
        %v1177 = vpow.pop %v1176
        %v1178 = vmul.f32 %v1145, 1.442695
        %v1179 = vpow.pop %v1178
        %v1180 = vmul.f32 %v1146, 1.442695
        %v1181 = vpow.pop %v1180
        %v1182 = vmul.f32 %v1147, 1.442695
        %v1183 = vpow.pop %v1182
        %v1184 = vmul.f32 %v1148, 1.442695
        %v1185 = vpow.pop %v1184
        %v1186 = vmul.f32 %v1149, 1.442695
        %v1187 = vpow.pop %v1186
        %v1188 = vmul.f32 %v1150, 1.442695
        %v1189 = vpow.pop %v1188
        %v1190 = vmul.f32 %v1151, 1.442695
        %v1191 = vpow.pop %v1190
        %v1192 = vmul.f32 %v1152, 1.442695
        %v1193 = vpow.pop %v1192
        %v1194 = vmul.f32 %v1153, 1.442695
        %v1195 = vpow.pop %v1194
        %v1196 = vmul.f32 %v1154, 1.442695
        %v1197 = vpow.pop %v1196
        %v1198 = vmul.f32 %v1155, 1.442695
        %v1199 = vpow.pop %v1198
        %v1200 = vmul.f32 %v1156, 1.442695
        %v1201 = vpow.pop %v1200
        %v1202 = vmul.f32 %v1157, 1.442695
        %v1203 = vpow.pop %v1202
        %v1204 = vmul.f32 %v1158, 1.442695
        %v1205 = vpow.pop %v1204
        %v1206 = vmul.f32 %v1159, 1.442695
        %v1207 = vpow.pop %v1206
        %v1208 = vmul.f32 %v1160, 1.442695
        %v1209 = vpow.pop %v1208
        %v1210 = vmul.f32 %v1161, 1.442695
        %v1211 = vpow.pop %v1210
        %v1212 = vmul.f32 %v1162, 1.442695
        %v1213 = vpow.pop %v1212
        %v1214 = vmul.f32 %v1163, 1.442695
        %v1215 = vpow.pop %v1214
        %v1216 = vmul.f32 %v1164, 1.442695
        %v1217 = vpow.pop %v1216
        %v1218 = vmul.f32 %v1165, 1.442695
        %v1219 = vpow.pop %v1218
        %v1220 = vmul.f32 %v1166, 1.442695
        %v1221 = vpow.pop %v1220
        %v1222 = vmul.f32 %v1167, 1.442695
        %v1223 = vpow.pop %v1222
        %v1224 = vmul.f32 %v1168, 1.442695
        %v1225 = vpow.pop %v1224
        %v1226 = vmul.f32 %v1169, 1.442695
        %v1227 = vpow.pop %v1226
        %v1228 = vmul.f32 %v1170, 1.442695
        %v1229 = vpow.pop %v1228
        %v1230 = vmul.f32 %v1171, 1.442695
        %v1231 = vpow.pop %v1230
        %v1232 = vmul.f32 %v1172, 1.442695
        %v1233 = vpow.pop %v1232
        %v1234 = vmul.f32 %v1173, 1.442695
        %v1235 = vpow.pop %v1234
        %v1236 = vmul.f32 %v1174, 1.442695
        %v1237 = vpow.pop %v1236
        %v1238 = vmul.f32 %v1175, 1.442695
        %v1239 = vpow.pop %v1238
        %v1240 = vld [vmem:[#allocation3] sm:$0xff]
        %v1241 = vld [vmem:[#allocation3 + $0x8] sm:$0xff]
        %v1242 = vld [vmem:[#allocation3 + $0x10] sm:$0xff]
        %v1243 = vld [vmem:[#allocation3 + $0x18] sm:$0xff]
        %v1244 = vld [vmem:[#allocation3 + $0x20] sm:$0xff]
        %v1245 = vld [vmem:[#allocation3 + $0x28] sm:$0xff]
        %v1246 = vld [vmem:[#allocation3 + $0x30] sm:$0xff]
        %v1247 = vld [vmem:[#allocation3 + $0x38] sm:$0xff]
        %v1248 = vld [vmem:[#allocation3 + $0x40] sm:$0xff]
        %v1249 = vld [vmem:[#allocation3 + $0x48] sm:$0xff]
        %v1250 = vld [vmem:[#allocation3 + $0x50] sm:$0xff]
        %v1251 = vld [vmem:[#allocation3 + $0x58] sm:$0xff]
        %v1252 = vld [vmem:[#allocation3 + $0x60] sm:$0xff]
        %v1253 = vld [vmem:[#allocation3 + $0x68] sm:$0xff]
        %v1254 = vld [vmem:[#allocation3 + $0x70] sm:$0xff]
        %v1255 = vld [vmem:[#allocation3 + $0x78] sm:$0xff]
        %v1256 = vmul.f32 %v1033, %v1240
        %v1257 = vmul.f32 %v1035, %v1241
        %v1258 = vmul.f32 %v1037, %v1242
        %v1259 = vmul.f32 %v1039, %v1243
        %v1260 = vmul.f32 %v1041, %v1244
        %v1261 = vmul.f32 %v1043, %v1245
        %v1262 = vmul.f32 %v1045, %v1246
        %v1263 = vmul.f32 %v1047, %v1247
        %v1264 = vmul.f32 %v1049, %v1248
        %v1265 = vmul.f32 %v1051, %v1249
        %v1266 = vmul.f32 %v1053, %v1250
        %v1267 = vmul.f32 %v1055, %v1251
        %v1268 = vmul.f32 %v1057, %v1252
        %v1269 = vmul.f32 %v1059, %v1253
        %v1270 = vmul.f32 %v1061, %v1254
        %v1271 = vmul.f32 %v1063, %v1255
        %v1272 = vadd.f32 %v1177, %v1179
        %1273 = vadd.xlane.f32.xlu0 %v1272
        %v1274 = vpop.xlane.xlu0 %1273
        %v1275 = vadd.f32 %v1181, %v1183
        %1276 = vadd.xlane.f32.xlu0 %v1275
        %v1277 = vpop.xlane.xlu0 %1276
        %v1278 = vadd.f32 %v1185, %v1187
        %1279 = vadd.xlane.f32.xlu0 %v1278
        %v1280 = vpop.xlane.xlu0 %1279
        %v1281 = vadd.f32 %v1189, %v1191
        %1282 = vadd.xlane.f32.xlu0 %v1281
        %v1283 = vpop.xlane.xlu0 %1282
        %v1284 = vadd.f32 %v1193, %v1195
        %1285 = vadd.xlane.f32.xlu0 %v1284
        %v1286 = vpop.xlane.xlu0 %1285
        %v1287 = vadd.f32 %v1197, %v1199
        %1288 = vadd.xlane.f32.xlu0 %v1287
        %v1289 = vpop.xlane.xlu0 %1288
        %v1290 = vadd.f32 %v1201, %v1203
        %1291 = vadd.xlane.f32.xlu0 %v1290
        %v1292 = vpop.xlane.xlu0 %1291
        %v1293 = vadd.f32 %v1205, %v1207
        %1294 = vadd.xlane.f32.xlu0 %v1293
        %v1295 = vpop.xlane.xlu0 %1294
        %v1296 = vadd.f32 %v1209, %v1211
        %1297 = vadd.xlane.f32.xlu0 %v1296
        %v1298 = vpop.xlane.xlu0 %1297
        %v1299 = vadd.f32 %v1213, %v1215
        %1300 = vadd.xlane.f32.xlu0 %v1299
        %v1301 = vpop.xlane.xlu0 %1300
        %v1302 = vadd.f32 %v1217, %v1219
        %1303 = vadd.xlane.f32.xlu0 %v1302
        %v1304 = vpop.xlane.xlu0 %1303
        %v1305 = vadd.f32 %v1221, %v1223
        %1306 = vadd.xlane.f32.xlu0 %v1305
        %v1307 = vpop.xlane.xlu0 %1306
        %v1308 = vadd.f32 %v1225, %v1227
        %1309 = vadd.xlane.f32.xlu0 %v1308
        %v1310 = vpop.xlane.xlu0 %1309
        %v1311 = vadd.f32 %v1229, %v1231
        %1312 = vadd.xlane.f32.xlu0 %v1311
        %v1313 = vpop.xlane.xlu0 %1312
        %v1314 = vadd.f32 %v1233, %v1235
        %1315 = vadd.xlane.f32.xlu0 %v1314
        %v1316 = vpop.xlane.xlu0 %1315
        %v1317 = vadd.f32 %v1237, %v1239
        %1318 = vadd.xlane.f32.xlu0 %v1317
        %v1319 = vpop.xlane.xlu0 %1318
        %v1320 = vadd.f32 %v1256, %v1274
        %v1321 = vadd.f32 %v1257, %v1277
        %v1322 = vadd.f32 %v1258, %v1280
        %v1323 = vadd.f32 %v1259, %v1283
        %v1324 = vadd.f32 %v1260, %v1286
        %v1325 = vadd.f32 %v1261, %v1289
        %v1326 = vadd.f32 %v1262, %v1292
        %v1327 = vadd.f32 %v1263, %v1295
        %v1328 = vadd.f32 %v1264, %v1298
        %v1329 = vadd.f32 %v1265, %v1301
        %v1330 = vadd.f32 %v1266, %v1304
        %v1331 = vadd.f32 %v1267, %v1307
        %v1332 = vadd.f32 %v1268, %v1310
        %v1333 = vadd.f32 %v1269, %v1313
        %v1334 = vadd.f32 %v1270, %v1316
        %v1335 = vadd.f32 %v1271, %v1319
        %vm1336 = vcmask 7168
        %1337 = vst.msk [vmem:[#allocation3] sm:$0xff] %vm1336, %v1320
        %1338 = vst.msk [vmem:[#allocation3 + $0x8] sm:$0xff] %vm1336, %v1321
        %1339 = vst.msk [vmem:[#allocation3 + $0x10] sm:$0xff] %vm1336, %v1322
        %1340 = vst.msk [vmem:[#allocation3 + $0x18] sm:$0xff] %vm1336, %v1323
        %1341 = vst.msk [vmem:[#allocation3 + $0x20] sm:$0xff] %vm1336, %v1324
        %1342 = vst.msk [vmem:[#allocation3 + $0x28] sm:$0xff] %vm1336, %v1325
        %1343 = vst.msk [vmem:[#allocation3 + $0x30] sm:$0xff] %vm1336, %v1326
        %1344 = vst.msk [vmem:[#allocation3 + $0x38] sm:$0xff] %vm1336, %v1327
        %1345 = vst.msk [vmem:[#allocation3 + $0x40] sm:$0xff] %vm1336, %v1328
        %1346 = vst.msk [vmem:[#allocation3 + $0x48] sm:$0xff] %vm1336, %v1329
        %1347 = vst.msk [vmem:[#allocation3 + $0x50] sm:$0xff] %vm1336, %v1330
        %1348 = vst.msk [vmem:[#allocation3 + $0x58] sm:$0xff] %vm1336, %v1331
        %1349 = vst.msk [vmem:[#allocation3 + $0x60] sm:$0xff] %vm1336, %v1332
        %1350 = vst.msk [vmem:[#allocation3 + $0x68] sm:$0xff] %vm1336, %v1333
        %1351 = vst.msk [vmem:[#allocation3 + $0x70] sm:$0xff] %vm1336, %v1334
        %1352 = vst.msk [vmem:[#allocation3 + $0x78] sm:$0xff] %vm1336, %v1335
        %v1353 = vld [vmem:[#allocation4] sm:$0xff]
        %v1354 = vld [vmem:[#allocation4 + $0x8] sm:$0xff]
        %v1355 = vld [vmem:[#allocation4 + $0x10] sm:$0xff]
        %v1356 = vld [vmem:[#allocation4 + $0x18] sm:$0xff]
        %v1357 = vld [vmem:[#allocation4 + $0x20] sm:$0xff]
        %v1358 = vld [vmem:[#allocation4 + $0x28] sm:$0xff]
        %v1359 = vld [vmem:[#allocation4 + $0x30] sm:$0xff]
        %v1360 = vld [vmem:[#allocation4 + $0x38] sm:$0xff]
        %v1361 = vld [vmem:[#allocation4 + $0x40] sm:$0xff]
        %v1362 = vld [vmem:[#allocation4 + $0x48] sm:$0xff]
        %v1363 = vld [vmem:[#allocation4 + $0x50] sm:$0xff]
        %v1364 = vld [vmem:[#allocation4 + $0x58] sm:$0xff]
        %v1365 = vld [vmem:[#allocation4 + $0x60] sm:$0xff]
        %v1366 = vld [vmem:[#allocation4 + $0x68] sm:$0xff]
        %v1367 = vld [vmem:[#allocation4 + $0x70] sm:$0xff]
        %v1368 = vld [vmem:[#allocation4 + $0x78] sm:$0xff]
        %1370 = vset.pattern.permute.xlu0 0
        %1371 = vperm.xlu0 %1370, %v1033
        %v1372 = vpop.permute.xlu0 %1371
        %1375 = vset.pattern.permute.xlu0 0
        %1376 = vperm.xlu0 %1375, %v1035
        %v1377 = vpop.permute.xlu0 %1376
        %1380 = vset.pattern.permute.xlu0 0
        %1381 = vperm.xlu0 %1380, %v1037
        %v1382 = vpop.permute.xlu0 %1381
        %1385 = vset.pattern.permute.xlu0 0
        %1386 = vperm.xlu0 %1385, %v1039
        %v1387 = vpop.permute.xlu0 %1386
        %1390 = vset.pattern.permute.xlu0 0
        %1391 = vperm.xlu0 %1390, %v1041
        %v1392 = vpop.permute.xlu0 %1391
        %1395 = vset.pattern.permute.xlu0 0
        %1396 = vperm.xlu0 %1395, %v1043
        %v1397 = vpop.permute.xlu0 %1396
        %1400 = vset.pattern.permute.xlu0 0
        %1401 = vperm.xlu0 %1400, %v1045
        %v1402 = vpop.permute.xlu0 %1401
        %1405 = vset.pattern.permute.xlu0 0
        %1406 = vperm.xlu0 %1405, %v1047
        %v1407 = vpop.permute.xlu0 %1406
        %1410 = vset.pattern.permute.xlu0 0
        %1411 = vperm.xlu0 %1410, %v1049
        %v1412 = vpop.permute.xlu0 %1411
        %1415 = vset.pattern.permute.xlu0 0
        %1416 = vperm.xlu0 %1415, %v1051
        %v1417 = vpop.permute.xlu0 %1416
        %1420 = vset.pattern.permute.xlu0 0
        %1421 = vperm.xlu0 %1420, %v1053
        %v1422 = vpop.permute.xlu0 %1421
        %1425 = vset.pattern.permute.xlu0 0
        %1426 = vperm.xlu0 %1425, %v1055
        %v1427 = vpop.permute.xlu0 %1426
        %1430 = vset.pattern.permute.xlu0 0
        %1431 = vperm.xlu0 %1430, %v1057
        %v1432 = vpop.permute.xlu0 %1431
        %1435 = vset.pattern.permute.xlu0 0
        %1436 = vperm.xlu0 %1435, %v1059
        %v1437 = vpop.permute.xlu0 %1436
        %1440 = vset.pattern.permute.xlu0 0
        %1441 = vperm.xlu0 %1440, %v1061
        %v1442 = vpop.permute.xlu0 %1441
        %1445 = vset.pattern.permute.xlu0 0
        %1446 = vperm.xlu0 %1445, %v1063
        %v1447 = vpop.permute.xlu0 %1446
        %v1449 = vmul.f32 %v1372, %v1353
        %v1450 = vmul.f32 %v1377, %v1354
        %v1451 = vmul.f32 %v1382, %v1355
        %v1452 = vmul.f32 %v1387, %v1356
        %v1453 = vmul.f32 %v1392, %v1357
        %v1454 = vmul.f32 %v1397, %v1358
        %v1455 = vmul.f32 %v1402, %v1359
        %v1456 = vmul.f32 %v1407, %v1360
        %v1457 = vmul.f32 %v1412, %v1361
        %v1458 = vmul.f32 %v1417, %v1362
        %v1459 = vmul.f32 %v1422, %v1363
        %v1460 = vmul.f32 %v1427, %v1364
        %v1461 = vmul.f32 %v1432, %v1365
        %v1462 = vmul.f32 %v1437, %v1366
        %v1463 = vmul.f32 %v1442, %v1367
        %v1464 = vmul.f32 %v1447, %v1368
        %v1465 = vpack.c.bf16 %v1181, %v1177
        %v1466 = vpack.c.bf16 %v1183, %v1179
        %v1467 = vpack.c.bf16 %v1189, %v1185
        %v1468 = vpack.c.bf16 %v1191, %v1187
        %v1469 = vpack.c.bf16 %v1197, %v1193
        %v1470 = vpack.c.bf16 %v1199, %v1195
        %v1471 = vpack.c.bf16 %v1205, %v1201
        %v1472 = vpack.c.bf16 %v1207, %v1203
        %v1473 = vpack.c.bf16 %v1213, %v1209
        %v1474 = vpack.c.bf16 %v1215, %v1211
        %v1475 = vpack.c.bf16 %v1221, %v1217
        %v1476 = vpack.c.bf16 %v1223, %v1219
        %v1477 = vpack.c.bf16 %v1229, %v1225
        %v1478 = vpack.c.bf16 %v1231, %v1227
        %v1479 = vpack.c.bf16 %v1237, %v1233
        %v1480 = vpack.c.bf16 %v1239, %v1235
        %v1481 = vpack.c.bf16 %v383, %v382
        %v1482 = vpack.c.bf16 %v385, %v384
        %v1483 = vpack.c.bf16 %v387, %v386
        %v1484 = vpack.c.bf16 %v389, %v388
        %v1485 = vpack.c.bf16 %v391, %v390
        %v1486 = vpack.c.bf16 %v393, %v392
        %v1487 = vpack.c.bf16 %v395, %v394
        %v1488 = vpack.c.bf16 %v397, %v396
        %v1489 = vpack.c.bf16 %v399, %v398
        %v1490 = vpack.c.bf16 %v401, %v400
        %v1491 = vpack.c.bf16 %v403, %v402
        %v1492 = vpack.c.bf16 %v405, %v404
        %v1493 = vpack.c.bf16 %v407, %v406
        %v1494 = vpack.c.bf16 %v409, %v408
        %v1495 = vpack.c.bf16 %v411, %v410
        %v1496 = vpack.c.bf16 %v413, %v412
        %1497 = vmatpush.bf16.msra.mxu0 %v1488
        %1498 = vmatpush.bf16.msra.mxu0 %v1487
        %1499 = vmatpush.bf16.msra.mxu0 %v1486
        %1500 = vmatpush.bf16.msra.mxu0 %v1485
        %1501 = vmatpush.bf16.msra.mxu0 %v1484
        %1502 = vmatpush.bf16.msra.mxu0 %v1483
        %1503 = vmatpush.bf16.msra.mxu0 %v1482
        %1504 = vmatpush.bf16.msra.mxu0 %v1481
        %1505 = vmatmul.bf16.gmra.mxu0 %v1465
        %v1506 = vpop.f32.mrf.mxu0
        %v1507 = vadd.f32 0.0, %v1506
        %v1508 = vpop.f32.mrf.mxu0
        %v1509 = vadd.f32 0.0, %v1508
        %1510 = vmatmul.bf16.gmra.mxu0 %v1467
        %v1511 = vpop.f32.mrf.mxu0
        %v1512 = vadd.f32 0.0, %v1511
        %v1513 = vpop.f32.mrf.mxu0
        %v1514 = vadd.f32 0.0, %v1513
        %1515 = vmatmul.bf16.gmra.mxu0 %v1469
        %v1516 = vpop.f32.mrf.mxu0
        %v1517 = vadd.f32 0.0, %v1516
        %v1518 = vpop.f32.mrf.mxu0
        %v1519 = vadd.f32 0.0, %v1518
        %1520 = vmatmul.bf16.gmra.mxu0 %v1471
        %v1521 = vpop.f32.mrf.mxu0
        %v1522 = vadd.f32 0.0, %v1521
        %v1523 = vpop.f32.mrf.mxu0
        %v1524 = vadd.f32 0.0, %v1523
        %1525 = vmatmul.bf16.gmra.mxu0 %v1473
        %v1526 = vpop.f32.mrf.mxu0
        %v1527 = vadd.f32 0.0, %v1526
        %v1528 = vpop.f32.mrf.mxu0
        %v1529 = vadd.f32 0.0, %v1528
        %1530 = vmatmul.bf16.gmra.mxu0 %v1475
        %v1531 = vpop.f32.mrf.mxu0
        %v1532 = vadd.f32 0.0, %v1531
        %v1533 = vpop.f32.mrf.mxu0
        %v1534 = vadd.f32 0.0, %v1533
        %1535 = vmatmul.bf16.gmra.mxu0 %v1477
        %v1536 = vpop.f32.mrf.mxu0
        %v1537 = vadd.f32 0.0, %v1536
        %v1538 = vpop.f32.mrf.mxu0
        %v1539 = vadd.f32 0.0, %v1538
        %1540 = vmatmul.bf16.gmra.mxu0 %v1479
        %v1541 = vpop.f32.mrf.mxu0
        %v1542 = vadd.f32 0.0, %v1541
        %v1543 = vpop.f32.mrf.mxu0
        %v1544 = vadd.f32 0.0, %v1543
        %1545 = vdwg.mxu0
        %1546 = vmatpush.bf16.msra.mxu0 %v1496
        %1547 = vmatpush.bf16.msra.mxu0 %v1495
        %1548 = vmatpush.bf16.msra.mxu0 %v1494
        %1549 = vmatpush.bf16.msra.mxu0 %v1493
        %1550 = vmatpush.bf16.msra.mxu0 %v1492
        %1551 = vmatpush.bf16.msra.mxu0 %v1491
        %1552 = vmatpush.bf16.msra.mxu0 %v1490
        %1553 = vmatpush.bf16.msra.mxu0 %v1489
        %1554 = vmatmul.bf16.gmra.mxu0 %v1466
        %v1555 = vpop.f32.mrf.mxu0
        %v1556 = vadd.f32 %v1507, %v1555
        %v1557 = vpop.f32.mrf.mxu0
        %v1558 = vadd.f32 %v1509, %v1557
        %1559 = vmatmul.bf16.gmra.mxu0 %v1468
        %v1560 = vpop.f32.mrf.mxu0
        %v1561 = vadd.f32 %v1512, %v1560
        %v1562 = vpop.f32.mrf.mxu0
        %v1563 = vadd.f32 %v1514, %v1562
        %1564 = vmatmul.bf16.gmra.mxu0 %v1470
        %v1565 = vpop.f32.mrf.mxu0
        %v1566 = vadd.f32 %v1517, %v1565
        %v1567 = vpop.f32.mrf.mxu0
        %v1568 = vadd.f32 %v1519, %v1567
        %1569 = vmatmul.bf16.gmra.mxu0 %v1472
        %v1570 = vpop.f32.mrf.mxu0
        %v1571 = vadd.f32 %v1522, %v1570
        %v1572 = vpop.f32.mrf.mxu0
        %v1573 = vadd.f32 %v1524, %v1572
        %1574 = vmatmul.bf16.gmra.mxu0 %v1474
        %v1575 = vpop.f32.mrf.mxu0
        %v1576 = vadd.f32 %v1527, %v1575
        %v1577 = vpop.f32.mrf.mxu0
        %v1578 = vadd.f32 %v1529, %v1577
        %1579 = vmatmul.bf16.gmra.mxu0 %v1476
        %v1580 = vpop.f32.mrf.mxu0
        %v1581 = vadd.f32 %v1532, %v1580
        %v1582 = vpop.f32.mrf.mxu0
        %v1583 = vadd.f32 %v1534, %v1582
        %1584 = vmatmul.bf16.gmra.mxu0 %v1478
        %v1585 = vpop.f32.mrf.mxu0
        %v1586 = vadd.f32 %v1537, %v1585
        %v1587 = vpop.f32.mrf.mxu0
        %v1588 = vadd.f32 %v1539, %v1587
        %1589 = vmatmul.bf16.gmra.mxu0 %v1480
        %v1590 = vpop.f32.mrf.mxu0
        %v1591 = vadd.f32 %v1542, %v1590
        %v1592 = vpop.f32.mrf.mxu0
        %v1593 = vadd.f32 %v1544, %v1592
        %1594 = vdwg.mxu0
        %v1595 = vadd.f32 %v1449, %v1556
        %v1596 = vadd.f32 %v1450, %v1558
        %v1597 = vadd.f32 %v1451, %v1561
        %v1598 = vadd.f32 %v1452, %v1563
        %v1599 = vadd.f32 %v1453, %v1566
        %v1600 = vadd.f32 %v1454, %v1568
        %v1601 = vadd.f32 %v1455, %v1571
        %v1602 = vadd.f32 %v1456, %v1573
        %v1603 = vadd.f32 %v1457, %v1576
        %v1604 = vadd.f32 %v1458, %v1578
        %v1605 = vadd.f32 %v1459, %v1581
        %v1606 = vadd.f32 %v1460, %v1583
        %v1607 = vadd.f32 %v1461, %v1586
        %v1608 = vadd.f32 %v1462, %v1588
        %v1609 = vadd.f32 %v1463, %v1591
        %v1610 = vadd.f32 %v1464, %v1593
        %vm1611 = vcmask 64512
        %1612 = vst.msk [vmem:[#allocation4] sm:$0xff] %vm1611, %v1595
        %1613 = vst.msk [vmem:[#allocation4 + $0x8] sm:$0xff] %vm1611, %v1596
        %1614 = vst.msk [vmem:[#allocation4 + $0x10] sm:$0xff] %vm1611, %v1597
        %1615 = vst.msk [vmem:[#allocation4 + $0x18] sm:$0xff] %vm1611, %v1598
        %1616 = vst.msk [vmem:[#allocation4 + $0x20] sm:$0xff] %vm1611, %v1599
        %1617 = vst.msk [vmem:[#allocation4 + $0x28] sm:$0xff] %vm1611, %v1600
        %1618 = vst.msk [vmem:[#allocation4 + $0x30] sm:$0xff] %vm1611, %v1601
        %1619 = vst.msk [vmem:[#allocation4 + $0x38] sm:$0xff] %vm1611, %v1602
        %1620 = vst.msk [vmem:[#allocation4 + $0x40] sm:$0xff] %vm1611, %v1603
        %1621 = vst.msk [vmem:[#allocation4 + $0x48] sm:$0xff] %vm1611, %v1604
        %1622 = vst.msk [vmem:[#allocation4 + $0x50] sm:$0xff] %vm1611, %v1605
        %1623 = vst.msk [vmem:[#allocation4 + $0x58] sm:$0xff] %vm1611, %v1606
        %1624 = vst.msk [vmem:[#allocation4 + $0x60] sm:$0xff] %vm1611, %v1607
        %1625 = vst.msk [vmem:[#allocation4 + $0x68] sm:$0xff] %vm1611, %v1608
        %1626 = vst.msk [vmem:[#allocation4 + $0x70] sm:$0xff] %vm1611, %v1609
        %1627 = vst.msk [vmem:[#allocation4 + $0x78] sm:$0xff] %vm1611, %v1610
        %1628 = vst.msk [vmem:[#allocation2] sm:$0xff] %vm1336, %v1000
        %1629 = vst.msk [vmem:[#allocation2 + $0x8] sm:$0xff] %vm1336, %v1001
        %1630 = vst.msk [vmem:[#allocation2 + $0x10] sm:$0xff] %vm1336, %v1002
        %1631 = vst.msk [vmem:[#allocation2 + $0x18] sm:$0xff] %vm1336, %v1003
        %1632 = vst.msk [vmem:[#allocation2 + $0x20] sm:$0xff] %vm1336, %v1004
        %1633 = vst.msk [vmem:[#allocation2 + $0x28] sm:$0xff] %vm1336, %v1005
        %1634 = vst.msk [vmem:[#allocation2 + $0x30] sm:$0xff] %vm1336, %v1006
        %1635 = vst.msk [vmem:[#allocation2 + $0x38] sm:$0xff] %vm1336, %v1007
        %1636 = vst.msk [vmem:[#allocation2 + $0x40] sm:$0xff] %vm1336, %v1008
        %1637 = vst.msk [vmem:[#allocation2 + $0x48] sm:$0xff] %vm1336, %v1009
        %1638 = vst.msk [vmem:[#allocation2 + $0x50] sm:$0xff] %vm1336, %v1010
        %1639 = vst.msk [vmem:[#allocation2 + $0x58] sm:$0xff] %vm1336, %v1011
        %1640 = vst.msk [vmem:[#allocation2 + $0x60] sm:$0xff] %vm1336, %v1012
        %1641 = vst.msk [vmem:[#allocation2 + $0x68] sm:$0xff] %vm1336, %v1013
        %1642 = vst.msk [vmem:[#allocation2 + $0x70] sm:$0xff] %vm1336, %v1014
        %1643 = vst.msk [vmem:[#allocation2 + $0x78] sm:$0xff] %vm1336, %v1015
        // Predicated region
        $region49: #{gat_forward.3} parent=43 // pred_check
          %p1644 = pneg %p328
        $region50: #{gat_forward.3} parent=43 // pred_check_branch
          %1646 = sbr.rel (%p1644) target = $region52
        $region51: #{gat_forward.3} parent=43 // pred_region
          %v1647 = vld [vmem:[#allocation3] sm:$0xff]
          %v1648 = vld [vmem:[#allocation3 + $0x8] sm:$0xff]
          %v1649 = vld [vmem:[#allocation3 + $0x10] sm:$0xff]
          %v1650 = vld [vmem:[#allocation3 + $0x18] sm:$0xff]
          %v1651 = vld [vmem:[#allocation3 + $0x20] sm:$0xff]
          %v1652 = vld [vmem:[#allocation3 + $0x28] sm:$0xff]
          %v1653 = vld [vmem:[#allocation3 + $0x30] sm:$0xff]
          %v1654 = vld [vmem:[#allocation3 + $0x38] sm:$0xff]
          %v1655 = vld [vmem:[#allocation3 + $0x40] sm:$0xff]
          %v1656 = vld [vmem:[#allocation3 + $0x48] sm:$0xff]
          %v1657 = vld [vmem:[#allocation3 + $0x50] sm:$0xff]
          %v1658 = vld [vmem:[#allocation3 + $0x58] sm:$0xff]
          %v1659 = vld [vmem:[#allocation3 + $0x60] sm:$0xff]
          %v1660 = vld [vmem:[#allocation3 + $0x68] sm:$0xff]
          %v1661 = vld [vmem:[#allocation3 + $0x70] sm:$0xff]
          %v1662 = vld [vmem:[#allocation3 + $0x78] sm:$0xff]
          %v1663 = vrcp.pop %v1647
          %v1664 = vrcp.pop %v1648
          %v1665 = vrcp.pop %v1649
          %v1666 = vrcp.pop %v1650
          %v1667 = vrcp.pop %v1651
          %v1668 = vrcp.pop %v1652
          %v1669 = vrcp.pop %v1653
          %v1670 = vrcp.pop %v1654
          %v1671 = vrcp.pop %v1655
          %v1672 = vrcp.pop %v1656
          %v1673 = vrcp.pop %v1657
          %v1674 = vrcp.pop %v1658
          %v1675 = vrcp.pop %v1659
          %v1676 = vrcp.pop %v1660
          %v1677 = vrcp.pop %v1661
          %v1678 = vrcp.pop %v1662
          %v1679 = vld [vmem:[#allocation4] sm:$0xff]
          %v1680 = vld [vmem:[#allocation4 + $0x8] sm:$0xff]
          %v1681 = vld [vmem:[#allocation4 + $0x10] sm:$0xff]
          %v1682 = vld [vmem:[#allocation4 + $0x18] sm:$0xff]
          %v1683 = vld [vmem:[#allocation4 + $0x20] sm:$0xff]
          %v1684 = vld [vmem:[#allocation4 + $0x28] sm:$0xff]
          %v1685 = vld [vmem:[#allocation4 + $0x30] sm:$0xff]
          %v1686 = vld [vmem:[#allocation4 + $0x38] sm:$0xff]
          %v1687 = vld [vmem:[#allocation4 + $0x40] sm:$0xff]
          %v1688 = vld [vmem:[#allocation4 + $0x48] sm:$0xff]
          %v1689 = vld [vmem:[#allocation4 + $0x50] sm:$0xff]
          %v1690 = vld [vmem:[#allocation4 + $0x58] sm:$0xff]
          %v1691 = vld [vmem:[#allocation4 + $0x60] sm:$0xff]
          %v1692 = vld [vmem:[#allocation4 + $0x68] sm:$0xff]
          %v1693 = vld [vmem:[#allocation4 + $0x70] sm:$0xff]
          %v1694 = vld [vmem:[#allocation4 + $0x78] sm:$0xff]
          %1696 = vset.pattern.permute.xlu0 0
          %1697 = vperm.xlu0 %1696, %v1663
          %v1698 = vpop.permute.xlu0 %1697
          %1701 = vset.pattern.permute.xlu0 0
          %1702 = vperm.xlu0 %1701, %v1664
          %v1703 = vpop.permute.xlu0 %1702
          %1706 = vset.pattern.permute.xlu0 0
          %1707 = vperm.xlu0 %1706, %v1665
          %v1708 = vpop.permute.xlu0 %1707
          %1711 = vset.pattern.permute.xlu0 0
          %1712 = vperm.xlu0 %1711, %v1666
          %v1713 = vpop.permute.xlu0 %1712
          %1716 = vset.pattern.permute.xlu0 0
          %1717 = vperm.xlu0 %1716, %v1667
          %v1718 = vpop.permute.xlu0 %1717
          %1721 = vset.pattern.permute.xlu0 0
          %1722 = vperm.xlu0 %1721, %v1668
          %v1723 = vpop.permute.xlu0 %1722
          %1726 = vset.pattern.permute.xlu0 0
          %1727 = vperm.xlu0 %1726, %v1669
          %v1728 = vpop.permute.xlu0 %1727
          %1731 = vset.pattern.permute.xlu0 0
          %1732 = vperm.xlu0 %1731, %v1670
          %v1733 = vpop.permute.xlu0 %1732
          %1736 = vset.pattern.permute.xlu0 0
          %1737 = vperm.xlu0 %1736, %v1671
          %v1738 = vpop.permute.xlu0 %1737
          %1741 = vset.pattern.permute.xlu0 0
          %1742 = vperm.xlu0 %1741, %v1672
          %v1743 = vpop.permute.xlu0 %1742
          %1746 = vset.pattern.permute.xlu0 0
          %1747 = vperm.xlu0 %1746, %v1673
          %v1748 = vpop.permute.xlu0 %1747
          %1751 = vset.pattern.permute.xlu0 0
          %1752 = vperm.xlu0 %1751, %v1674
          %v1753 = vpop.permute.xlu0 %1752
          %1756 = vset.pattern.permute.xlu0 0
          %1757 = vperm.xlu0 %1756, %v1675
          %v1758 = vpop.permute.xlu0 %1757
          %1761 = vset.pattern.permute.xlu0 0
          %1762 = vperm.xlu0 %1761, %v1676
          %v1763 = vpop.permute.xlu0 %1762
          %1766 = vset.pattern.permute.xlu0 0
          %1767 = vperm.xlu0 %1766, %v1677
          %v1768 = vpop.permute.xlu0 %1767
          %1771 = vset.pattern.permute.xlu0 0
          %1772 = vperm.xlu0 %1771, %v1678
          %v1773 = vpop.permute.xlu0 %1772
          %v1775 = vmul.f32 %v1679, %v1698
          %v1776 = vmul.f32 %v1680, %v1703
          %v1777 = vmul.f32 %v1681, %v1708
          %v1778 = vmul.f32 %v1682, %v1713
          %v1779 = vmul.f32 %v1683, %v1718
          %v1780 = vmul.f32 %v1684, %v1723
          %v1781 = vmul.f32 %v1685, %v1728
          %v1782 = vmul.f32 %v1686, %v1733
          %v1783 = vmul.f32 %v1687, %v1738
          %v1784 = vmul.f32 %v1688, %v1743
          %v1785 = vmul.f32 %v1689, %v1748
          %v1786 = vmul.f32 %v1690, %v1753
          %v1787 = vmul.f32 %v1691, %v1758
          %v1788 = vmul.f32 %v1692, %v1763
          %v1789 = vmul.f32 %v1693, %v1768
          %v1790 = vmul.f32 %v1694, %v1773
          %v1791 = vld [vmem:[%s3] sm:$0x1]
          %v1793 = vperm.slane %v1791, 0
          %v1795 = vadd.f32 %v1775, %v1793
          %v1796 = vadd.f32 %v1776, %v1793
          %v1797 = vadd.f32 %v1777, %v1793
          %v1798 = vadd.f32 %v1778, %v1793
          %v1799 = vadd.f32 %v1779, %v1793
          %v1800 = vadd.f32 %v1780, %v1793
          %v1801 = vadd.f32 %v1781, %v1793
          %v1802 = vadd.f32 %v1782, %v1793
          %v1803 = vadd.f32 %v1783, %v1793
          %v1804 = vadd.f32 %v1784, %v1793
          %v1805 = vadd.f32 %v1785, %v1793
          %v1806 = vadd.f32 %v1786, %v1793
          %v1807 = vadd.f32 %v1787, %v1793
          %v1808 = vadd.f32 %v1788, %v1793
          %v1809 = vadd.f32 %v1789, %v1793
          %v1810 = vadd.f32 %v1790, %v1793
          %vm1811 = vcmp.gt.f32.partialorder %v1795, 0.0
          %vm1812 = vcmp.gt.f32.partialorder %v1796, 0.0
          %vm1813 = vcmp.gt.f32.partialorder %v1797, 0.0
          %vm1814 = vcmp.gt.f32.partialorder %v1798, 0.0
          %vm1815 = vcmp.gt.f32.partialorder %v1799, 0.0
          %vm1816 = vcmp.gt.f32.partialorder %v1800, 0.0
          %vm1817 = vcmp.gt.f32.partialorder %v1801, 0.0
          %vm1818 = vcmp.gt.f32.partialorder %v1802, 0.0
          %vm1819 = vcmp.gt.f32.partialorder %v1803, 0.0
          %vm1820 = vcmp.gt.f32.partialorder %v1804, 0.0
          %vm1821 = vcmp.gt.f32.partialorder %v1805, 0.0
          %vm1822 = vcmp.gt.f32.partialorder %v1806, 0.0
          %vm1823 = vcmp.gt.f32.partialorder %v1807, 0.0
          %vm1824 = vcmp.gt.f32.partialorder %v1808, 0.0
          %vm1825 = vcmp.gt.f32.partialorder %v1809, 0.0
          %vm1826 = vcmp.gt.f32.partialorder %v1810, 0.0
          %v1827 = vmin.f32 %v1795, 0.0
          %v1828 = vmin.f32 %v1796, 0.0
          %v1829 = vmin.f32 %v1797, 0.0
          %v1830 = vmin.f32 %v1798, 0.0
          %v1831 = vmin.f32 %v1799, 0.0
          %v1832 = vmin.f32 %v1800, 0.0
          %v1833 = vmin.f32 %v1801, 0.0
          %v1834 = vmin.f32 %v1802, 0.0
          %v1835 = vmin.f32 %v1803, 0.0
          %v1836 = vmin.f32 %v1804, 0.0
          %v1837 = vmin.f32 %v1805, 0.0
          %v1838 = vmin.f32 %v1806, 0.0
          %v1839 = vmin.f32 %v1807, 0.0
          %v1840 = vmin.f32 %v1808, 0.0
          %v1841 = vmin.f32 %v1809, 0.0
          %v1842 = vmin.f32 %v1810, 0.0
          %v1843 = vmul.f32 %v1827, 1.442695
          %v1844 = vpow.pop %v1843
          %v1845 = vmul.f32 %v1828, 1.442695
          %v1846 = vpow.pop %v1845
          %v1847 = vmul.f32 %v1829, 1.442695
          %v1848 = vpow.pop %v1847
          %v1849 = vmul.f32 %v1830, 1.442695
          %v1850 = vpow.pop %v1849
          %v1851 = vmul.f32 %v1831, 1.442695
          %v1852 = vpow.pop %v1851
          %v1853 = vmul.f32 %v1832, 1.442695
          %v1854 = vpow.pop %v1853
          %v1855 = vmul.f32 %v1833, 1.442695
          %v1856 = vpow.pop %v1855
          %v1857 = vmul.f32 %v1834, 1.442695
          %v1858 = vpow.pop %v1857
          %v1859 = vmul.f32 %v1835, 1.442695
          %v1860 = vpow.pop %v1859
          %v1861 = vmul.f32 %v1836, 1.442695
          %v1862 = vpow.pop %v1861
          %v1863 = vmul.f32 %v1837, 1.442695
          %v1864 = vpow.pop %v1863
          %v1865 = vmul.f32 %v1838, 1.442695
          %v1866 = vpow.pop %v1865
          %v1867 = vmul.f32 %v1839, 1.442695
          %v1868 = vpow.pop %v1867
          %v1869 = vmul.f32 %v1840, 1.442695
          %v1870 = vpow.pop %v1869
          %v1871 = vmul.f32 %v1841, 1.442695
          %v1872 = vpow.pop %v1871
          %v1873 = vmul.f32 %v1842, 1.442695
          %v1874 = vpow.pop %v1873
          %v1875 = vsub.f32 %v1844, 1.0
          %v1876 = vsub.f32 %v1846, 1.0
          %v1877 = vsub.f32 %v1848, 1.0
          %v1878 = vsub.f32 %v1850, 1.0
          %v1879 = vsub.f32 %v1852, 1.0
          %v1880 = vsub.f32 %v1854, 1.0
          %v1881 = vsub.f32 %v1856, 1.0
          %v1882 = vsub.f32 %v1858, 1.0
          %v1883 = vsub.f32 %v1860, 1.0
          %v1884 = vsub.f32 %v1862, 1.0
          %v1885 = vsub.f32 %v1864, 1.0
          %v1886 = vsub.f32 %v1866, 1.0
          %v1887 = vsub.f32 %v1868, 1.0
          %v1888 = vsub.f32 %v1870, 1.0
          %v1889 = vsub.f32 %v1872, 1.0
          %v1890 = vsub.f32 %v1874, 1.0
          %v1891 = vsel %vm1811, %v1795, %v1875
          %v1892 = vsel %vm1812, %v1796, %v1876
          %v1893 = vsel %vm1813, %v1797, %v1877
          %v1894 = vsel %vm1814, %v1798, %v1878
          %v1895 = vsel %vm1815, %v1799, %v1879
          %v1896 = vsel %vm1816, %v1800, %v1880
          %v1897 = vsel %vm1817, %v1801, %v1881
          %v1898 = vsel %vm1818, %v1802, %v1882
          %v1899 = vsel %vm1819, %v1803, %v1883
          %v1900 = vsel %vm1820, %v1804, %v1884
          %v1901 = vsel %vm1821, %v1805, %v1885
          %v1902 = vsel %vm1822, %v1806, %v1886
          %v1903 = vsel %vm1823, %v1807, %v1887
          %v1904 = vsel %vm1824, %v1808, %v1888
          %v1905 = vsel %vm1825, %v1809, %v1889
          %v1906 = vsel %vm1826, %v1810, %v1890
          %v1907 = vld [vmem:[%s4] sm:$0xff]
          %v1908 = vld [vmem:[#allocation5] sm:$0x1]
          %v1910 = vperm.slane %v1908, 0
          %v1913 = vsel %vm1611, %v1891, 0
          %v1916 = vsel %vm1611, %v1892, 0
          %v1919 = vsel %vm1611, %v1893, 0
          %v1922 = vsel %vm1611, %v1894, 0
          %v1925 = vsel %vm1611, %v1895, 0
          %v1928 = vsel %vm1611, %v1896, 0
          %v1931 = vsel %vm1611, %v1897, 0
          %v1934 = vsel %vm1611, %v1898, 0
          %v1937 = vsel %vm1611, %v1899, 0
          %v1940 = vsel %vm1611, %v1900, 0
          %v1943 = vsel %vm1611, %v1901, 0
          %v1946 = vsel %vm1611, %v1902, 0
          %v1949 = vsel %vm1611, %v1903, 0
          %v1952 = vsel %vm1611, %v1904, 0
          %v1955 = vsel %vm1611, %v1905, 0
          %v1958 = vsel %vm1611, %v1906, 0
          %1960 = vmatpush.msra.mxu0 0.0
          %1961 = vmatpush.msra.mxu0 0.0
          %1962 = vmatpush.msra.mxu0 0.0
          %1963 = vmatpush.msra.mxu0 0.0
          %1964 = vmatpush.msra.mxu0 0.0
          %1965 = vmatpush.msra.mxu0 0.0
          %1966 = vmatpush.msra.mxu0 0.0
          %1967 = vmatpush.msra.mxu0 0.0
          %1968 = vmatpush.msra.mxu0 0.0
          %1969 = vmatpush.msra.mxu0 0.0
          %1970 = vmatpush.msra.mxu0 0.0
          %1971 = vmatpush.msra.mxu0 0.0
          %1972 = vmatpush.msra.mxu0 0.0
          %1973 = vmatpush.msra.mxu0 0.0
          %1974 = vmatpush.msra.mxu0 0.0
          %1975 = vmatpush.msra.mxu0 %v1907
          %1976 = vmatmul.f32.gmra.mxu0 %v1913
          %v1977 = vpop.f32.mrf.mxu0
          %v1978 = vadd.f32 %v1910, %v1977
          %1979 = vmatmul.f32.gmra.mxu0 %v1916
          %v1980 = vpop.f32.mrf.mxu0
          %v1981 = vadd.f32 %v1910, %v1980
          %1982 = vmatmul.f32.gmra.mxu0 %v1919
          %v1983 = vpop.f32.mrf.mxu0
          %v1984 = vadd.f32 %v1910, %v1983
          %1985 = vmatmul.f32.gmra.mxu0 %v1922
          %v1986 = vpop.f32.mrf.mxu0
          %v1987 = vadd.f32 %v1910, %v1986
          %1988 = vmatmul.f32.gmra.mxu0 %v1925
          %v1989 = vpop.f32.mrf.mxu0
          %v1990 = vadd.f32 %v1910, %v1989
          %1991 = vmatmul.f32.gmra.mxu0 %v1928
          %v1992 = vpop.f32.mrf.mxu0
          %v1993 = vadd.f32 %v1910, %v1992
          %1994 = vmatmul.f32.gmra.mxu0 %v1931
          %v1995 = vpop.f32.mrf.mxu0
          %v1996 = vadd.f32 %v1910, %v1995
          %1997 = vmatmul.f32.gmra.mxu0 %v1934
          %v1998 = vpop.f32.mrf.mxu0
          %v1999 = vadd.f32 %v1910, %v1998
          %2000 = vmatmul.f32.gmra.mxu0 %v1937
          %v2001 = vpop.f32.mrf.mxu0
          %v2002 = vadd.f32 %v1910, %v2001
          %2003 = vmatmul.f32.gmra.mxu0 %v1940
          %v2004 = vpop.f32.mrf.mxu0
          %v2005 = vadd.f32 %v1910, %v2004
          %2006 = vmatmul.f32.gmra.mxu0 %v1943
          %v2007 = vpop.f32.mrf.mxu0
          %v2008 = vadd.f32 %v1910, %v2007
          %2009 = vmatmul.f32.gmra.mxu0 %v1946
          %v2010 = vpop.f32.mrf.mxu0
          %v2011 = vadd.f32 %v1910, %v2010
          %2012 = vmatmul.f32.gmra.mxu0 %v1949
          %v2013 = vpop.f32.mrf.mxu0
          %v2014 = vadd.f32 %v1910, %v2013
          %2015 = vmatmul.f32.gmra.mxu0 %v1952
          %v2016 = vpop.f32.mrf.mxu0
          %v2017 = vadd.f32 %v1910, %v2016
          %2018 = vmatmul.f32.gmra.mxu0 %v1955
          %v2019 = vpop.f32.mrf.mxu0
          %v2020 = vadd.f32 %v1910, %v2019
          %2021 = vmatmul.f32.gmra.mxu0 %v1958
          %v2022 = vpop.f32.mrf.mxu0
          %v2023 = vadd.f32 %v1910, %v2022
          %2024 = vdwg.mxu0
          %v2025 = vsub.f32 0.0, %v1978
          %v2026 = vsub.f32 0.0, %v1981
          %v2027 = vsub.f32 0.0, %v1984
          %v2028 = vsub.f32 0.0, %v1987
          %v2029 = vsub.f32 0.0, %v1990
          %v2030 = vsub.f32 0.0, %v1993
          %v2031 = vsub.f32 0.0, %v1996
          %v2032 = vsub.f32 0.0, %v1999
          %v2033 = vsub.f32 0.0, %v2002
          %v2034 = vsub.f32 0.0, %v2005
          %v2035 = vsub.f32 0.0, %v2008
          %v2036 = vsub.f32 0.0, %v2011
          %v2037 = vsub.f32 0.0, %v2014
          %v2038 = vsub.f32 0.0, %v2017
          %v2039 = vsub.f32 0.0, %v2020
          %v2040 = vsub.f32 0.0, %v2023
          %v2041 = vmul.f32 %v2025, 1.442695
          %v2042 = vpow.pop %v2041
          %v2043 = vmul.f32 %v2026, 1.442695
          %v2044 = vpow.pop %v2043
          %v2045 = vmul.f32 %v2027, 1.442695
          %v2046 = vpow.pop %v2045
          %v2047 = vmul.f32 %v2028, 1.442695
          %v2048 = vpow.pop %v2047
          %v2049 = vmul.f32 %v2029, 1.442695
          %v2050 = vpow.pop %v2049
          %v2051 = vmul.f32 %v2030, 1.442695
          %v2052 = vpow.pop %v2051
          %v2053 = vmul.f32 %v2031, 1.442695
          %v2054 = vpow.pop %v2053
          %v2055 = vmul.f32 %v2032, 1.442695
          %v2056 = vpow.pop %v2055
          %v2057 = vmul.f32 %v2033, 1.442695
          %v2058 = vpow.pop %v2057
          %v2059 = vmul.f32 %v2034, 1.442695
          %v2060 = vpow.pop %v2059
          %v2061 = vmul.f32 %v2035, 1.442695
          %v2062 = vpow.pop %v2061
          %v2063 = vmul.f32 %v2036, 1.442695
          %v2064 = vpow.pop %v2063
          %v2065 = vmul.f32 %v2037, 1.442695
          %v2066 = vpow.pop %v2065
          %v2067 = vmul.f32 %v2038, 1.442695
          %v2068 = vpow.pop %v2067
          %v2069 = vmul.f32 %v2039, 1.442695
          %v2070 = vpow.pop %v2069
          %v2071 = vmul.f32 %v2040, 1.442695
          %v2072 = vpow.pop %v2071
          %v2073 = vadd.f32 %v2042, 1.0
          %v2074 = vadd.f32 %v2044, 1.0
          %v2075 = vadd.f32 %v2046, 1.0
          %v2076 = vadd.f32 %v2048, 1.0
          %v2077 = vadd.f32 %v2050, 1.0
          %v2078 = vadd.f32 %v2052, 1.0
          %v2079 = vadd.f32 %v2054, 1.0
          %v2080 = vadd.f32 %v2056, 1.0
          %v2081 = vadd.f32 %v2058, 1.0
          %v2082 = vadd.f32 %v2060, 1.0
          %v2083 = vadd.f32 %v2062, 1.0
          %v2084 = vadd.f32 %v2064, 1.0
          %v2085 = vadd.f32 %v2066, 1.0
          %v2086 = vadd.f32 %v2068, 1.0
          %v2087 = vadd.f32 %v2070, 1.0
          %v2088 = vadd.f32 %v2072, 1.0
          %v2089 = vrcp.pop %v2073
          %v2090 = vmul.f32 %v2073, %v2089
          %v2091 = vsub.f32 1.0, %v2090
          %v2092 = vmul.f32 %v2089, %v2091
          %v2093 = vadd.f32 %v2089, %v2092
          %vm2094 = vweird.f32 %v2073
          %vm2095 = vweird.f32 %v2089
          %vm2096 = vmor %vm2094, %vm2095
          %v2097 = vsel %vm2096, %v2089, %v2093
          %v2098 = vand.u32 2147483647, %v2073
          %vm2099 = vcmp.eq.f32.partialorder %v2098, 8.507059e+37
          %v2100 = vand.u32 %v2073, 2147483648
          %v2101 = vor.u32 1.1754944e-38, %v2100
          %v2102 = vsel %vm2099, %v2101, %v2097
          %v2103 = vmul.f32 1.0, %v2102
          %v2104 = vrcp.pop %v2074
          %v2105 = vmul.f32 %v2074, %v2104
          %v2106 = vsub.f32 1.0, %v2105
          %v2107 = vmul.f32 %v2104, %v2106
          %v2108 = vadd.f32 %v2104, %v2107
          %vm2109 = vweird.f32 %v2074
          %vm2110 = vweird.f32 %v2104
          %vm2111 = vmor %vm2109, %vm2110
          %v2112 = vsel %vm2111, %v2104, %v2108
          %v2113 = vand.u32 2147483647, %v2074
          %vm2114 = vcmp.eq.f32.partialorder %v2113, 8.507059e+37
          %v2115 = vand.u32 %v2074, 2147483648
          %v2116 = vor.u32 1.1754944e-38, %v2115
          %v2117 = vsel %vm2114, %v2116, %v2112
          %v2118 = vmul.f32 1.0, %v2117
          %v2119 = vrcp.pop %v2075
          %v2120 = vmul.f32 %v2075, %v2119
          %v2121 = vsub.f32 1.0, %v2120
          %v2122 = vmul.f32 %v2119, %v2121
          %v2123 = vadd.f32 %v2119, %v2122
          %vm2124 = vweird.f32 %v2075
          %vm2125 = vweird.f32 %v2119
          %vm2126 = vmor %vm2124, %vm2125
          %v2127 = vsel %vm2126, %v2119, %v2123
          %v2128 = vand.u32 2147483647, %v2075
          %vm2129 = vcmp.eq.f32.partialorder %v2128, 8.507059e+37
          %v2130 = vand.u32 %v2075, 2147483648
          %v2131 = vor.u32 1.1754944e-38, %v2130
          %v2132 = vsel %vm2129, %v2131, %v2127
          %v2133 = vmul.f32 1.0, %v2132
          %v2134 = vrcp.pop %v2076
          %v2135 = vmul.f32 %v2076, %v2134
          %v2136 = vsub.f32 1.0, %v2135
          %v2137 = vmul.f32 %v2134, %v2136
          %v2138 = vadd.f32 %v2134, %v2137
          %vm2139 = vweird.f32 %v2076
          %vm2140 = vweird.f32 %v2134
          %vm2141 = vmor %vm2139, %vm2140
          %v2142 = vsel %vm2141, %v2134, %v2138
          %v2143 = vand.u32 2147483647, %v2076
          %vm2144 = vcmp.eq.f32.partialorder %v2143, 8.507059e+37
          %v2145 = vand.u32 %v2076, 2147483648
          %v2146 = vor.u32 1.1754944e-38, %v2145
          %v2147 = vsel %vm2144, %v2146, %v2142
          %v2148 = vmul.f32 1.0, %v2147
          %v2149 = vrcp.pop %v2077
          %v2150 = vmul.f32 %v2077, %v2149
          %v2151 = vsub.f32 1.0, %v2150
          %v2152 = vmul.f32 %v2149, %v2151
          %v2153 = vadd.f32 %v2149, %v2152
          %vm2154 = vweird.f32 %v2077
          %vm2155 = vweird.f32 %v2149
          %vm2156 = vmor %vm2154, %vm2155
          %v2157 = vsel %vm2156, %v2149, %v2153
          %v2158 = vand.u32 2147483647, %v2077
          %vm2159 = vcmp.eq.f32.partialorder %v2158, 8.507059e+37
          %v2160 = vand.u32 %v2077, 2147483648
          %v2161 = vor.u32 1.1754944e-38, %v2160
          %v2162 = vsel %vm2159, %v2161, %v2157
          %v2163 = vmul.f32 1.0, %v2162
          %v2164 = vrcp.pop %v2078
          %v2165 = vmul.f32 %v2078, %v2164
          %v2166 = vsub.f32 1.0, %v2165
          %v2167 = vmul.f32 %v2164, %v2166
          %v2168 = vadd.f32 %v2164, %v2167
          %vm2169 = vweird.f32 %v2078
          %vm2170 = vweird.f32 %v2164
          %vm2171 = vmor %vm2169, %vm2170
          %v2172 = vsel %vm2171, %v2164, %v2168
          %v2173 = vand.u32 2147483647, %v2078
          %vm2174 = vcmp.eq.f32.partialorder %v2173, 8.507059e+37
          %v2175 = vand.u32 %v2078, 2147483648
          %v2176 = vor.u32 1.1754944e-38, %v2175
          %v2177 = vsel %vm2174, %v2176, %v2172
          %v2178 = vmul.f32 1.0, %v2177
          %v2179 = vrcp.pop %v2079
          %v2180 = vmul.f32 %v2079, %v2179
          %v2181 = vsub.f32 1.0, %v2180
          %v2182 = vmul.f32 %v2179, %v2181
          %v2183 = vadd.f32 %v2179, %v2182
          %vm2184 = vweird.f32 %v2079
          %vm2185 = vweird.f32 %v2179
          %vm2186 = vmor %vm2184, %vm2185
          %v2187 = vsel %vm2186, %v2179, %v2183
          %v2188 = vand.u32 2147483647, %v2079
          %vm2189 = vcmp.eq.f32.partialorder %v2188, 8.507059e+37
          %v2190 = vand.u32 %v2079, 2147483648
          %v2191 = vor.u32 1.1754944e-38, %v2190
          %v2192 = vsel %vm2189, %v2191, %v2187
          %v2193 = vmul.f32 1.0, %v2192
          %v2194 = vrcp.pop %v2080
          %v2195 = vmul.f32 %v2080, %v2194
          %v2196 = vsub.f32 1.0, %v2195
          %v2197 = vmul.f32 %v2194, %v2196
          %v2198 = vadd.f32 %v2194, %v2197
          %vm2199 = vweird.f32 %v2080
          %vm2200 = vweird.f32 %v2194
          %vm2201 = vmor %vm2199, %vm2200
          %v2202 = vsel %vm2201, %v2194, %v2198
          %v2203 = vand.u32 2147483647, %v2080
          %vm2204 = vcmp.eq.f32.partialorder %v2203, 8.507059e+37
          %v2205 = vand.u32 %v2080, 2147483648
          %v2206 = vor.u32 1.1754944e-38, %v2205
          %v2207 = vsel %vm2204, %v2206, %v2202
          %v2208 = vmul.f32 1.0, %v2207
          %v2209 = vrcp.pop %v2081
          %v2210 = vmul.f32 %v2081, %v2209
          %v2211 = vsub.f32 1.0, %v2210
          %v2212 = vmul.f32 %v2209, %v2211
          %v2213 = vadd.f32 %v2209, %v2212
          %vm2214 = vweird.f32 %v2081
          %vm2215 = vweird.f32 %v2209
          %vm2216 = vmor %vm2214, %vm2215
          %v2217 = vsel %vm2216, %v2209, %v2213
          %v2218 = vand.u32 2147483647, %v2081
          %vm2219 = vcmp.eq.f32.partialorder %v2218, 8.507059e+37
          %v2220 = vand.u32 %v2081, 2147483648
          %v2221 = vor.u32 1.1754944e-38, %v2220
          %v2222 = vsel %vm2219, %v2221, %v2217
          %v2223 = vmul.f32 1.0, %v2222
          %v2224 = vrcp.pop %v2082
          %v2225 = vmul.f32 %v2082, %v2224
          %v2226 = vsub.f32 1.0, %v2225
          %v2227 = vmul.f32 %v2224, %v2226
          %v2228 = vadd.f32 %v2224, %v2227
          %vm2229 = vweird.f32 %v2082
          %vm2230 = vweird.f32 %v2224
          %vm2231 = vmor %vm2229, %vm2230
          %v2232 = vsel %vm2231, %v2224, %v2228
          %v2233 = vand.u32 2147483647, %v2082
          %vm2234 = vcmp.eq.f32.partialorder %v2233, 8.507059e+37
          %v2235 = vand.u32 %v2082, 2147483648
          %v2236 = vor.u32 1.1754944e-38, %v2235
          %v2237 = vsel %vm2234, %v2236, %v2232
          %v2238 = vmul.f32 1.0, %v2237
          %v2239 = vrcp.pop %v2083
          %v2240 = vmul.f32 %v2083, %v2239
          %v2241 = vsub.f32 1.0, %v2240
          %v2242 = vmul.f32 %v2239, %v2241
          %v2243 = vadd.f32 %v2239, %v2242
          %vm2244 = vweird.f32 %v2083
          %vm2245 = vweird.f32 %v2239
          %vm2246 = vmor %vm2244, %vm2245
          %v2247 = vsel %vm2246, %v2239, %v2243
          %v2248 = vand.u32 2147483647, %v2083
          %vm2249 = vcmp.eq.f32.partialorder %v2248, 8.507059e+37
          %v2250 = vand.u32 %v2083, 2147483648
          %v2251 = vor.u32 1.1754944e-38, %v2250
          %v2252 = vsel %vm2249, %v2251, %v2247
          %v2253 = vmul.f32 1.0, %v2252
          %v2254 = vrcp.pop %v2084
          %v2255 = vmul.f32 %v2084, %v2254
          %v2256 = vsub.f32 1.0, %v2255
          %v2257 = vmul.f32 %v2254, %v2256
          %v2258 = vadd.f32 %v2254, %v2257
          %vm2259 = vweird.f32 %v2084
          %vm2260 = vweird.f32 %v2254
          %vm2261 = vmor %vm2259, %vm2260
          %v2262 = vsel %vm2261, %v2254, %v2258
          %v2263 = vand.u32 2147483647, %v2084
          %vm2264 = vcmp.eq.f32.partialorder %v2263, 8.507059e+37
          %v2265 = vand.u32 %v2084, 2147483648
          %v2266 = vor.u32 1.1754944e-38, %v2265
          %v2267 = vsel %vm2264, %v2266, %v2262
          %v2268 = vmul.f32 1.0, %v2267
          %v2269 = vrcp.pop %v2085
          %v2270 = vmul.f32 %v2085, %v2269
          %v2271 = vsub.f32 1.0, %v2270
          %v2272 = vmul.f32 %v2269, %v2271
          %v2273 = vadd.f32 %v2269, %v2272
          %vm2274 = vweird.f32 %v2085
          %vm2275 = vweird.f32 %v2269
          %vm2276 = vmor %vm2274, %vm2275
          %v2277 = vsel %vm2276, %v2269, %v2273
          %v2278 = vand.u32 2147483647, %v2085
          %vm2279 = vcmp.eq.f32.partialorder %v2278, 8.507059e+37
          %v2280 = vand.u32 %v2085, 2147483648
          %v2281 = vor.u32 1.1754944e-38, %v2280
          %v2282 = vsel %vm2279, %v2281, %v2277
          %v2283 = vmul.f32 1.0, %v2282
          %v2284 = vrcp.pop %v2086
          %v2285 = vmul.f32 %v2086, %v2284
          %v2286 = vsub.f32 1.0, %v2285
          %v2287 = vmul.f32 %v2284, %v2286
          %v2288 = vadd.f32 %v2284, %v2287
          %vm2289 = vweird.f32 %v2086
          %vm2290 = vweird.f32 %v2284
          %vm2291 = vmor %vm2289, %vm2290
          %v2292 = vsel %vm2291, %v2284, %v2288
          %v2293 = vand.u32 2147483647, %v2086
          %vm2294 = vcmp.eq.f32.partialorder %v2293, 8.507059e+37
          %v2295 = vand.u32 %v2086, 2147483648
          %v2296 = vor.u32 1.1754944e-38, %v2295
          %v2297 = vsel %vm2294, %v2296, %v2292
          %v2298 = vmul.f32 1.0, %v2297
          %v2299 = vrcp.pop %v2087
          %v2300 = vmul.f32 %v2087, %v2299
          %v2301 = vsub.f32 1.0, %v2300
          %v2302 = vmul.f32 %v2299, %v2301
          %v2303 = vadd.f32 %v2299, %v2302
          %vm2304 = vweird.f32 %v2087
          %vm2305 = vweird.f32 %v2299
          %vm2306 = vmor %vm2304, %vm2305
          %v2307 = vsel %vm2306, %v2299, %v2303
          %v2308 = vand.u32 2147483647, %v2087
          %vm2309 = vcmp.eq.f32.partialorder %v2308, 8.507059e+37
          %v2310 = vand.u32 %v2087, 2147483648
          %v2311 = vor.u32 1.1754944e-38, %v2310
          %v2312 = vsel %vm2309, %v2311, %v2307
          %v2313 = vmul.f32 1.0, %v2312
          %v2314 = vrcp.pop %v2088
          %v2315 = vmul.f32 %v2088, %v2314
          %v2316 = vsub.f32 1.0, %v2315
          %v2317 = vmul.f32 %v2314, %v2316
          %v2318 = vadd.f32 %v2314, %v2317
          %vm2319 = vweird.f32 %v2088
          %vm2320 = vweird.f32 %v2314
          %vm2321 = vmor %vm2319, %vm2320
          %v2322 = vsel %vm2321, %v2314, %v2318
          %v2323 = vand.u32 2147483647, %v2088
          %vm2324 = vcmp.eq.f32.partialorder %v2323, 8.507059e+37
          %v2325 = vand.u32 %v2088, 2147483648
          %v2326 = vor.u32 1.1754944e-38, %v2325
          %v2327 = vsel %vm2324, %v2326, %v2322
          %v2328 = vmul.f32 1.0, %v2327
          %2329 = vxpose.xlu0.b32.start [1/16] %v2103, 128
          %2330 = vxpose.xlu0.b32.cont [2/16] %v2118, 128
          %2331 = vxpose.xlu0.b32.cont [3/16] %v2133, 128
          %2332 = vxpose.xlu0.b32.cont [4/16] %v2148, 128
          %2333 = vxpose.xlu0.b32.cont [5/16] %v2163, 128
          %2334 = vxpose.xlu0.b32.cont [6/16] %v2178, 128
          %2335 = vxpose.xlu0.b32.cont [7/16] %v2193, 128
          %2336 = vxpose.xlu0.b32.cont [8/16] %v2208, 128
          %2337 = vxpose.xlu0.b32.cont [9/16] %v2223, 128
          %2338 = vxpose.xlu0.b32.cont [10/16] %v2238, 128
          %2339 = vxpose.xlu0.b32.cont [11/16] %v2253, 128
          %2340 = vxpose.xlu0.b32.cont [12/16] %v2268, 128
          %2341 = vxpose.xlu0.b32.cont [13/16] %v2283, 128
          %2342 = vxpose.xlu0.b32.cont [14/16] %v2298, 128
          %2343 = vxpose.xlu0.b32.cont [15/16] %v2313, 128
          %2344 = vxpose.xlu0.b32.end [16/16] %v2328, 128
          %v2345 = vpop.trf.xlu0
          %v2346 = vpop.trf.xlu0
          %v2347 = vpop.trf.xlu0
          %v2348 = vpop.trf.xlu0
          %v2349 = vpop.trf.xlu0
          %v2350 = vpop.trf.xlu0
          %v2351 = vpop.trf.xlu0
          %v2352 = vpop.trf.xlu0
          %v2353 = vpop.trf.xlu0
          %v2354 = vpop.trf.xlu0
          %v2355 = vpop.trf.xlu0
          %v2356 = vpop.trf.xlu0
          %v2357 = vpop.trf.xlu0
          %v2358 = vpop.trf.xlu0
          %v2359 = vpop.trf.xlu0
          %v2360 = vpop.trf.xlu0
          %2361 = vst [vmem:[%s303] sm:$0x1] %v2345
        $region52: #{gat_forward.3} parent=43 // pred_fallthru
          _
        %s2362 = sand.u32 %s185, 1
        %s2363 = scalar_lea.sflag [#allocation7], %s2362
        %s2364 = sand.u32 %s185, 1
        %s2365 = scalar_lea.vmem [#allocation6], %s2364
        // Predicated region
        $region53: #{gat_forward.3} parent=43 // pred_check
          %p2366 = pneg %p195
        $region54: #{gat_forward.3} parent=43 // pred_check_branch
          %2368 = sbr.rel (%p2366) target = $region56
        $region55: #{gat_forward.3} parent=43 // pred_region
          %2370 = vsyncadd %s2363, 0
          %s2371 = scalar_lea.hbm %s6, %s26
          %s2373 = sshll.u32 %s2365, 4
          %s2374 = int_to_ptr.vmem [resolvable:$true] %s2373
          %s2375 = sshll.u32 %s2371, 4
          %s2376 = int_to_ptr.hbm [resolvable:$true] %s2375
          %2378 = dma.vmem_to_hbm [thread:$0]  %s2374, 16, %s2376, %s2363
        $region56: #{gat_forward.3} parent=43 // pred_fallthru
          _
      $region44: #{gat_forward.3} parent=5 // pred_fallthru
        _
      %p2379 = scmp.le.s32.totalorder 2, %s17
      // Predicated region
      $region57: #{gat_forward.3} parent=5 // pred_check
        %p2380 = pneg %p2379
      $region58: #{gat_forward.3} parent=5 // pred_check_branch
        %2382 = sbr.rel (%p2380) target = $region60
      $region59: #{gat_forward.3} parent=5 // pred_region
        %s2383 = ssub.s32 %s17, 2
        // Predicated region
        $region61: #{gat_forward.3} parent=59 // pred_check
          %p2384 = pneg %p201
        $region62: #{gat_forward.3} parent=59 // pred_check_branch
          %2386 = sbr.rel (%p2384) target = $region64
        $region63: #{gat_forward.3} parent=59 // pred_region
          %s2387 = sand.u32 %s186, 1
          %s2388 = scalar_lea.sflag [#allocation7], %s2387
          %s2389 = sand.u32 %s186, 1
          %s2390 = scalar_lea.vmem [#allocation6], %s2389
          %2392 = dma.done %s2388, 16
        $region64: #{gat_forward.3} parent=59 // pred_fallthru
          _
      $region60: #{gat_forward.3} parent=5 // pred_fallthru
        _
    $region6: #{gat_forward.3} parent=1 // loop_footer
      %s21 = sadd.s32 1, %s17
    $region7: #{gat_forward.3} parent=1 // loop_footer_branch
      %16 = sbr.rel target = $region3
    $region8: #{gat_forward.3} parent=1 // loop_exit
      _
    %2393 = vsyncpa [#allocation7], 1
    %s2394 = scalar_lea.sflag [#allocation7], 1
    %2395 = vsyncpa %s2394, 1

// kernel: gat_forward.2
$region0: #{gat_forward.2}
  #allocation0 [shape = 'u32[]', space=smem, size = 0x4, offset = 0x4, fixed_abs, tag = 'smem constant byte address 0x4 - core index']
  #allocation1 [shape = 'u32[72,128]{1,0:T(1,128)}', space=vmem, size = 0x9000, scoped, tag = 'internal scratch']
  #allocation2 [shape = 'f32[128,1]{1,0:T(8,128)}', space=vmem, size = 0x10000, scoped, tag = 'scratch operand']
  #allocation3 [shape = 'f32[128,1]{1,0:T(8,128)}', space=vmem, size = 0x10000, scoped, tag = 'scratch operand']
  #allocation4 [shape = 'f32[128,32]{1,0:T(8,128)}', space=vmem, size = 0x10000, scoped, tag = 'scratch operand']
  #allocation5 [shape = 'f32[128,1]{1,0:T(8,128)}', space=vmem, size = 0x10000, scoped, tag = 'scratch operand']
  %s0 = inlined_call_operand.vmem [shape: f32[256,16], index: 0, kind: input, shape index: {}, may-alias: {0,1}]
  %s1 = inlined_call_operand.vmem [shape: f32[256,16], index: 1, kind: input, shape index: {}, may-alias: {0,1}]
  %s2 = inlined_call_operand.vmem [shape: s8[256,256], index: 2, kind: input, shape index: {}]
  %s3 = inlined_call_operand.vmem [shape: f32[16,34], index: 3, kind: input, shape index: {}]
  %s4 = inlined_call_operand.vmem [shape: f32[1,32], index: 4, kind: input, shape index: {}]
  %s5 = inlined_call_operand.vmem [shape: f32[32,10], index: 5, kind: input, shape index: {}]
  %s6 = inlined_call_operand.vmem [shape: f32[256,10], index: 6, kind: output, shape index: {}]
  %s7 = sld [smem:[#allocation0]]
  $region65: #{gat_forward.2} parent=0
    _
  %s9 = ssub.s32 1, %s7
  %s10 = scalar_select 0, %s9, %s7
  loop: start=0, step=1, limit=4
  $region2: #{gat_forward.2} parent=0 // loop_pre_header
    _
  $region3: #{gat_forward.2} parent=0 // loop_header
    %s12 = sphi 0, %s16
    %p13 = scmp.ge.s32.totalorder %s12, 4
    %s19 = sphi 0, %s31
    %s20 = sphi 0, %s27
    %s21 = sphi 0, %s19
    %s22 = sphi 0, %s20
    %s23 = sphi 0, %s21
    %s24 = sphi 0, %s22
    %s34 = sphi 0, %s36
    %s37 = sphi 0, %s34
    %s38 = sphi 0, %s37
    %s54 = sphi 0, %s38
    %s60 = sphi 0, %s62
    %s63 = sphi 0, %s60
    %s64 = sphi 0, %s63
    %s80 = sphi 0, %s64
    %s88 = sphi 0, %s90
    %s91 = sphi 0, %s88
    %s92 = sphi 0, %s91
    %s108 = sphi 0, %s92
    %s112 = sphi 0, %s112
    %s114 = sphi 0, %s112
    %s115 = sphi 0, %s114
    %s129 = sphi 0, %s115
    %s133 = sphi 0, %s133
    %s135 = sphi 0, %s133
    %s136 = sphi 0, %s135
    %s150 = sphi 0, %s136
    %s154 = sphi 0, %s154
    %s156 = sphi 0, %s154
    %s157 = sphi 0, %s156
    %s171 = sphi 0, %s157
    %s177 = sphi 0, %s179
    %s180 = sphi 0, %s177
    %s181 = sphi 0, %s180
    %s197 = sphi 0, %s181
  $region4: #{gat_forward.2} parent=0 // loop_header_branch
    %15 = sbr.rel (%p13) target = $region8
  $region5: #{gat_forward.2} parent=0 // loop_body
    %s17 = ssub.s32 %s12, 1
    %s18 = ssub.s32 %s12, 2
    %s25 = sadd.s32 1, %s20
    %p26 = scmp.ge.s32.totalorder %s25, 1
    %s27 = scalar_select %p26, 0, %s25
    %s28 = sadd.s32 1, %s19
    %s29 = scalar_select %p26, %s28, %s19
    %p30 = scmp.ge.s32.totalorder %s29, 2
    %s31 = scalar_select %p30, 0, %s29
    %s32 = ssub.s32 %s19, %s31
    %p33 = scmp.eq.s32.totalorder %s32, 0
    %s35 = sadd.s32 %s34, 1
    %s36 = scalar_select %p33, %s34, %s35
    %p39 = pneg %p33
    %p40 = scmp.eq.s32.totalorder %s12, 1
    %p41 = por %p39, %p40
    %p42 = scmp.ne.s32.totalorder %s34, %s37
    %p43 = scmp.eq.s32.totalorder %s12, 0
    %p44 = por %p42, %p43
    %p45 = scmp.ne.s32.totalorder %s34, %s37
    %p46 = scmp.eq.s32.totalorder %s17, 1
    %p47 = por %p45, %p46
    %p48 = scmp.ne.s32.totalorder %s37, %s38
    %p49 = scmp.eq.s32.totalorder %s17, 0
    %p50 = por %p48, %p49
    %p51 = scmp.ne.s32.totalorder %s37, %s38
    %p52 = scmp.eq.s32.totalorder %s18, 1
    %p53 = por %p51, %p52
    %p55 = scmp.ne.s32.totalorder %s38, %s54
    %p56 = scmp.eq.s32.totalorder %s18, 0
    %p57 = por %p55, %p56
    %s58 = ssub.s32 %s20, %s27
    %p59 = scmp.eq.s32.totalorder %s58, 0
    %s61 = sadd.s32 %s60, 1
    %s62 = scalar_select %p59, %s60, %s61
    %p65 = pneg %p59
    %p66 = scmp.eq.s32.totalorder %s12, 1
    %p67 = por %p65, %p66
    %p68 = scmp.ne.s32.totalorder %s60, %s63
    %p69 = scmp.eq.s32.totalorder %s12, 0
    %p70 = por %p68, %p69
    %p71 = scmp.ne.s32.totalorder %s60, %s63
    %p72 = scmp.eq.s32.totalorder %s17, 1
    %p73 = por %p71, %p72
    %p74 = scmp.ne.s32.totalorder %s63, %s64
    %p75 = scmp.eq.s32.totalorder %s17, 0
    %p76 = por %p74, %p75
    %p77 = scmp.ne.s32.totalorder %s63, %s64
    %p78 = scmp.eq.s32.totalorder %s18, 1
    %p79 = por %p77, %p78
    %p81 = scmp.ne.s32.totalorder %s64, %s80
    %p82 = scmp.eq.s32.totalorder %s18, 0
    %p83 = por %p81, %p82
    %s84 = ssub.s32 %s19, %s31
    %s85 = ssub.s32 %s20, %s27
    %s86 = sor.u32 %s84, %s85
    %p87 = scmp.eq.s32.totalorder %s86, 0
    %s89 = sadd.s32 %s88, 1
    %s90 = scalar_select %p87, %s88, %s89
    %p93 = pneg %p87
    %p94 = scmp.eq.s32.totalorder %s12, 1
    %p95 = por %p93, %p94
    %p96 = scmp.ne.s32.totalorder %s88, %s91
    %p97 = scmp.eq.s32.totalorder %s12, 0
    %p98 = por %p96, %p97
    %p99 = scmp.ne.s32.totalorder %s88, %s91
    %p100 = scmp.eq.s32.totalorder %s17, 1
    %p101 = por %p99, %p100
    %p102 = scmp.ne.s32.totalorder %s91, %s92
    %p103 = scmp.eq.s32.totalorder %s17, 0
    %p104 = por %p102, %p103
    %p105 = scmp.ne.s32.totalorder %s91, %s92
    %p106 = scmp.eq.s32.totalorder %s18, 1
    %p107 = por %p105, %p106
    %p109 = scmp.ne.s32.totalorder %s92, %s108
    %p110 = scmp.eq.s32.totalorder %s18, 0
    %p111 = por %p109, %p110
    %s113 = sadd.s32 %s112, 1
    %p116 = scmp.eq.s32.totalorder %s12, 1
    %p117 = scmp.ne.s32.totalorder %s112, %s114
    %p118 = scmp.eq.s32.totalorder %s12, 0
    %p119 = por %p117, %p118
    %p120 = scmp.ne.s32.totalorder %s112, %s114
    %p121 = scmp.eq.s32.totalorder %s17, 1
    %p122 = por %p120, %p121
    %p123 = scmp.ne.s32.totalorder %s114, %s115
    %p124 = scmp.eq.s32.totalorder %s17, 0
    %p125 = por %p123, %p124
    %p126 = scmp.ne.s32.totalorder %s114, %s115
    %p127 = scmp.eq.s32.totalorder %s18, 1
    %p128 = por %p126, %p127
    %p130 = scmp.ne.s32.totalorder %s115, %s129
    %p131 = scmp.eq.s32.totalorder %s18, 0
    %p132 = por %p130, %p131
    %s134 = sadd.s32 %s133, 1
    %p137 = scmp.eq.s32.totalorder %s12, 1
    %p138 = scmp.ne.s32.totalorder %s133, %s135
    %p139 = scmp.eq.s32.totalorder %s12, 0
    %p140 = por %p138, %p139
    %p141 = scmp.ne.s32.totalorder %s133, %s135
    %p142 = scmp.eq.s32.totalorder %s17, 1
    %p143 = por %p141, %p142
    %p144 = scmp.ne.s32.totalorder %s135, %s136
    %p145 = scmp.eq.s32.totalorder %s17, 0
    %p146 = por %p144, %p145
    %p147 = scmp.ne.s32.totalorder %s135, %s136
    %p148 = scmp.eq.s32.totalorder %s18, 1
    %p149 = por %p147, %p148
    %p151 = scmp.ne.s32.totalorder %s136, %s150
    %p152 = scmp.eq.s32.totalorder %s18, 0
    %p153 = por %p151, %p152
    %s155 = sadd.s32 %s154, 1
    %p158 = scmp.eq.s32.totalorder %s12, 1
    %p159 = scmp.ne.s32.totalorder %s154, %s156
    %p160 = scmp.eq.s32.totalorder %s12, 0
    %p161 = por %p159, %p160
    %p162 = scmp.ne.s32.totalorder %s154, %s156
    %p163 = scmp.eq.s32.totalorder %s17, 1
    %p164 = por %p162, %p163
    %p165 = scmp.ne.s32.totalorder %s156, %s157
    %p166 = scmp.eq.s32.totalorder %s17, 0
    %p167 = por %p165, %p166
    %p168 = scmp.ne.s32.totalorder %s156, %s157
    %p169 = scmp.eq.s32.totalorder %s18, 1
    %p170 = por %p168, %p169
    %p172 = scmp.ne.s32.totalorder %s157, %s171
    %p173 = scmp.eq.s32.totalorder %s18, 0
    %p174 = por %p172, %p173
    %s175 = ssub.s32 %s19, %s31
    %p176 = scmp.eq.s32.totalorder %s175, 0
    %s178 = sadd.s32 %s177, 1
    %s179 = scalar_select %p176, %s177, %s178
    %p182 = pneg %p176
    %p183 = scmp.eq.s32.totalorder %s12, 1
    %p184 = por %p182, %p183
    %p185 = scmp.ne.s32.totalorder %s177, %s180
    %p186 = scmp.eq.s32.totalorder %s12, 0
    %p187 = por %p185, %p186
    %p188 = scmp.ne.s32.totalorder %s177, %s180
    %p189 = scmp.eq.s32.totalorder %s17, 1
    %p190 = por %p188, %p189
    %p191 = scmp.ne.s32.totalorder %s180, %s181
    %p192 = scmp.eq.s32.totalorder %s17, 0
    %p193 = por %p191, %p192
    %p194 = scmp.ne.s32.totalorder %s180, %s181
    %p195 = scmp.eq.s32.totalorder %s18, 1
    %p196 = por %p194, %p195
    %p198 = scmp.ne.s32.totalorder %s181, %s197
    %p199 = scmp.eq.s32.totalorder %s18, 0
    %p200 = por %p198, %p199
    %p201 = scmp.le.s32.totalorder 1, %s12
    %p202 = scmp.lt.s32.totalorder %s12, 3
    %p203 = pnand %p201, %p202
    %p204 = pneg %p203
    // Predicated region
    $region9: #{gat_forward.2} parent=5 // pred_check
      _
    $region10: #{gat_forward.2} parent=5 // pred_check_branch
      %206 = sbr.rel (%p203) target = $region12
    $region11: #{gat_forward.2} parent=5 // pred_region
      %s207 = ssub.s32 %s12, 1
      // Predicated region
      $region13: #{gat_forward.2} parent=11 // pred_check
        %p208 = pneg %p76
      $region14: #{gat_forward.2} parent=11 // pred_check_branch
        %210 = sbr.rel (%p208) target = $region16
      $region15: #{gat_forward.2} parent=11 // pred_region
        %s211 = smul.u32 32, %s22
        %p212 = scmp.lt.s32.totalorder %s211, 31
        %s213 = scalar_select %p212, %s211, 31
        %s214 = smul.addr %s213, 8
        %s215 = scalar_lea.vmem %s1, %s214
        %s216 = smul.u32 32, %s22
      $region16: #{gat_forward.2} parent=11 // pred_fallthru
        _
      // Predicated region
      $region17: #{gat_forward.2} parent=11 // pred_check
        %p217 = pneg %p125
      $region18: #{gat_forward.2} parent=11 // pred_check_branch
        %219 = sbr.rel (%p217) target = $region20
      $region19: #{gat_forward.2} parent=11 // pred_region
        _
      $region20: #{gat_forward.2} parent=11 // pred_fallthru
        _
      // Predicated region
      $region21: #{gat_forward.2} parent=11 // pred_check
        %p220 = pneg %p146
      $region22: #{gat_forward.2} parent=11 // pred_check_branch
        %222 = sbr.rel (%p220) target = $region24
      $region23: #{gat_forward.2} parent=11 // pred_region
        _
      $region24: #{gat_forward.2} parent=11 // pred_fallthru
        _
      // Predicated region
      $region25: #{gat_forward.2} parent=11 // pred_check
        %p223 = pneg %p167
      $region26: #{gat_forward.2} parent=11 // pred_check_branch
        %225 = sbr.rel (%p223) target = $region28
      $region27: #{gat_forward.2} parent=11 // pred_region
        _
      $region28: #{gat_forward.2} parent=11 // pred_fallthru
        _
    $region12: #{gat_forward.2} parent=5 // pred_fallthru
      _
    %p226 = scmp.lt.s32.totalorder %s12, 2
    // Predicated region
    $region29: #{gat_forward.2} parent=5 // pred_check
      %p227 = pneg %p226
    $region30: #{gat_forward.2} parent=5 // pred_check_branch
      %229 = sbr.rel (%p227) target = $region32
    $region31: #{gat_forward.2} parent=5 // pred_region
      // Predicated region
      $region33: #{gat_forward.2} parent=31 // pred_check
        %p230 = pneg %p44
      $region34: #{gat_forward.2} parent=31 // pred_check_branch
        %232 = sbr.rel (%p230) target = $region36
      $region35: #{gat_forward.2} parent=31 // pred_region
        %s233 = smul.u32 16, %s19
        %p234 = scmp.lt.s32.totalorder %s233, 31
        %s235 = scalar_select %p234, %s233, 31
        %s236 = smul.addr %s235, 8
        %s237 = scalar_lea.vmem %s0, %s236
        %s238 = smul.u32 16, %s19
      $region36: #{gat_forward.2} parent=31 // pred_fallthru
        _
      // Predicated region
      $region37: #{gat_forward.2} parent=31 // pred_check
        %p239 = pneg %p98
      $region38: #{gat_forward.2} parent=31 // pred_check_branch
        %241 = sbr.rel (%p239) target = $region40
      $region39: #{gat_forward.2} parent=31 // pred_region
        %s242 = smul.u32 4, %s19
        %s243 = smul.u32 2, %s20
        %p244 = scmp.lt.s32.totalorder %s242, 7
        %s245 = scalar_select %p244, %s242, 7
        %p246 = scmp.lt.s32.totalorder %s243, 1
        %s247 = scalar_select %p246, %s243, 1
        %s248 = smul.addr %s245, 2
        %s249 = sadd.s32 %s247, %s248
        %s250 = smul.addr %s249, 8
        %s251 = scalar_lea.vmem %s2, %s250
        %s252 = smul.u32 4, %s19
        %s253 = smul.u32 2, %s20
      $region40: #{gat_forward.2} parent=31 // pred_fallthru
        _
    $region32: #{gat_forward.2} parent=5 // pred_fallthru
      _
    %p254 = scmp.le.s32.totalorder 1, %s12
    %p255 = scmp.lt.s32.totalorder %s12, 3
    %p256 = pnand %p254, %p255
    %p257 = pneg %p256
    // Predicated region
    $region41: #{gat_forward.2} parent=5 // pred_check
      _
    $region42: #{gat_forward.2} parent=5 // pred_check_branch
      %259 = sbr.rel (%p256) target = $region44
    $region43: #{gat_forward.2} parent=5 // pred_region
      %s260 = ssub.s32 %s12, 1
      %s261 = smul.u32 16, %s21
      %p262 = scmp.lt.s32.totalorder %s261, 31
      %s263 = scalar_select %p262, %s261, 31
      %s264 = smul.addr %s263, 8
      %s265 = scalar_lea.vmem %s0, %s264
      %p266 = pneg %p50
      %p267 = pneg %p47
      %s268 = smul.u32 32, %s22
      %p269 = scmp.lt.s32.totalorder %s268, 31
      %s270 = scalar_select %p269, %s268, 31
      %s271 = smul.addr %s270, 8
      %s272 = scalar_lea.vmem %s1, %s271
      %p273 = pneg %p76
      %p274 = pneg %p73
      %s275 = smul.u32 4, %s21
      %s276 = smul.u32 2, %s22
      %p277 = scmp.lt.s32.totalorder %s275, 7
      %s278 = scalar_select %p277, %s275, 7
      %p279 = scmp.lt.s32.totalorder %s276, 1
      %s280 = scalar_select %p279, %s276, 1
      %s281 = smul.addr %s278, 2
      %s282 = sadd.s32 %s280, %s281
      %s283 = smul.addr %s282, 8
      %s284 = scalar_lea.vmem %s2, %s283
      %p285 = pneg %p104
      %p286 = pneg %p101
      %p287 = pneg %p125
      %p288 = pneg %p122
      %p289 = pneg %p146
      %p290 = pneg %p143
      %p291 = pneg %p167
      %p292 = pneg %p164
      %p293 = pneg %p193
      %p294 = pneg %p190
      %s295 = smul.u32 16, %s21
      %p296 = scmp.lt.s32.totalorder %s295, 31
      %s297 = scalar_select %p296, %s295, 31
      %s298 = smul.addr %s297, 8
      %s299 = scalar_lea.vmem %s6, %s298
      %s300 = smul.u32 16, %s21
      %p301 = scmp.lt.s32.totalorder %s300, 31
      %s302 = scalar_select %p301, %s300, 31
      %s303 = smul.addr %s302, 8
      %s304 = scalar_lea.vmem %s0, %s303
      %s305 = smul.u32 16, %s21
      %s306 = smul.u32 32, %s22
      %p307 = scmp.lt.s32.totalorder %s306, 31
      %s308 = scalar_select %p307, %s306, 31
      %s309 = smul.addr %s308, 8
      %s310 = scalar_lea.vmem %s1, %s309
      %s311 = smul.u32 32, %s22
      %s312 = smul.u32 4, %s21
      %s313 = smul.u32 2, %s22
      %p314 = scmp.lt.s32.totalorder %s312, 7
      %s315 = scalar_select %p314, %s312, 7
      %p316 = scmp.lt.s32.totalorder %s313, 1
      %s317 = scalar_select %p316, %s313, 1
      %s318 = smul.addr %s315, 2
      %s319 = sadd.s32 %s317, %s318
      %s320 = smul.addr %s319, 8
      %s321 = scalar_lea.vmem %s2, %s320
      %s322 = smul.u32 4, %s21
      %s323 = smul.u32 2, %s22
      %s324 = smul.u32 16, %s21
      %p325 = scmp.lt.s32.totalorder %s324, 31
      %s326 = scalar_select %p325, %s324, 31
      %s327 = smul.addr %s326, 8
      %s328 = scalar_lea.vmem %s6, %s327
      %s329 = smul.u32 16, %s21
      %v330 = vld [vmem:[%s3] sm:$0xff]
      %v331 = vld [vmem:[%s3 + $0x8] sm:$0xff]
      %p332 = scmp.eq.s32.totalorder %s22, 0
      // Predicated region
      $region45: #{gat_forward.2} parent=43 // pred_check
        %p333 = pneg %p332
      $region46: #{gat_forward.2} parent=43 // pred_check_branch
        %335 = sbr.rel (%p333) target = $region48
      $region47: #{gat_forward.2} parent=43 // pred_region
        %v336 = vld [vmem:[%s304] sm:$0xff]
        %v337 = vld [vmem:[%s304 + $0x8] sm:$0xff]
        %v338 = vld [vmem:[%s304 + $0x10] sm:$0xff]
        %v339 = vld [vmem:[%s304 + $0x18] sm:$0xff]
        %v340 = vld [vmem:[%s304 + $0x20] sm:$0xff]
        %v341 = vld [vmem:[%s304 + $0x28] sm:$0xff]
        %v342 = vld [vmem:[%s304 + $0x30] sm:$0xff]
        %v343 = vld [vmem:[%s304 + $0x38] sm:$0xff]
        %v344 = vld [vmem:[%s304 + $0x40] sm:$0xff]
        %v345 = vld [vmem:[%s304 + $0x48] sm:$0xff]
        %v346 = vld [vmem:[%s304 + $0x50] sm:$0xff]
        %v347 = vld [vmem:[%s304 + $0x58] sm:$0xff]
        %v348 = vld [vmem:[%s304 + $0x60] sm:$0xff]
        %v349 = vld [vmem:[%s304 + $0x68] sm:$0xff]
        %v350 = vld [vmem:[%s304 + $0x70] sm:$0xff]
        %v351 = vld [vmem:[%s304 + $0x78] sm:$0xff]
        %354 = vrot.lane.b32.xlu0 %v330, 95
        %v355 = vpop.permute.xlu0 %354
        %356 = vrot.lane.b32.xlu0 %v331, 95
        %v357 = vpop.permute.xlu0 %356
        %vm360 = vcmask 130048
        %v362 = vsel %vm360, %v336, 0
        %v365 = vsel %vm360, %v337, 0
        %v368 = vsel %vm360, %v338, 0
        %v371 = vsel %vm360, %v339, 0
        %v374 = vsel %vm360, %v340, 0
        %v377 = vsel %vm360, %v341, 0
        %v380 = vsel %vm360, %v342, 0
        %v383 = vsel %vm360, %v343, 0
        %v386 = vsel %vm360, %v344, 0
        %v389 = vsel %vm360, %v345, 0
        %v392 = vsel %vm360, %v346, 0
        %v395 = vsel %vm360, %v347, 0
        %v398 = vsel %vm360, %v348, 0
        %v401 = vsel %vm360, %v349, 0
        %v404 = vsel %vm360, %v350, 0
        %v407 = vsel %vm360, %v351, 0
        %409 = vmatpush.msra.mxu0 0.0
        %410 = vmatpush.msra.mxu0 0.0
        %411 = vmatpush.msra.mxu0 0.0
        %412 = vmatpush.msra.mxu0 0.0
        %413 = vmatpush.msra.mxu0 0.0
        %414 = vmatpush.msra.mxu0 0.0
        %415 = vmatpush.msra.mxu0 0.0
        %416 = vmatpush.msra.mxu0 0.0
        %417 = vmatpush.msra.mxu0 0.0
        %418 = vmatpush.msra.mxu0 0.0
        %419 = vmatpush.msra.mxu0 0.0
        %420 = vmatpush.msra.mxu0 0.0
        %421 = vmatpush.msra.mxu0 0.0
        %422 = vmatpush.msra.mxu0 0.0
        %423 = vmatpush.msra.mxu0 %v357
        %424 = vmatpush.msra.mxu0 %v355
        %425 = vmatmul.f32.gmra.mxu0 %v362
        %v426 = vpop.f32.mrf.mxu0
        %v427 = vadd.f32 0.0, %v426
        %428 = vmatmul.f32.gmra.mxu0 %v365
        %v429 = vpop.f32.mrf.mxu0
        %v430 = vadd.f32 0.0, %v429
        %431 = vmatmul.f32.gmra.mxu0 %v368
        %v432 = vpop.f32.mrf.mxu0
        %v433 = vadd.f32 0.0, %v432
        %434 = vmatmul.f32.gmra.mxu0 %v371
        %v435 = vpop.f32.mrf.mxu0
        %v436 = vadd.f32 0.0, %v435
        %437 = vmatmul.f32.gmra.mxu0 %v374
        %v438 = vpop.f32.mrf.mxu0
        %v439 = vadd.f32 0.0, %v438
        %440 = vmatmul.f32.gmra.mxu0 %v377
        %v441 = vpop.f32.mrf.mxu0
        %v442 = vadd.f32 0.0, %v441
        %443 = vmatmul.f32.gmra.mxu0 %v380
        %v444 = vpop.f32.mrf.mxu0
        %v445 = vadd.f32 0.0, %v444
        %446 = vmatmul.f32.gmra.mxu0 %v383
        %v447 = vpop.f32.mrf.mxu0
        %v448 = vadd.f32 0.0, %v447
        %449 = vmatmul.f32.gmra.mxu0 %v386
        %v450 = vpop.f32.mrf.mxu0
        %v451 = vadd.f32 0.0, %v450
        %452 = vmatmul.f32.gmra.mxu0 %v389
        %v453 = vpop.f32.mrf.mxu0
        %v454 = vadd.f32 0.0, %v453
        %455 = vmatmul.f32.gmra.mxu0 %v392
        %v456 = vpop.f32.mrf.mxu0
        %v457 = vadd.f32 0.0, %v456
        %458 = vmatmul.f32.gmra.mxu0 %v395
        %v459 = vpop.f32.mrf.mxu0
        %v460 = vadd.f32 0.0, %v459
        %461 = vmatmul.f32.gmra.mxu0 %v398
        %v462 = vpop.f32.mrf.mxu0
        %v463 = vadd.f32 0.0, %v462
        %464 = vmatmul.f32.gmra.mxu0 %v401
        %v465 = vpop.f32.mrf.mxu0
        %v466 = vadd.f32 0.0, %v465
        %467 = vmatmul.f32.gmra.mxu0 %v404
        %v468 = vpop.f32.mrf.mxu0
        %v469 = vadd.f32 0.0, %v468
        %470 = vmatmul.f32.gmra.mxu0 %v407
        %v471 = vpop.f32.mrf.mxu0
        %v472 = vadd.f32 0.0, %v471
        %473 = vdwg.mxu0
        %vm474 = vcmask 7168
        %475 = vst.msk [vmem:[#allocation5] sm:$0xff] %vm474, %v427
        %476 = vst.msk [vmem:[#allocation5 + $0x8] sm:$0xff] %vm474, %v430
        %477 = vst.msk [vmem:[#allocation5 + $0x10] sm:$0xff] %vm474, %v433
        %478 = vst.msk [vmem:[#allocation5 + $0x18] sm:$0xff] %vm474, %v436
        %479 = vst.msk [vmem:[#allocation5 + $0x20] sm:$0xff] %vm474, %v439
        %480 = vst.msk [vmem:[#allocation5 + $0x28] sm:$0xff] %vm474, %v442
        %481 = vst.msk [vmem:[#allocation5 + $0x30] sm:$0xff] %vm474, %v445
        %482 = vst.msk [vmem:[#allocation5 + $0x38] sm:$0xff] %vm474, %v448
        %483 = vst.msk [vmem:[#allocation5 + $0x40] sm:$0xff] %vm474, %v451
        %484 = vst.msk [vmem:[#allocation5 + $0x48] sm:$0xff] %vm474, %v454
        %485 = vst.msk [vmem:[#allocation5 + $0x50] sm:$0xff] %vm474, %v457
        %486 = vst.msk [vmem:[#allocation5 + $0x58] sm:$0xff] %vm474, %v460
        %487 = vst.msk [vmem:[#allocation5 + $0x60] sm:$0xff] %vm474, %v463
        %488 = vst.msk [vmem:[#allocation5 + $0x68] sm:$0xff] %vm474, %v466
        %489 = vst.msk [vmem:[#allocation5 + $0x70] sm:$0xff] %vm474, %v469
        %490 = vst.msk [vmem:[#allocation5 + $0x78] sm:$0xff] %vm474, %v472
        %491 = vst.msk [vmem:[#allocation2] sm:$0xff] %vm474, -inf
        %492 = vst.msk [vmem:[#allocation2 + $0x8] sm:$0xff] %vm474, -inf
        %493 = vst.msk [vmem:[#allocation2 + $0x10] sm:$0xff] %vm474, -inf
        %494 = vst.msk [vmem:[#allocation2 + $0x18] sm:$0xff] %vm474, -inf
        %495 = vst.msk [vmem:[#allocation2 + $0x20] sm:$0xff] %vm474, -inf
        %496 = vst.msk [vmem:[#allocation2 + $0x28] sm:$0xff] %vm474, -inf
        %497 = vst.msk [vmem:[#allocation2 + $0x30] sm:$0xff] %vm474, -inf
        %498 = vst.msk [vmem:[#allocation2 + $0x38] sm:$0xff] %vm474, -inf
        %499 = vst.msk [vmem:[#allocation2 + $0x40] sm:$0xff] %vm474, -inf
        %500 = vst.msk [vmem:[#allocation2 + $0x48] sm:$0xff] %vm474, -inf
        %501 = vst.msk [vmem:[#allocation2 + $0x50] sm:$0xff] %vm474, -inf
        %502 = vst.msk [vmem:[#allocation2 + $0x58] sm:$0xff] %vm474, -inf
        %503 = vst.msk [vmem:[#allocation2 + $0x60] sm:$0xff] %vm474, -inf
        %504 = vst.msk [vmem:[#allocation2 + $0x68] sm:$0xff] %vm474, -inf
        %505 = vst.msk [vmem:[#allocation2 + $0x70] sm:$0xff] %vm474, -inf
        %506 = vst.msk [vmem:[#allocation2 + $0x78] sm:$0xff] %vm474, -inf
        %507 = vst.msk [vmem:[#allocation3] sm:$0xff] %vm474, 0.0
        %508 = vst.msk [vmem:[#allocation3 + $0x8] sm:$0xff] %vm474, 0.0
        %509 = vst.msk [vmem:[#allocation3 + $0x10] sm:$0xff] %vm474, 0.0
        %510 = vst.msk [vmem:[#allocation3 + $0x18] sm:$0xff] %vm474, 0.0
        %511 = vst.msk [vmem:[#allocation3 + $0x20] sm:$0xff] %vm474, 0.0
        %512 = vst.msk [vmem:[#allocation3 + $0x28] sm:$0xff] %vm474, 0.0
        %513 = vst.msk [vmem:[#allocation3 + $0x30] sm:$0xff] %vm474, 0.0
        %514 = vst.msk [vmem:[#allocation3 + $0x38] sm:$0xff] %vm474, 0.0
        %515 = vst.msk [vmem:[#allocation3 + $0x40] sm:$0xff] %vm474, 0.0
        %516 = vst.msk [vmem:[#allocation3 + $0x48] sm:$0xff] %vm474, 0.0
        %517 = vst.msk [vmem:[#allocation3 + $0x50] sm:$0xff] %vm474, 0.0
        %518 = vst.msk [vmem:[#allocation3 + $0x58] sm:$0xff] %vm474, 0.0
        %519 = vst.msk [vmem:[#allocation3 + $0x60] sm:$0xff] %vm474, 0.0
        %520 = vst.msk [vmem:[#allocation3 + $0x68] sm:$0xff] %vm474, 0.0
        %521 = vst.msk [vmem:[#allocation3 + $0x70] sm:$0xff] %vm474, 0.0
        %522 = vst.msk [vmem:[#allocation3 + $0x78] sm:$0xff] %vm474, 0.0
        %vm523 = vcmask 261120
        %524 = vst.msk [vmem:[#allocation4] sm:$0xff] %vm523, 0.0
        %525 = vst.msk [vmem:[#allocation4 + $0x8] sm:$0xff] %vm523, 0.0
        %526 = vst.msk [vmem:[#allocation4 + $0x10] sm:$0xff] %vm523, 0.0
        %527 = vst.msk [vmem:[#allocation4 + $0x18] sm:$0xff] %vm523, 0.0
        %528 = vst.msk [vmem:[#allocation4 + $0x20] sm:$0xff] %vm523, 0.0
        %529 = vst.msk [vmem:[#allocation4 + $0x28] sm:$0xff] %vm523, 0.0
        %530 = vst.msk [vmem:[#allocation4 + $0x30] sm:$0xff] %vm523, 0.0
        %531 = vst.msk [vmem:[#allocation4 + $0x38] sm:$0xff] %vm523, 0.0
        %532 = vst.msk [vmem:[#allocation4 + $0x40] sm:$0xff] %vm523, 0.0
        %533 = vst.msk [vmem:[#allocation4 + $0x48] sm:$0xff] %vm523, 0.0
        %534 = vst.msk [vmem:[#allocation4 + $0x50] sm:$0xff] %vm523, 0.0
        %535 = vst.msk [vmem:[#allocation4 + $0x58] sm:$0xff] %vm523, 0.0
        %536 = vst.msk [vmem:[#allocation4 + $0x60] sm:$0xff] %vm523, 0.0
        %537 = vst.msk [vmem:[#allocation4 + $0x68] sm:$0xff] %vm523, 0.0
        %538 = vst.msk [vmem:[#allocation4 + $0x70] sm:$0xff] %vm523, 0.0
        %539 = vst.msk [vmem:[#allocation4 + $0x78] sm:$0xff] %vm523, 0.0
      $region48: #{gat_forward.2} parent=43 // pred_fallthru
        _
      %v540 = vld [vmem:[%s310] sm:$0xff]
      %v541 = vld [vmem:[%s310 + $0x8] sm:$0xff]
      %v542 = vld [vmem:[%s310 + $0x10] sm:$0xff]
      %v543 = vld [vmem:[%s310 + $0x18] sm:$0xff]
      %v544 = vld [vmem:[%s310 + $0x20] sm:$0xff]
      %v545 = vld [vmem:[%s310 + $0x28] sm:$0xff]
      %v546 = vld [vmem:[%s310 + $0x30] sm:$0xff]
      %v547 = vld [vmem:[%s310 + $0x38] sm:$0xff]
      %v548 = vld [vmem:[%s310 + $0x40] sm:$0xff]
      %v549 = vld [vmem:[%s310 + $0x48] sm:$0xff]
      %v550 = vld [vmem:[%s310 + $0x50] sm:$0xff]
      %v551 = vld [vmem:[%s310 + $0x58] sm:$0xff]
      %v552 = vld [vmem:[%s310 + $0x60] sm:$0xff]
      %v553 = vld [vmem:[%s310 + $0x68] sm:$0xff]
      %v554 = vld [vmem:[%s310 + $0x70] sm:$0xff]
      %v555 = vld [vmem:[%s310 + $0x78] sm:$0xff]
      %v556 = vld [vmem:[%s310 + $0x80] sm:$0xff]
      %v557 = vld [vmem:[%s310 + $0x88] sm:$0xff]
      %v558 = vld [vmem:[%s310 + $0x90] sm:$0xff]
      %v559 = vld [vmem:[%s310 + $0x98] sm:$0xff]
      %v560 = vld [vmem:[%s310 + $0xa0] sm:$0xff]
      %v561 = vld [vmem:[%s310 + $0xa8] sm:$0xff]
      %v562 = vld [vmem:[%s310 + $0xb0] sm:$0xff]
      %v563 = vld [vmem:[%s310 + $0xb8] sm:$0xff]
      %v564 = vld [vmem:[%s310 + $0xc0] sm:$0xff]
      %v565 = vld [vmem:[%s310 + $0xc8] sm:$0xff]
      %v566 = vld [vmem:[%s310 + $0xd0] sm:$0xff]
      %v567 = vld [vmem:[%s310 + $0xd8] sm:$0xff]
      %v568 = vld [vmem:[%s310 + $0xe0] sm:$0xff]
      %v569 = vld [vmem:[%s310 + $0xe8] sm:$0xff]
      %v570 = vld [vmem:[%s310 + $0xf0] sm:$0xff]
      %v571 = vld [vmem:[%s310 + $0xf8] sm:$0xff]
      %vm572 = vcmask 130048
      %v574 = vsel %vm572, %v540, 0
      %v577 = vsel %vm572, %v541, 0
      %v580 = vsel %vm572, %v542, 0
      %v583 = vsel %vm572, %v543, 0
      %v586 = vsel %vm572, %v544, 0
      %v589 = vsel %vm572, %v545, 0
      %v592 = vsel %vm572, %v546, 0
      %v595 = vsel %vm572, %v547, 0
      %v598 = vsel %vm572, %v548, 0
      %v601 = vsel %vm572, %v549, 0
      %v604 = vsel %vm572, %v550, 0
      %v607 = vsel %vm572, %v551, 0
      %v610 = vsel %vm572, %v552, 0
      %v613 = vsel %vm572, %v553, 0
      %v616 = vsel %vm572, %v554, 0
      %v619 = vsel %vm572, %v555, 0
      %v622 = vsel %vm572, %v556, 0
      %v625 = vsel %vm572, %v557, 0
      %v628 = vsel %vm572, %v558, 0
      %v631 = vsel %vm572, %v559, 0
      %v634 = vsel %vm572, %v560, 0
      %v637 = vsel %vm572, %v561, 0
      %v640 = vsel %vm572, %v562, 0
      %v643 = vsel %vm572, %v563, 0
      %v646 = vsel %vm572, %v564, 0
      %v649 = vsel %vm572, %v565, 0
      %v652 = vsel %vm572, %v566, 0
      %v655 = vsel %vm572, %v567, 0
      %v658 = vsel %vm572, %v568, 0
      %v661 = vsel %vm572, %v569, 0
      %v664 = vsel %vm572, %v570, 0
      %v667 = vsel %vm572, %v571, 0
      %669 = vmatpush.msra.mxu0 0.0
      %670 = vmatpush.msra.mxu0 0.0
      %671 = vmatpush.msra.mxu0 0.0
      %672 = vmatpush.msra.mxu0 0.0
      %673 = vmatpush.msra.mxu0 0.0
      %674 = vmatpush.msra.mxu0 0.0
      %675 = vmatpush.msra.mxu0 0.0
      %676 = vmatpush.msra.mxu0 0.0
      %677 = vmatpush.msra.mxu0 0.0
      %678 = vmatpush.msra.mxu0 0.0
      %679 = vmatpush.msra.mxu0 0.0
      %680 = vmatpush.msra.mxu0 0.0
      %681 = vmatpush.msra.mxu0 0.0
      %682 = vmatpush.msra.mxu0 0.0
      %683 = vmatpush.msra.mxu0 %v331
      %684 = vmatpush.msra.mxu0 %v330
      %685 = vmatmul.f32.gmra.mxu0 %v574
      %v686 = vpop.f32.mrf.mxu0
      %v687 = vadd.f32 0.0, %v686
      %688 = vmatmul.f32.gmra.mxu0 %v577
      %v689 = vpop.f32.mrf.mxu0
      %v690 = vadd.f32 0.0, %v689
      %691 = vmatmul.f32.gmra.mxu0 %v580
      %v692 = vpop.f32.mrf.mxu0
      %v693 = vadd.f32 0.0, %v692
      %694 = vmatmul.f32.gmra.mxu0 %v583
      %v695 = vpop.f32.mrf.mxu0
      %v696 = vadd.f32 0.0, %v695
      %697 = vmatmul.f32.gmra.mxu0 %v586
      %v698 = vpop.f32.mrf.mxu0
      %v699 = vadd.f32 0.0, %v698
      %700 = vmatmul.f32.gmra.mxu0 %v589
      %v701 = vpop.f32.mrf.mxu0
      %v702 = vadd.f32 0.0, %v701
      %703 = vmatmul.f32.gmra.mxu0 %v592
      %v704 = vpop.f32.mrf.mxu0
      %v705 = vadd.f32 0.0, %v704
      %706 = vmatmul.f32.gmra.mxu0 %v595
      %v707 = vpop.f32.mrf.mxu0
      %v708 = vadd.f32 0.0, %v707
      %709 = vmatmul.f32.gmra.mxu0 %v598
      %v710 = vpop.f32.mrf.mxu0
      %v711 = vadd.f32 0.0, %v710
      %712 = vmatmul.f32.gmra.mxu0 %v601
      %v713 = vpop.f32.mrf.mxu0
      %v714 = vadd.f32 0.0, %v713
      %715 = vmatmul.f32.gmra.mxu0 %v604
      %v716 = vpop.f32.mrf.mxu0
      %v717 = vadd.f32 0.0, %v716
      %718 = vmatmul.f32.gmra.mxu0 %v607
      %v719 = vpop.f32.mrf.mxu0
      %v720 = vadd.f32 0.0, %v719
      %721 = vmatmul.f32.gmra.mxu0 %v610
      %v722 = vpop.f32.mrf.mxu0
      %v723 = vadd.f32 0.0, %v722
      %724 = vmatmul.f32.gmra.mxu0 %v613
      %v725 = vpop.f32.mrf.mxu0
      %v726 = vadd.f32 0.0, %v725
      %727 = vmatmul.f32.gmra.mxu0 %v616
      %v728 = vpop.f32.mrf.mxu0
      %v729 = vadd.f32 0.0, %v728
      %730 = vmatmul.f32.gmra.mxu0 %v619
      %v731 = vpop.f32.mrf.mxu0
      %v732 = vadd.f32 0.0, %v731
      %733 = vmatmul.f32.gmra.mxu0 %v622
      %v734 = vpop.f32.mrf.mxu0
      %v735 = vadd.f32 0.0, %v734
      %736 = vmatmul.f32.gmra.mxu0 %v625
      %v737 = vpop.f32.mrf.mxu0
      %v738 = vadd.f32 0.0, %v737
      %739 = vmatmul.f32.gmra.mxu0 %v628
      %v740 = vpop.f32.mrf.mxu0
      %v741 = vadd.f32 0.0, %v740
      %742 = vmatmul.f32.gmra.mxu0 %v631
      %v743 = vpop.f32.mrf.mxu0
      %v744 = vadd.f32 0.0, %v743
      %745 = vmatmul.f32.gmra.mxu0 %v634
      %v746 = vpop.f32.mrf.mxu0
      %v747 = vadd.f32 0.0, %v746
      %748 = vmatmul.f32.gmra.mxu0 %v637
      %v749 = vpop.f32.mrf.mxu0
      %v750 = vadd.f32 0.0, %v749
      %751 = vmatmul.f32.gmra.mxu0 %v640
      %v752 = vpop.f32.mrf.mxu0
      %v753 = vadd.f32 0.0, %v752
      %754 = vmatmul.f32.gmra.mxu0 %v643
      %v755 = vpop.f32.mrf.mxu0
      %v756 = vadd.f32 0.0, %v755
      %757 = vmatmul.f32.gmra.mxu0 %v646
      %v758 = vpop.f32.mrf.mxu0
      %v759 = vadd.f32 0.0, %v758
      %760 = vmatmul.f32.gmra.mxu0 %v649
      %v761 = vpop.f32.mrf.mxu0
      %v762 = vadd.f32 0.0, %v761
      %763 = vmatmul.f32.gmra.mxu0 %v652
      %v764 = vpop.f32.mrf.mxu0
      %v765 = vadd.f32 0.0, %v764
      %766 = vmatmul.f32.gmra.mxu0 %v655
      %v767 = vpop.f32.mrf.mxu0
      %v768 = vadd.f32 0.0, %v767
      %769 = vmatmul.f32.gmra.mxu0 %v658
      %v770 = vpop.f32.mrf.mxu0
      %v771 = vadd.f32 0.0, %v770
      %772 = vmatmul.f32.gmra.mxu0 %v661
      %v773 = vpop.f32.mrf.mxu0
      %v774 = vadd.f32 0.0, %v773
      %775 = vmatmul.f32.gmra.mxu0 %v664
      %v776 = vpop.f32.mrf.mxu0
      %v777 = vadd.f32 0.0, %v776
      %778 = vmatmul.f32.gmra.mxu0 %v667
      %v779 = vpop.f32.mrf.mxu0
      %v780 = vadd.f32 0.0, %v779
      %781 = vdwg.mxu0
      %v782 = vld [vmem:[%s321] sm:$0xff]
      %v783 = vld [vmem:[%s321 + $0x8] sm:$0xff]
      %v784 = vld [vmem:[%s321 + $0x10] sm:$0xff]
      %v785 = vld [vmem:[%s321 + $0x18] sm:$0xff]
      %v786 = vld [vmem:[%s321 + $0x20] sm:$0xff]
      %v787 = vld [vmem:[%s321 + $0x28] sm:$0xff]
      %v788 = vld [vmem:[%s321 + $0x30] sm:$0xff]
      %v789 = vld [vmem:[%s321 + $0x38] sm:$0xff]
      %v790 = vunpack.c.0.s8 %v782
      %v791 = vunpack.c.0.s8 %v783
      %v792 = vunpack.c.1.s8 %v782
      %v793 = vunpack.c.1.s8 %v783
      %v794 = vunpack.c.2.s8 %v782
      %v795 = vunpack.c.2.s8 %v783
      %v796 = vunpack.c.3.s8 %v782
      %v797 = vunpack.c.3.s8 %v783
      %v798 = vunpack.c.0.s8 %v784
      %v799 = vunpack.c.0.s8 %v785
      %v800 = vunpack.c.1.s8 %v784
      %v801 = vunpack.c.1.s8 %v785
      %v802 = vunpack.c.2.s8 %v784
      %v803 = vunpack.c.2.s8 %v785
      %v804 = vunpack.c.3.s8 %v784
      %v805 = vunpack.c.3.s8 %v785
      %v806 = vunpack.c.0.s8 %v786
      %v807 = vunpack.c.0.s8 %v787
      %v808 = vunpack.c.1.s8 %v786
      %v809 = vunpack.c.1.s8 %v787
      %v810 = vunpack.c.2.s8 %v786
      %v811 = vunpack.c.2.s8 %v787
      %v812 = vunpack.c.3.s8 %v786
      %v813 = vunpack.c.3.s8 %v787
      %v814 = vunpack.c.0.s8 %v788
      %v815 = vunpack.c.0.s8 %v789
      %v816 = vunpack.c.1.s8 %v788
      %v817 = vunpack.c.1.s8 %v789
      %v818 = vunpack.c.2.s8 %v788
      %v819 = vunpack.c.2.s8 %v789
      %v820 = vunpack.c.3.s8 %v788
      %v821 = vunpack.c.3.s8 %v789
      %vm822 = vcmp.gt.s32.totalorder %v790, 0
      %vm823 = vcmp.gt.s32.totalorder %v791, 0
      %vm824 = vcmp.gt.s32.totalorder %v792, 0
      %vm825 = vcmp.gt.s32.totalorder %v793, 0
      %vm826 = vcmp.gt.s32.totalorder %v794, 0
      %vm827 = vcmp.gt.s32.totalorder %v795, 0
      %vm828 = vcmp.gt.s32.totalorder %v796, 0
      %vm829 = vcmp.gt.s32.totalorder %v797, 0
      %vm830 = vcmp.gt.s32.totalorder %v798, 0
      %vm831 = vcmp.gt.s32.totalorder %v799, 0
      %vm832 = vcmp.gt.s32.totalorder %v800, 0
      %vm833 = vcmp.gt.s32.totalorder %v801, 0
      %vm834 = vcmp.gt.s32.totalorder %v802, 0
      %vm835 = vcmp.gt.s32.totalorder %v803, 0
      %vm836 = vcmp.gt.s32.totalorder %v804, 0
      %vm837 = vcmp.gt.s32.totalorder %v805, 0
      %vm838 = vcmp.gt.s32.totalorder %v806, 0
      %vm839 = vcmp.gt.s32.totalorder %v807, 0
      %vm840 = vcmp.gt.s32.totalorder %v808, 0
      %vm841 = vcmp.gt.s32.totalorder %v809, 0
      %vm842 = vcmp.gt.s32.totalorder %v810, 0
      %vm843 = vcmp.gt.s32.totalorder %v811, 0
      %vm844 = vcmp.gt.s32.totalorder %v812, 0
      %vm845 = vcmp.gt.s32.totalorder %v813, 0
      %vm846 = vcmp.gt.s32.totalorder %v814, 0
      %vm847 = vcmp.gt.s32.totalorder %v815, 0
      %vm848 = vcmp.gt.s32.totalorder %v816, 0
      %vm849 = vcmp.gt.s32.totalorder %v817, 0
      %vm850 = vcmp.gt.s32.totalorder %v818, 0
      %vm851 = vcmp.gt.s32.totalorder %v819, 0
      %vm852 = vcmp.gt.s32.totalorder %v820, 0
      %vm853 = vcmp.gt.s32.totalorder %v821, 0
      %v854 = vld [vmem:[#allocation5] sm:$0xff]
      %v855 = vld [vmem:[#allocation5 + $0x8] sm:$0xff]
      %v856 = vld [vmem:[#allocation5 + $0x10] sm:$0xff]
      %v857 = vld [vmem:[#allocation5 + $0x18] sm:$0xff]
      %v858 = vld [vmem:[#allocation5 + $0x20] sm:$0xff]
      %v859 = vld [vmem:[#allocation5 + $0x28] sm:$0xff]
      %v860 = vld [vmem:[#allocation5 + $0x30] sm:$0xff]
      %v861 = vld [vmem:[#allocation5 + $0x38] sm:$0xff]
      %v862 = vld [vmem:[#allocation5 + $0x40] sm:$0xff]
      %v863 = vld [vmem:[#allocation5 + $0x48] sm:$0xff]
      %v864 = vld [vmem:[#allocation5 + $0x50] sm:$0xff]
      %v865 = vld [vmem:[#allocation5 + $0x58] sm:$0xff]
      %v866 = vld [vmem:[#allocation5 + $0x60] sm:$0xff]
      %v867 = vld [vmem:[#allocation5 + $0x68] sm:$0xff]
      %v868 = vld [vmem:[#allocation5 + $0x70] sm:$0xff]
      %v869 = vld [vmem:[#allocation5 + $0x78] sm:$0xff]
      %902 = vrot.lane.b32.xlu0 %v687, 96
      %v903 = vpop.permute.xlu0 %902
      %904 = vrot.lane.b32.xlu0 %v690, 96
      %v905 = vpop.permute.xlu0 %904
      %906 = vrot.lane.b32.xlu0 %v693, 96
      %v907 = vpop.permute.xlu0 %906
      %908 = vrot.lane.b32.xlu0 %v696, 96
      %v909 = vpop.permute.xlu0 %908
      %910 = vrot.lane.b32.xlu0 %v699, 96
      %v911 = vpop.permute.xlu0 %910
      %912 = vrot.lane.b32.xlu0 %v702, 96
      %v913 = vpop.permute.xlu0 %912
      %914 = vrot.lane.b32.xlu0 %v705, 96
      %v915 = vpop.permute.xlu0 %914
      %916 = vrot.lane.b32.xlu0 %v708, 96
      %v917 = vpop.permute.xlu0 %916
      %918 = vrot.lane.b32.xlu0 %v711, 96
      %v919 = vpop.permute.xlu0 %918
      %920 = vrot.lane.b32.xlu0 %v714, 96
      %v921 = vpop.permute.xlu0 %920
      %922 = vrot.lane.b32.xlu0 %v717, 96
      %v923 = vpop.permute.xlu0 %922
      %924 = vrot.lane.b32.xlu0 %v720, 96
      %v925 = vpop.permute.xlu0 %924
      %926 = vrot.lane.b32.xlu0 %v723, 96
      %v927 = vpop.permute.xlu0 %926
      %928 = vrot.lane.b32.xlu0 %v726, 96
      %v929 = vpop.permute.xlu0 %928
      %930 = vrot.lane.b32.xlu0 %v729, 96
      %v931 = vpop.permute.xlu0 %930
      %932 = vrot.lane.b32.xlu0 %v732, 96
      %v933 = vpop.permute.xlu0 %932
      %934 = vrot.lane.b32.xlu0 %v735, 96
      %v935 = vpop.permute.xlu0 %934
      %936 = vrot.lane.b32.xlu0 %v738, 96
      %v937 = vpop.permute.xlu0 %936
      %938 = vrot.lane.b32.xlu0 %v741, 96
      %v939 = vpop.permute.xlu0 %938
      %940 = vrot.lane.b32.xlu0 %v744, 96
      %v941 = vpop.permute.xlu0 %940
      %942 = vrot.lane.b32.xlu0 %v747, 96
      %v943 = vpop.permute.xlu0 %942
      %944 = vrot.lane.b32.xlu0 %v750, 96
      %v945 = vpop.permute.xlu0 %944
      %946 = vrot.lane.b32.xlu0 %v753, 96
      %v947 = vpop.permute.xlu0 %946
      %948 = vrot.lane.b32.xlu0 %v756, 96
      %v949 = vpop.permute.xlu0 %948
      %950 = vrot.lane.b32.xlu0 %v759, 96
      %v951 = vpop.permute.xlu0 %950
      %952 = vrot.lane.b32.xlu0 %v762, 96
      %v953 = vpop.permute.xlu0 %952
      %954 = vrot.lane.b32.xlu0 %v765, 96
      %v955 = vpop.permute.xlu0 %954
      %956 = vrot.lane.b32.xlu0 %v768, 96
      %v957 = vpop.permute.xlu0 %956
      %958 = vrot.lane.b32.xlu0 %v771, 96
      %v959 = vpop.permute.xlu0 %958
      %960 = vrot.lane.b32.xlu0 %v774, 96
      %v961 = vpop.permute.xlu0 %960
      %962 = vrot.lane.b32.xlu0 %v777, 96
      %v963 = vpop.permute.xlu0 %962
      %964 = vrot.lane.b32.xlu0 %v780, 96
      %v965 = vpop.permute.xlu0 %964
      %998 = vxpose.xlu0.b32.start [1/16] %v903, 128
      %999 = vxpose.xlu0.b32.cont [2/16] %v905, 128
      %1000 = vxpose.xlu0.b32.cont [3/16] %v907, 128
      %1001 = vxpose.xlu0.b32.cont [4/16] %v909, 128
      %1002 = vxpose.xlu0.b32.cont [5/16] %v911, 128
      %1003 = vxpose.xlu0.b32.cont [6/16] %v913, 128
      %1004 = vxpose.xlu0.b32.cont [7/16] %v915, 128
      %1005 = vxpose.xlu0.b32.cont [8/16] %v917, 128
      %1006 = vxpose.xlu0.b32.cont [9/16] %v919, 128
      %1007 = vxpose.xlu0.b32.cont [10/16] %v921, 128
      %1008 = vxpose.xlu0.b32.cont [11/16] %v923, 128
      %1009 = vxpose.xlu0.b32.cont [12/16] %v925, 128
      %1010 = vxpose.xlu0.b32.cont [13/16] %v927, 128
      %1011 = vxpose.xlu0.b32.cont [14/16] %v929, 128
      %1012 = vxpose.xlu0.b32.cont [15/16] %v931, 128
      %1013 = vxpose.xlu0.b32.end [16/16] %v933, 128
      %v1014 = vpop.trf.xlu0
      %v1015 = vpop.trf.xlu0
      %v1016 = vpop.trf.xlu0
      %v1017 = vpop.trf.xlu0
      %v1018 = vpop.trf.xlu0
      %v1019 = vpop.trf.xlu0
      %v1020 = vpop.trf.xlu0
      %v1021 = vpop.trf.xlu0
      %v1022 = vpop.trf.xlu0
      %v1023 = vpop.trf.xlu0
      %v1024 = vpop.trf.xlu0
      %v1025 = vpop.trf.xlu0
      %v1026 = vpop.trf.xlu0
      %v1027 = vpop.trf.xlu0
      %v1028 = vpop.trf.xlu0
      %v1029 = vpop.trf.xlu0
      %1030 = vxpose.xlu0.b32.start [1/16] %v935, 128
      %1031 = vxpose.xlu0.b32.cont [2/16] %v937, 128
      %1032 = vxpose.xlu0.b32.cont [3/16] %v939, 128
      %1033 = vxpose.xlu0.b32.cont [4/16] %v941, 128
      %1034 = vxpose.xlu0.b32.cont [5/16] %v943, 128
      %1035 = vxpose.xlu0.b32.cont [6/16] %v945, 128
      %1036 = vxpose.xlu0.b32.cont [7/16] %v947, 128
      %1037 = vxpose.xlu0.b32.cont [8/16] %v949, 128
      %1038 = vxpose.xlu0.b32.cont [9/16] %v951, 128
      %1039 = vxpose.xlu0.b32.cont [10/16] %v953, 128
      %1040 = vxpose.xlu0.b32.cont [11/16] %v955, 128
      %1041 = vxpose.xlu0.b32.cont [12/16] %v957, 128
      %1042 = vxpose.xlu0.b32.cont [13/16] %v959, 128
      %1043 = vxpose.xlu0.b32.cont [14/16] %v961, 128
      %1044 = vxpose.xlu0.b32.cont [15/16] %v963, 128
      %1045 = vxpose.xlu0.b32.end [16/16] %v965, 128
      %v1046 = vpop.trf.xlu0
      %v1047 = vpop.trf.xlu0
      %v1048 = vpop.trf.xlu0
      %v1049 = vpop.trf.xlu0
      %v1050 = vpop.trf.xlu0
      %v1051 = vpop.trf.xlu0
      %v1052 = vpop.trf.xlu0
      %v1053 = vpop.trf.xlu0
      %v1054 = vpop.trf.xlu0
      %v1055 = vpop.trf.xlu0
      %v1056 = vpop.trf.xlu0
      %v1057 = vpop.trf.xlu0
      %v1058 = vpop.trf.xlu0
      %v1059 = vpop.trf.xlu0
      %v1060 = vpop.trf.xlu0
      %v1061 = vpop.trf.xlu0
      %1063 = vset.pattern.permute.xlu0 0
      %1064 = vperm.xlu0 %1063, %v854
      %v1065 = vpop.permute.xlu0 %1064
      %1068 = vset.pattern.permute.xlu0 0
      %1069 = vperm.xlu0 %1068, %v855
      %v1070 = vpop.permute.xlu0 %1069
      %1073 = vset.pattern.permute.xlu0 0
      %1074 = vperm.xlu0 %1073, %v856
      %v1075 = vpop.permute.xlu0 %1074
      %1078 = vset.pattern.permute.xlu0 0
      %1079 = vperm.xlu0 %1078, %v857
      %v1080 = vpop.permute.xlu0 %1079
      %1083 = vset.pattern.permute.xlu0 0
      %1084 = vperm.xlu0 %1083, %v858
      %v1085 = vpop.permute.xlu0 %1084
      %1088 = vset.pattern.permute.xlu0 0
      %1089 = vperm.xlu0 %1088, %v859
      %v1090 = vpop.permute.xlu0 %1089
      %1093 = vset.pattern.permute.xlu0 0
      %1094 = vperm.xlu0 %1093, %v860
      %v1095 = vpop.permute.xlu0 %1094
      %1098 = vset.pattern.permute.xlu0 0
      %1099 = vperm.xlu0 %1098, %v861
      %v1100 = vpop.permute.xlu0 %1099
      %1103 = vset.pattern.permute.xlu0 0
      %1104 = vperm.xlu0 %1103, %v862
      %v1105 = vpop.permute.xlu0 %1104
      %1108 = vset.pattern.permute.xlu0 0
      %1109 = vperm.xlu0 %1108, %v863
      %v1110 = vpop.permute.xlu0 %1109
      %1113 = vset.pattern.permute.xlu0 0
      %1114 = vperm.xlu0 %1113, %v864
      %v1115 = vpop.permute.xlu0 %1114
      %1118 = vset.pattern.permute.xlu0 0
      %1119 = vperm.xlu0 %1118, %v865
      %v1120 = vpop.permute.xlu0 %1119
      %1123 = vset.pattern.permute.xlu0 0
      %1124 = vperm.xlu0 %1123, %v866
      %v1125 = vpop.permute.xlu0 %1124
      %1128 = vset.pattern.permute.xlu0 0
      %1129 = vperm.xlu0 %1128, %v867
      %v1130 = vpop.permute.xlu0 %1129
      %1133 = vset.pattern.permute.xlu0 0
      %1134 = vperm.xlu0 %1133, %v868
      %v1135 = vpop.permute.xlu0 %1134
      %1138 = vset.pattern.permute.xlu0 0
      %1139 = vperm.xlu0 %1138, %v869
      %v1140 = vpop.permute.xlu0 %1139
      %v1142 = vperm.slane %v1014, 0
      %v1143 = vperm.slane %v1046, 0
      %v1144 = vadd.f32 %v1065, %v1142
      %v1145 = vadd.f32 %v1065, %v1143
      %v1146 = vadd.f32 %v1070, %v1142
      %v1147 = vadd.f32 %v1070, %v1143
      %v1148 = vadd.f32 %v1075, %v1142
      %v1149 = vadd.f32 %v1075, %v1143
      %v1150 = vadd.f32 %v1080, %v1142
      %v1151 = vadd.f32 %v1080, %v1143
      %v1152 = vadd.f32 %v1085, %v1142
      %v1153 = vadd.f32 %v1085, %v1143
      %v1154 = vadd.f32 %v1090, %v1142
      %v1155 = vadd.f32 %v1090, %v1143
      %v1156 = vadd.f32 %v1095, %v1142
      %v1157 = vadd.f32 %v1095, %v1143
      %v1158 = vadd.f32 %v1100, %v1142
      %v1159 = vadd.f32 %v1100, %v1143
      %v1160 = vadd.f32 %v1105, %v1142
      %v1161 = vadd.f32 %v1105, %v1143
      %v1162 = vadd.f32 %v1110, %v1142
      %v1163 = vadd.f32 %v1110, %v1143
      %v1164 = vadd.f32 %v1115, %v1142
      %v1165 = vadd.f32 %v1115, %v1143
      %v1166 = vadd.f32 %v1120, %v1142
      %v1167 = vadd.f32 %v1120, %v1143
      %v1168 = vadd.f32 %v1125, %v1142
      %v1169 = vadd.f32 %v1125, %v1143
      %v1170 = vadd.f32 %v1130, %v1142
      %v1171 = vadd.f32 %v1130, %v1143
      %v1172 = vadd.f32 %v1135, %v1142
      %v1173 = vadd.f32 %v1135, %v1143
      %v1174 = vadd.f32 %v1140, %v1142
      %v1175 = vadd.f32 %v1140, %v1143
      %vm1176 = vcmp.gt.f32.partialorder %v1144, 0.0
      %vm1177 = vcmp.gt.f32.partialorder %v1145, 0.0
      %vm1178 = vcmp.gt.f32.partialorder %v1146, 0.0
      %vm1179 = vcmp.gt.f32.partialorder %v1147, 0.0
      %vm1180 = vcmp.gt.f32.partialorder %v1148, 0.0
      %vm1181 = vcmp.gt.f32.partialorder %v1149, 0.0
      %vm1182 = vcmp.gt.f32.partialorder %v1150, 0.0
      %vm1183 = vcmp.gt.f32.partialorder %v1151, 0.0
      %vm1184 = vcmp.gt.f32.partialorder %v1152, 0.0
      %vm1185 = vcmp.gt.f32.partialorder %v1153, 0.0
      %vm1186 = vcmp.gt.f32.partialorder %v1154, 0.0
      %vm1187 = vcmp.gt.f32.partialorder %v1155, 0.0
      %vm1188 = vcmp.gt.f32.partialorder %v1156, 0.0
      %vm1189 = vcmp.gt.f32.partialorder %v1157, 0.0
      %vm1190 = vcmp.gt.f32.partialorder %v1158, 0.0
      %vm1191 = vcmp.gt.f32.partialorder %v1159, 0.0
      %vm1192 = vcmp.gt.f32.partialorder %v1160, 0.0
      %vm1193 = vcmp.gt.f32.partialorder %v1161, 0.0
      %vm1194 = vcmp.gt.f32.partialorder %v1162, 0.0
      %vm1195 = vcmp.gt.f32.partialorder %v1163, 0.0
      %vm1196 = vcmp.gt.f32.partialorder %v1164, 0.0
      %vm1197 = vcmp.gt.f32.partialorder %v1165, 0.0
      %vm1198 = vcmp.gt.f32.partialorder %v1166, 0.0
      %vm1199 = vcmp.gt.f32.partialorder %v1167, 0.0
      %vm1200 = vcmp.gt.f32.partialorder %v1168, 0.0
      %vm1201 = vcmp.gt.f32.partialorder %v1169, 0.0
      %vm1202 = vcmp.gt.f32.partialorder %v1170, 0.0
      %vm1203 = vcmp.gt.f32.partialorder %v1171, 0.0
      %vm1204 = vcmp.gt.f32.partialorder %v1172, 0.0
      %vm1205 = vcmp.gt.f32.partialorder %v1173, 0.0
      %vm1206 = vcmp.gt.f32.partialorder %v1174, 0.0
      %vm1207 = vcmp.gt.f32.partialorder %v1175, 0.0
      %v1208 = vmul.f32 %v1144, 0.2
      %v1209 = vmul.f32 %v1145, 0.2
      %v1210 = vmul.f32 %v1146, 0.2
      %v1211 = vmul.f32 %v1147, 0.2
      %v1212 = vmul.f32 %v1148, 0.2
      %v1213 = vmul.f32 %v1149, 0.2
      %v1214 = vmul.f32 %v1150, 0.2
      %v1215 = vmul.f32 %v1151, 0.2
      %v1216 = vmul.f32 %v1152, 0.2
      %v1217 = vmul.f32 %v1153, 0.2
      %v1218 = vmul.f32 %v1154, 0.2
      %v1219 = vmul.f32 %v1155, 0.2
      %v1220 = vmul.f32 %v1156, 0.2
      %v1221 = vmul.f32 %v1157, 0.2
      %v1222 = vmul.f32 %v1158, 0.2
      %v1223 = vmul.f32 %v1159, 0.2
      %v1224 = vmul.f32 %v1160, 0.2
      %v1225 = vmul.f32 %v1161, 0.2
      %v1226 = vmul.f32 %v1162, 0.2
      %v1227 = vmul.f32 %v1163, 0.2
      %v1228 = vmul.f32 %v1164, 0.2
      %v1229 = vmul.f32 %v1165, 0.2
      %v1230 = vmul.f32 %v1166, 0.2
      %v1231 = vmul.f32 %v1167, 0.2
      %v1232 = vmul.f32 %v1168, 0.2
      %v1233 = vmul.f32 %v1169, 0.2
      %v1234 = vmul.f32 %v1170, 0.2
      %v1235 = vmul.f32 %v1171, 0.2
      %v1236 = vmul.f32 %v1172, 0.2
      %v1237 = vmul.f32 %v1173, 0.2
      %v1238 = vmul.f32 %v1174, 0.2
      %v1239 = vmul.f32 %v1175, 0.2
      %v1240 = vsel %vm1176, %v1144, %v1208
      %v1241 = vsel %vm1177, %v1145, %v1209
      %v1242 = vsel %vm1178, %v1146, %v1210
      %v1243 = vsel %vm1179, %v1147, %v1211
      %v1244 = vsel %vm1180, %v1148, %v1212
      %v1245 = vsel %vm1181, %v1149, %v1213
      %v1246 = vsel %vm1182, %v1150, %v1214
      %v1247 = vsel %vm1183, %v1151, %v1215
      %v1248 = vsel %vm1184, %v1152, %v1216
      %v1249 = vsel %vm1185, %v1153, %v1217
      %v1250 = vsel %vm1186, %v1154, %v1218
      %v1251 = vsel %vm1187, %v1155, %v1219
      %v1252 = vsel %vm1188, %v1156, %v1220
      %v1253 = vsel %vm1189, %v1157, %v1221
      %v1254 = vsel %vm1190, %v1158, %v1222
      %v1255 = vsel %vm1191, %v1159, %v1223
      %v1256 = vsel %vm1192, %v1160, %v1224
      %v1257 = vsel %vm1193, %v1161, %v1225
      %v1258 = vsel %vm1194, %v1162, %v1226
      %v1259 = vsel %vm1195, %v1163, %v1227
      %v1260 = vsel %vm1196, %v1164, %v1228
      %v1261 = vsel %vm1197, %v1165, %v1229
      %v1262 = vsel %vm1198, %v1166, %v1230
      %v1263 = vsel %vm1199, %v1167, %v1231
      %v1264 = vsel %vm1200, %v1168, %v1232
      %v1265 = vsel %vm1201, %v1169, %v1233
      %v1266 = vsel %vm1202, %v1170, %v1234
      %v1267 = vsel %vm1203, %v1171, %v1235
      %v1268 = vsel %vm1204, %v1172, %v1236
      %v1269 = vsel %vm1205, %v1173, %v1237
      %v1270 = vsel %vm1206, %v1174, %v1238
      %v1271 = vsel %vm1207, %v1175, %v1239
      %v1272 = vsel %vm822, %v1240, -1e+30
      %v1273 = vsel %vm823, %v1241, -1e+30
      %v1274 = vsel %vm824, %v1242, -1e+30
      %v1275 = vsel %vm825, %v1243, -1e+30
      %v1276 = vsel %vm826, %v1244, -1e+30
      %v1277 = vsel %vm827, %v1245, -1e+30
      %v1278 = vsel %vm828, %v1246, -1e+30
      %v1279 = vsel %vm829, %v1247, -1e+30
      %v1280 = vsel %vm830, %v1248, -1e+30
      %v1281 = vsel %vm831, %v1249, -1e+30
      %v1282 = vsel %vm832, %v1250, -1e+30
      %v1283 = vsel %vm833, %v1251, -1e+30
      %v1284 = vsel %vm834, %v1252, -1e+30
      %v1285 = vsel %vm835, %v1253, -1e+30
      %v1286 = vsel %vm836, %v1254, -1e+30
      %v1287 = vsel %vm837, %v1255, -1e+30
      %v1288 = vsel %vm838, %v1256, -1e+30
      %v1289 = vsel %vm839, %v1257, -1e+30
      %v1290 = vsel %vm840, %v1258, -1e+30
      %v1291 = vsel %vm841, %v1259, -1e+30
      %v1292 = vsel %vm842, %v1260, -1e+30
      %v1293 = vsel %vm843, %v1261, -1e+30
      %v1294 = vsel %vm844, %v1262, -1e+30
      %v1295 = vsel %vm845, %v1263, -1e+30
      %v1296 = vsel %vm846, %v1264, -1e+30
      %v1297 = vsel %vm847, %v1265, -1e+30
      %v1298 = vsel %vm848, %v1266, -1e+30
      %v1299 = vsel %vm849, %v1267, -1e+30
      %v1300 = vsel %vm850, %v1268, -1e+30
      %v1301 = vsel %vm851, %v1269, -1e+30
      %v1302 = vsel %vm852, %v1270, -1e+30
      %v1303 = vsel %vm853, %v1271, -1e+30
      %v1304 = vld [vmem:[#allocation2] sm:$0xff]
      %v1305 = vld [vmem:[#allocation2 + $0x8] sm:$0xff]
      %v1306 = vld [vmem:[#allocation2 + $0x10] sm:$0xff]
      %v1307 = vld [vmem:[#allocation2 + $0x18] sm:$0xff]
      %v1308 = vld [vmem:[#allocation2 + $0x20] sm:$0xff]
      %v1309 = vld [vmem:[#allocation2 + $0x28] sm:$0xff]
      %v1310 = vld [vmem:[#allocation2 + $0x30] sm:$0xff]
      %v1311 = vld [vmem:[#allocation2 + $0x38] sm:$0xff]
      %v1312 = vld [vmem:[#allocation2 + $0x40] sm:$0xff]
      %v1313 = vld [vmem:[#allocation2 + $0x48] sm:$0xff]
      %v1314 = vld [vmem:[#allocation2 + $0x50] sm:$0xff]
      %v1315 = vld [vmem:[#allocation2 + $0x58] sm:$0xff]
      %v1316 = vld [vmem:[#allocation2 + $0x60] sm:$0xff]
      %v1317 = vld [vmem:[#allocation2 + $0x68] sm:$0xff]
      %v1318 = vld [vmem:[#allocation2 + $0x70] sm:$0xff]
      %v1319 = vld [vmem:[#allocation2 + $0x78] sm:$0xff]
      %v1320 = vmax.f32 %v1272, %v1273
      %1321 = vmax.xlane.f32.xlu0 %v1320
      %v1322 = vpop.xlane.xlu0 %1321
      %v1323 = vmax.f32 %v1274, %v1275
      %1324 = vmax.xlane.f32.xlu0 %v1323
      %v1325 = vpop.xlane.xlu0 %1324
      %v1326 = vmax.f32 %v1276, %v1277
      %1327 = vmax.xlane.f32.xlu0 %v1326
      %v1328 = vpop.xlane.xlu0 %1327
      %v1329 = vmax.f32 %v1278, %v1279
      %1330 = vmax.xlane.f32.xlu0 %v1329
      %v1331 = vpop.xlane.xlu0 %1330
      %v1332 = vmax.f32 %v1280, %v1281
      %1333 = vmax.xlane.f32.xlu0 %v1332
      %v1334 = vpop.xlane.xlu0 %1333
      %v1335 = vmax.f32 %v1282, %v1283
      %1336 = vmax.xlane.f32.xlu0 %v1335
      %v1337 = vpop.xlane.xlu0 %1336
      %v1338 = vmax.f32 %v1284, %v1285
      %1339 = vmax.xlane.f32.xlu0 %v1338
      %v1340 = vpop.xlane.xlu0 %1339
      %v1341 = vmax.f32 %v1286, %v1287
      %1342 = vmax.xlane.f32.xlu0 %v1341
      %v1343 = vpop.xlane.xlu0 %1342
      %v1344 = vmax.f32 %v1288, %v1289
      %1345 = vmax.xlane.f32.xlu0 %v1344
      %v1346 = vpop.xlane.xlu0 %1345
      %v1347 = vmax.f32 %v1290, %v1291
      %1348 = vmax.xlane.f32.xlu0 %v1347
      %v1349 = vpop.xlane.xlu0 %1348
      %v1350 = vmax.f32 %v1292, %v1293
      %1351 = vmax.xlane.f32.xlu0 %v1350
      %v1352 = vpop.xlane.xlu0 %1351
      %v1353 = vmax.f32 %v1294, %v1295
      %1354 = vmax.xlane.f32.xlu0 %v1353
      %v1355 = vpop.xlane.xlu0 %1354
      %v1356 = vmax.f32 %v1296, %v1297
      %1357 = vmax.xlane.f32.xlu0 %v1356
      %v1358 = vpop.xlane.xlu0 %1357
      %v1359 = vmax.f32 %v1298, %v1299
      %1360 = vmax.xlane.f32.xlu0 %v1359
      %v1361 = vpop.xlane.xlu0 %1360
      %v1362 = vmax.f32 %v1300, %v1301
      %1363 = vmax.xlane.f32.xlu0 %v1362
      %v1364 = vpop.xlane.xlu0 %1363
      %v1365 = vmax.f32 %v1302, %v1303
      %1366 = vmax.xlane.f32.xlu0 %v1365
      %v1367 = vpop.xlane.xlu0 %1366
      %v1368 = vmax.f32 %v1304, %v1322
      %v1369 = vmax.f32 %v1305, %v1325
      %v1370 = vmax.f32 %v1306, %v1328
      %v1371 = vmax.f32 %v1307, %v1331
      %v1372 = vmax.f32 %v1308, %v1334
      %v1373 = vmax.f32 %v1309, %v1337
      %v1374 = vmax.f32 %v1310, %v1340
      %v1375 = vmax.f32 %v1311, %v1343
      %v1376 = vmax.f32 %v1312, %v1346
      %v1377 = vmax.f32 %v1313, %v1349
      %v1378 = vmax.f32 %v1314, %v1352
      %v1379 = vmax.f32 %v1315, %v1355
      %v1380 = vmax.f32 %v1316, %v1358
      %v1381 = vmax.f32 %v1317, %v1361
      %v1382 = vmax.f32 %v1318, %v1364
      %v1383 = vmax.f32 %v1319, %v1367
      %v1384 = vsub.f32 %v1304, %v1368
      %v1385 = vsub.f32 %v1305, %v1369
      %v1386 = vsub.f32 %v1306, %v1370
      %v1387 = vsub.f32 %v1307, %v1371
      %v1388 = vsub.f32 %v1308, %v1372
      %v1389 = vsub.f32 %v1309, %v1373
      %v1390 = vsub.f32 %v1310, %v1374
      %v1391 = vsub.f32 %v1311, %v1375
      %v1392 = vsub.f32 %v1312, %v1376
      %v1393 = vsub.f32 %v1313, %v1377
      %v1394 = vsub.f32 %v1314, %v1378
      %v1395 = vsub.f32 %v1315, %v1379
      %v1396 = vsub.f32 %v1316, %v1380
      %v1397 = vsub.f32 %v1317, %v1381
      %v1398 = vsub.f32 %v1318, %v1382
      %v1399 = vsub.f32 %v1319, %v1383
      %v1400 = vmul.f32 %v1384, 1.442695
      %v1401 = vpow.pop %v1400
      %v1402 = vmul.f32 %v1385, 1.442695
      %v1403 = vpow.pop %v1402
      %v1404 = vmul.f32 %v1386, 1.442695
      %v1405 = vpow.pop %v1404
      %v1406 = vmul.f32 %v1387, 1.442695
      %v1407 = vpow.pop %v1406
      %v1408 = vmul.f32 %v1388, 1.442695
      %v1409 = vpow.pop %v1408
      %v1410 = vmul.f32 %v1389, 1.442695
      %v1411 = vpow.pop %v1410
      %v1412 = vmul.f32 %v1390, 1.442695
      %v1413 = vpow.pop %v1412
      %v1414 = vmul.f32 %v1391, 1.442695
      %v1415 = vpow.pop %v1414
      %v1416 = vmul.f32 %v1392, 1.442695
      %v1417 = vpow.pop %v1416
      %v1418 = vmul.f32 %v1393, 1.442695
      %v1419 = vpow.pop %v1418
      %v1420 = vmul.f32 %v1394, 1.442695
      %v1421 = vpow.pop %v1420
      %v1422 = vmul.f32 %v1395, 1.442695
      %v1423 = vpow.pop %v1422
      %v1424 = vmul.f32 %v1396, 1.442695
      %v1425 = vpow.pop %v1424
      %v1426 = vmul.f32 %v1397, 1.442695
      %v1427 = vpow.pop %v1426
      %v1428 = vmul.f32 %v1398, 1.442695
      %v1429 = vpow.pop %v1428
      %v1430 = vmul.f32 %v1399, 1.442695
      %v1431 = vpow.pop %v1430
      %1433 = vset.pattern.permute.xlu0 0
      %1434 = vperm.xlu0 %1433, %v1368
      %v1435 = vpop.permute.xlu0 %1434
      %1438 = vset.pattern.permute.xlu0 0
      %1439 = vperm.xlu0 %1438, %v1369
      %v1440 = vpop.permute.xlu0 %1439
      %1443 = vset.pattern.permute.xlu0 0
      %1444 = vperm.xlu0 %1443, %v1370
      %v1445 = vpop.permute.xlu0 %1444
      %1448 = vset.pattern.permute.xlu0 0
      %1449 = vperm.xlu0 %1448, %v1371
      %v1450 = vpop.permute.xlu0 %1449
      %1453 = vset.pattern.permute.xlu0 0
      %1454 = vperm.xlu0 %1453, %v1372
      %v1455 = vpop.permute.xlu0 %1454
      %1458 = vset.pattern.permute.xlu0 0
      %1459 = vperm.xlu0 %1458, %v1373
      %v1460 = vpop.permute.xlu0 %1459
      %1463 = vset.pattern.permute.xlu0 0
      %1464 = vperm.xlu0 %1463, %v1374
      %v1465 = vpop.permute.xlu0 %1464
      %1468 = vset.pattern.permute.xlu0 0
      %1469 = vperm.xlu0 %1468, %v1375
      %v1470 = vpop.permute.xlu0 %1469
      %1473 = vset.pattern.permute.xlu0 0
      %1474 = vperm.xlu0 %1473, %v1376
      %v1475 = vpop.permute.xlu0 %1474
      %1478 = vset.pattern.permute.xlu0 0
      %1479 = vperm.xlu0 %1478, %v1377
      %v1480 = vpop.permute.xlu0 %1479
      %1483 = vset.pattern.permute.xlu0 0
      %1484 = vperm.xlu0 %1483, %v1378
      %v1485 = vpop.permute.xlu0 %1484
      %1488 = vset.pattern.permute.xlu0 0
      %1489 = vperm.xlu0 %1488, %v1379
      %v1490 = vpop.permute.xlu0 %1489
      %1493 = vset.pattern.permute.xlu0 0
      %1494 = vperm.xlu0 %1493, %v1380
      %v1495 = vpop.permute.xlu0 %1494
      %1498 = vset.pattern.permute.xlu0 0
      %1499 = vperm.xlu0 %1498, %v1381
      %v1500 = vpop.permute.xlu0 %1499
      %1503 = vset.pattern.permute.xlu0 0
      %1504 = vperm.xlu0 %1503, %v1382
      %v1505 = vpop.permute.xlu0 %1504
      %1508 = vset.pattern.permute.xlu0 0
      %1509 = vperm.xlu0 %1508, %v1383
      %v1510 = vpop.permute.xlu0 %1509
      %v1512 = vsub.f32 %v1272, %v1435
      %v1513 = vsub.f32 %v1273, %v1435
      %v1514 = vsub.f32 %v1274, %v1440
      %v1515 = vsub.f32 %v1275, %v1440
      %v1516 = vsub.f32 %v1276, %v1445
      %v1517 = vsub.f32 %v1277, %v1445
      %v1518 = vsub.f32 %v1278, %v1450
      %v1519 = vsub.f32 %v1279, %v1450
      %v1520 = vsub.f32 %v1280, %v1455
      %v1521 = vsub.f32 %v1281, %v1455
      %v1522 = vsub.f32 %v1282, %v1460
      %v1523 = vsub.f32 %v1283, %v1460
      %v1524 = vsub.f32 %v1284, %v1465
      %v1525 = vsub.f32 %v1285, %v1465
      %v1526 = vsub.f32 %v1286, %v1470
      %v1527 = vsub.f32 %v1287, %v1470
      %v1528 = vsub.f32 %v1288, %v1475
      %v1529 = vsub.f32 %v1289, %v1475
      %v1530 = vsub.f32 %v1290, %v1480
      %v1531 = vsub.f32 %v1291, %v1480
      %v1532 = vsub.f32 %v1292, %v1485
      %v1533 = vsub.f32 %v1293, %v1485
      %v1534 = vsub.f32 %v1294, %v1490
      %v1535 = vsub.f32 %v1295, %v1490
      %v1536 = vsub.f32 %v1296, %v1495
      %v1537 = vsub.f32 %v1297, %v1495
      %v1538 = vsub.f32 %v1298, %v1500
      %v1539 = vsub.f32 %v1299, %v1500
      %v1540 = vsub.f32 %v1300, %v1505
      %v1541 = vsub.f32 %v1301, %v1505
      %v1542 = vsub.f32 %v1302, %v1510
      %v1543 = vsub.f32 %v1303, %v1510
      %v1544 = vmul.f32 %v1512, 1.442695
      %v1545 = vpow.pop %v1544
      %v1546 = vmul.f32 %v1513, 1.442695
      %v1547 = vpow.pop %v1546
      %v1548 = vmul.f32 %v1514, 1.442695
      %v1549 = vpow.pop %v1548
      %v1550 = vmul.f32 %v1515, 1.442695
      %v1551 = vpow.pop %v1550
      %v1552 = vmul.f32 %v1516, 1.442695
      %v1553 = vpow.pop %v1552
      %v1554 = vmul.f32 %v1517, 1.442695
      %v1555 = vpow.pop %v1554
      %v1556 = vmul.f32 %v1518, 1.442695
      %v1557 = vpow.pop %v1556
      %v1558 = vmul.f32 %v1519, 1.442695
      %v1559 = vpow.pop %v1558
      %v1560 = vmul.f32 %v1520, 1.442695
      %v1561 = vpow.pop %v1560
      %v1562 = vmul.f32 %v1521, 1.442695
      %v1563 = vpow.pop %v1562
      %v1564 = vmul.f32 %v1522, 1.442695
      %v1565 = vpow.pop %v1564
      %v1566 = vmul.f32 %v1523, 1.442695
      %v1567 = vpow.pop %v1566
      %v1568 = vmul.f32 %v1524, 1.442695
      %v1569 = vpow.pop %v1568
      %v1570 = vmul.f32 %v1525, 1.442695
      %v1571 = vpow.pop %v1570
      %v1572 = vmul.f32 %v1526, 1.442695
      %v1573 = vpow.pop %v1572
      %v1574 = vmul.f32 %v1527, 1.442695
      %v1575 = vpow.pop %v1574
      %v1576 = vmul.f32 %v1528, 1.442695
      %v1577 = vpow.pop %v1576
      %v1578 = vmul.f32 %v1529, 1.442695
      %v1579 = vpow.pop %v1578
      %v1580 = vmul.f32 %v1530, 1.442695
      %v1581 = vpow.pop %v1580
      %v1582 = vmul.f32 %v1531, 1.442695
      %v1583 = vpow.pop %v1582
      %v1584 = vmul.f32 %v1532, 1.442695
      %v1585 = vpow.pop %v1584
      %v1586 = vmul.f32 %v1533, 1.442695
      %v1587 = vpow.pop %v1586
      %v1588 = vmul.f32 %v1534, 1.442695
      %v1589 = vpow.pop %v1588
      %v1590 = vmul.f32 %v1535, 1.442695
      %v1591 = vpow.pop %v1590
      %v1592 = vmul.f32 %v1536, 1.442695
      %v1593 = vpow.pop %v1592
      %v1594 = vmul.f32 %v1537, 1.442695
      %v1595 = vpow.pop %v1594
      %v1596 = vmul.f32 %v1538, 1.442695
      %v1597 = vpow.pop %v1596
      %v1598 = vmul.f32 %v1539, 1.442695
      %v1599 = vpow.pop %v1598
      %v1600 = vmul.f32 %v1540, 1.442695
      %v1601 = vpow.pop %v1600
      %v1602 = vmul.f32 %v1541, 1.442695
      %v1603 = vpow.pop %v1602
      %v1604 = vmul.f32 %v1542, 1.442695
      %v1605 = vpow.pop %v1604
      %v1606 = vmul.f32 %v1543, 1.442695
      %v1607 = vpow.pop %v1606
      %v1608 = vld [vmem:[#allocation3] sm:$0xff]
      %v1609 = vld [vmem:[#allocation3 + $0x8] sm:$0xff]
      %v1610 = vld [vmem:[#allocation3 + $0x10] sm:$0xff]
      %v1611 = vld [vmem:[#allocation3 + $0x18] sm:$0xff]
      %v1612 = vld [vmem:[#allocation3 + $0x20] sm:$0xff]
      %v1613 = vld [vmem:[#allocation3 + $0x28] sm:$0xff]
      %v1614 = vld [vmem:[#allocation3 + $0x30] sm:$0xff]
      %v1615 = vld [vmem:[#allocation3 + $0x38] sm:$0xff]
      %v1616 = vld [vmem:[#allocation3 + $0x40] sm:$0xff]
      %v1617 = vld [vmem:[#allocation3 + $0x48] sm:$0xff]
      %v1618 = vld [vmem:[#allocation3 + $0x50] sm:$0xff]
      %v1619 = vld [vmem:[#allocation3 + $0x58] sm:$0xff]
      %v1620 = vld [vmem:[#allocation3 + $0x60] sm:$0xff]
      %v1621 = vld [vmem:[#allocation3 + $0x68] sm:$0xff]
      %v1622 = vld [vmem:[#allocation3 + $0x70] sm:$0xff]
      %v1623 = vld [vmem:[#allocation3 + $0x78] sm:$0xff]
      %v1624 = vmul.f32 %v1401, %v1608
      %v1625 = vmul.f32 %v1403, %v1609
      %v1626 = vmul.f32 %v1405, %v1610
      %v1627 = vmul.f32 %v1407, %v1611
      %v1628 = vmul.f32 %v1409, %v1612
      %v1629 = vmul.f32 %v1411, %v1613
      %v1630 = vmul.f32 %v1413, %v1614
      %v1631 = vmul.f32 %v1415, %v1615
      %v1632 = vmul.f32 %v1417, %v1616
      %v1633 = vmul.f32 %v1419, %v1617
      %v1634 = vmul.f32 %v1421, %v1618
      %v1635 = vmul.f32 %v1423, %v1619
      %v1636 = vmul.f32 %v1425, %v1620
      %v1637 = vmul.f32 %v1427, %v1621
      %v1638 = vmul.f32 %v1429, %v1622
      %v1639 = vmul.f32 %v1431, %v1623
      %v1640 = vadd.f32 %v1545, %v1547
      %1641 = vadd.xlane.f32.xlu0 %v1640
      %v1642 = vpop.xlane.xlu0 %1641
      %v1643 = vadd.f32 %v1549, %v1551
      %1644 = vadd.xlane.f32.xlu0 %v1643
      %v1645 = vpop.xlane.xlu0 %1644
      %v1646 = vadd.f32 %v1553, %v1555
      %1647 = vadd.xlane.f32.xlu0 %v1646
      %v1648 = vpop.xlane.xlu0 %1647
      %v1649 = vadd.f32 %v1557, %v1559
      %1650 = vadd.xlane.f32.xlu0 %v1649
      %v1651 = vpop.xlane.xlu0 %1650
      %v1652 = vadd.f32 %v1561, %v1563
      %1653 = vadd.xlane.f32.xlu0 %v1652
      %v1654 = vpop.xlane.xlu0 %1653
      %v1655 = vadd.f32 %v1565, %v1567
      %1656 = vadd.xlane.f32.xlu0 %v1655
      %v1657 = vpop.xlane.xlu0 %1656
      %v1658 = vadd.f32 %v1569, %v1571
      %1659 = vadd.xlane.f32.xlu0 %v1658
      %v1660 = vpop.xlane.xlu0 %1659
      %v1661 = vadd.f32 %v1573, %v1575
      %1662 = vadd.xlane.f32.xlu0 %v1661
      %v1663 = vpop.xlane.xlu0 %1662
      %v1664 = vadd.f32 %v1577, %v1579
      %1665 = vadd.xlane.f32.xlu0 %v1664
      %v1666 = vpop.xlane.xlu0 %1665
      %v1667 = vadd.f32 %v1581, %v1583
      %1668 = vadd.xlane.f32.xlu0 %v1667
      %v1669 = vpop.xlane.xlu0 %1668
      %v1670 = vadd.f32 %v1585, %v1587
      %1671 = vadd.xlane.f32.xlu0 %v1670
      %v1672 = vpop.xlane.xlu0 %1671
      %v1673 = vadd.f32 %v1589, %v1591
      %1674 = vadd.xlane.f32.xlu0 %v1673
      %v1675 = vpop.xlane.xlu0 %1674
      %v1676 = vadd.f32 %v1593, %v1595
      %1677 = vadd.xlane.f32.xlu0 %v1676
      %v1678 = vpop.xlane.xlu0 %1677
      %v1679 = vadd.f32 %v1597, %v1599
      %1680 = vadd.xlane.f32.xlu0 %v1679
      %v1681 = vpop.xlane.xlu0 %1680
      %v1682 = vadd.f32 %v1601, %v1603
      %1683 = vadd.xlane.f32.xlu0 %v1682
      %v1684 = vpop.xlane.xlu0 %1683
      %v1685 = vadd.f32 %v1605, %v1607
      %1686 = vadd.xlane.f32.xlu0 %v1685
      %v1687 = vpop.xlane.xlu0 %1686
      %v1688 = vadd.f32 %v1624, %v1642
      %v1689 = vadd.f32 %v1625, %v1645
      %v1690 = vadd.f32 %v1626, %v1648
      %v1691 = vadd.f32 %v1627, %v1651
      %v1692 = vadd.f32 %v1628, %v1654
      %v1693 = vadd.f32 %v1629, %v1657
      %v1694 = vadd.f32 %v1630, %v1660
      %v1695 = vadd.f32 %v1631, %v1663
      %v1696 = vadd.f32 %v1632, %v1666
      %v1697 = vadd.f32 %v1633, %v1669
      %v1698 = vadd.f32 %v1634, %v1672
      %v1699 = vadd.f32 %v1635, %v1675
      %v1700 = vadd.f32 %v1636, %v1678
      %v1701 = vadd.f32 %v1637, %v1681
      %v1702 = vadd.f32 %v1638, %v1684
      %v1703 = vadd.f32 %v1639, %v1687
      %vm1704 = vcmask 7168
      %1705 = vst.msk [vmem:[#allocation3] sm:$0xff] %vm1704, %v1688
      %1706 = vst.msk [vmem:[#allocation3 + $0x8] sm:$0xff] %vm1704, %v1689
      %1707 = vst.msk [vmem:[#allocation3 + $0x10] sm:$0xff] %vm1704, %v1690
      %1708 = vst.msk [vmem:[#allocation3 + $0x18] sm:$0xff] %vm1704, %v1691
      %1709 = vst.msk [vmem:[#allocation3 + $0x20] sm:$0xff] %vm1704, %v1692
      %1710 = vst.msk [vmem:[#allocation3 + $0x28] sm:$0xff] %vm1704, %v1693
      %1711 = vst.msk [vmem:[#allocation3 + $0x30] sm:$0xff] %vm1704, %v1694
      %1712 = vst.msk [vmem:[#allocation3 + $0x38] sm:$0xff] %vm1704, %v1695
      %1713 = vst.msk [vmem:[#allocation3 + $0x40] sm:$0xff] %vm1704, %v1696
      %1714 = vst.msk [vmem:[#allocation3 + $0x48] sm:$0xff] %vm1704, %v1697
      %1715 = vst.msk [vmem:[#allocation3 + $0x50] sm:$0xff] %vm1704, %v1698
      %1716 = vst.msk [vmem:[#allocation3 + $0x58] sm:$0xff] %vm1704, %v1699
      %1717 = vst.msk [vmem:[#allocation3 + $0x60] sm:$0xff] %vm1704, %v1700
      %1718 = vst.msk [vmem:[#allocation3 + $0x68] sm:$0xff] %vm1704, %v1701
      %1719 = vst.msk [vmem:[#allocation3 + $0x70] sm:$0xff] %vm1704, %v1702
      %1720 = vst.msk [vmem:[#allocation3 + $0x78] sm:$0xff] %vm1704, %v1703
      %v1721 = vld [vmem:[#allocation4] sm:$0xff]
      %v1722 = vld [vmem:[#allocation4 + $0x8] sm:$0xff]
      %v1723 = vld [vmem:[#allocation4 + $0x10] sm:$0xff]
      %v1724 = vld [vmem:[#allocation4 + $0x18] sm:$0xff]
      %v1725 = vld [vmem:[#allocation4 + $0x20] sm:$0xff]
      %v1726 = vld [vmem:[#allocation4 + $0x28] sm:$0xff]
      %v1727 = vld [vmem:[#allocation4 + $0x30] sm:$0xff]
      %v1728 = vld [vmem:[#allocation4 + $0x38] sm:$0xff]
      %v1729 = vld [vmem:[#allocation4 + $0x40] sm:$0xff]
      %v1730 = vld [vmem:[#allocation4 + $0x48] sm:$0xff]
      %v1731 = vld [vmem:[#allocation4 + $0x50] sm:$0xff]
      %v1732 = vld [vmem:[#allocation4 + $0x58] sm:$0xff]
      %v1733 = vld [vmem:[#allocation4 + $0x60] sm:$0xff]
      %v1734 = vld [vmem:[#allocation4 + $0x68] sm:$0xff]
      %v1735 = vld [vmem:[#allocation4 + $0x70] sm:$0xff]
      %v1736 = vld [vmem:[#allocation4 + $0x78] sm:$0xff]
      %1738 = vset.pattern.permute.xlu0 0
      %1739 = vperm.xlu0 %1738, %v1401
      %v1740 = vpop.permute.xlu0 %1739
      %1743 = vset.pattern.permute.xlu0 0
      %1744 = vperm.xlu0 %1743, %v1403
      %v1745 = vpop.permute.xlu0 %1744
      %1748 = vset.pattern.permute.xlu0 0
      %1749 = vperm.xlu0 %1748, %v1405
      %v1750 = vpop.permute.xlu0 %1749
      %1753 = vset.pattern.permute.xlu0 0
      %1754 = vperm.xlu0 %1753, %v1407
      %v1755 = vpop.permute.xlu0 %1754
      %1758 = vset.pattern.permute.xlu0 0
      %1759 = vperm.xlu0 %1758, %v1409
      %v1760 = vpop.permute.xlu0 %1759
      %1763 = vset.pattern.permute.xlu0 0
      %1764 = vperm.xlu0 %1763, %v1411
      %v1765 = vpop.permute.xlu0 %1764
      %1768 = vset.pattern.permute.xlu0 0
      %1769 = vperm.xlu0 %1768, %v1413
      %v1770 = vpop.permute.xlu0 %1769
      %1773 = vset.pattern.permute.xlu0 0
      %1774 = vperm.xlu0 %1773, %v1415
      %v1775 = vpop.permute.xlu0 %1774
      %1778 = vset.pattern.permute.xlu0 0
      %1779 = vperm.xlu0 %1778, %v1417
      %v1780 = vpop.permute.xlu0 %1779
      %1783 = vset.pattern.permute.xlu0 0
      %1784 = vperm.xlu0 %1783, %v1419
      %v1785 = vpop.permute.xlu0 %1784
      %1788 = vset.pattern.permute.xlu0 0
      %1789 = vperm.xlu0 %1788, %v1421
      %v1790 = vpop.permute.xlu0 %1789
      %1793 = vset.pattern.permute.xlu0 0
      %1794 = vperm.xlu0 %1793, %v1423
      %v1795 = vpop.permute.xlu0 %1794
      %1798 = vset.pattern.permute.xlu0 0
      %1799 = vperm.xlu0 %1798, %v1425
      %v1800 = vpop.permute.xlu0 %1799
      %1803 = vset.pattern.permute.xlu0 0
      %1804 = vperm.xlu0 %1803, %v1427
      %v1805 = vpop.permute.xlu0 %1804
      %1808 = vset.pattern.permute.xlu0 0
      %1809 = vperm.xlu0 %1808, %v1429
      %v1810 = vpop.permute.xlu0 %1809
      %1813 = vset.pattern.permute.xlu0 0
      %1814 = vperm.xlu0 %1813, %v1431
      %v1815 = vpop.permute.xlu0 %1814
      %v1817 = vmul.f32 %v1740, %v1721
      %v1818 = vmul.f32 %v1745, %v1722
      %v1819 = vmul.f32 %v1750, %v1723
      %v1820 = vmul.f32 %v1755, %v1724
      %v1821 = vmul.f32 %v1760, %v1725
      %v1822 = vmul.f32 %v1765, %v1726
      %v1823 = vmul.f32 %v1770, %v1727
      %v1824 = vmul.f32 %v1775, %v1728
      %v1825 = vmul.f32 %v1780, %v1729
      %v1826 = vmul.f32 %v1785, %v1730
      %v1827 = vmul.f32 %v1790, %v1731
      %v1828 = vmul.f32 %v1795, %v1732
      %v1829 = vmul.f32 %v1800, %v1733
      %v1830 = vmul.f32 %v1805, %v1734
      %v1831 = vmul.f32 %v1810, %v1735
      %v1832 = vmul.f32 %v1815, %v1736
      %v1833 = vpack.c.bf16 %v1549, %v1545
      %v1834 = vpack.c.bf16 %v1551, %v1547
      %v1835 = vpack.c.bf16 %v1557, %v1553
      %v1836 = vpack.c.bf16 %v1559, %v1555
      %v1837 = vpack.c.bf16 %v1565, %v1561
      %v1838 = vpack.c.bf16 %v1567, %v1563
      %v1839 = vpack.c.bf16 %v1573, %v1569
      %v1840 = vpack.c.bf16 %v1575, %v1571
      %v1841 = vpack.c.bf16 %v1581, %v1577
      %v1842 = vpack.c.bf16 %v1583, %v1579
      %v1843 = vpack.c.bf16 %v1589, %v1585
      %v1844 = vpack.c.bf16 %v1591, %v1587
      %v1845 = vpack.c.bf16 %v1597, %v1593
      %v1846 = vpack.c.bf16 %v1599, %v1595
      %v1847 = vpack.c.bf16 %v1605, %v1601
      %v1848 = vpack.c.bf16 %v1607, %v1603
      %v1849 = vpack.c.bf16 %v690, %v687
      %v1850 = vpack.c.bf16 %v696, %v693
      %v1851 = vpack.c.bf16 %v702, %v699
      %v1852 = vpack.c.bf16 %v708, %v705
      %v1853 = vpack.c.bf16 %v714, %v711
      %v1854 = vpack.c.bf16 %v720, %v717
      %v1855 = vpack.c.bf16 %v726, %v723
      %v1856 = vpack.c.bf16 %v732, %v729
      %v1857 = vpack.c.bf16 %v738, %v735
      %v1858 = vpack.c.bf16 %v744, %v741
      %v1859 = vpack.c.bf16 %v750, %v747
      %v1860 = vpack.c.bf16 %v756, %v753
      %v1861 = vpack.c.bf16 %v762, %v759
      %v1862 = vpack.c.bf16 %v768, %v765
      %v1863 = vpack.c.bf16 %v774, %v771
      %v1864 = vpack.c.bf16 %v780, %v777
      %1865 = vmatpush.bf16.msra.mxu0 %v1856
      %1866 = vmatpush.bf16.msra.mxu0 %v1855
      %1867 = vmatpush.bf16.msra.mxu0 %v1854
      %1868 = vmatpush.bf16.msra.mxu0 %v1853
      %1869 = vmatpush.bf16.msra.mxu0 %v1852
      %1870 = vmatpush.bf16.msra.mxu0 %v1851
      %1871 = vmatpush.bf16.msra.mxu0 %v1850
      %1872 = vmatpush.bf16.msra.mxu0 %v1849
      %1873 = vmatmul.bf16.gmra.mxu0 %v1833
      %v1874 = vpop.f32.mrf.mxu0
      %v1875 = vadd.f32 0.0, %v1874
      %v1876 = vpop.f32.mrf.mxu0
      %v1877 = vadd.f32 0.0, %v1876
      %1878 = vmatmul.bf16.gmra.mxu0 %v1835
      %v1879 = vpop.f32.mrf.mxu0
      %v1880 = vadd.f32 0.0, %v1879
      %v1881 = vpop.f32.mrf.mxu0
      %v1882 = vadd.f32 0.0, %v1881
      %1883 = vmatmul.bf16.gmra.mxu0 %v1837
      %v1884 = vpop.f32.mrf.mxu0
      %v1885 = vadd.f32 0.0, %v1884
      %v1886 = vpop.f32.mrf.mxu0
      %v1887 = vadd.f32 0.0, %v1886
      %1888 = vmatmul.bf16.gmra.mxu0 %v1839
      %v1889 = vpop.f32.mrf.mxu0
      %v1890 = vadd.f32 0.0, %v1889
      %v1891 = vpop.f32.mrf.mxu0
      %v1892 = vadd.f32 0.0, %v1891
      %1893 = vmatmul.bf16.gmra.mxu0 %v1841
      %v1894 = vpop.f32.mrf.mxu0
      %v1895 = vadd.f32 0.0, %v1894
      %v1896 = vpop.f32.mrf.mxu0
      %v1897 = vadd.f32 0.0, %v1896
      %1898 = vmatmul.bf16.gmra.mxu0 %v1843
      %v1899 = vpop.f32.mrf.mxu0
      %v1900 = vadd.f32 0.0, %v1899
      %v1901 = vpop.f32.mrf.mxu0
      %v1902 = vadd.f32 0.0, %v1901
      %1903 = vmatmul.bf16.gmra.mxu0 %v1845
      %v1904 = vpop.f32.mrf.mxu0
      %v1905 = vadd.f32 0.0, %v1904
      %v1906 = vpop.f32.mrf.mxu0
      %v1907 = vadd.f32 0.0, %v1906
      %1908 = vmatmul.bf16.gmra.mxu0 %v1847
      %v1909 = vpop.f32.mrf.mxu0
      %v1910 = vadd.f32 0.0, %v1909
      %v1911 = vpop.f32.mrf.mxu0
      %v1912 = vadd.f32 0.0, %v1911
      %1913 = vdwg.mxu0
      %1914 = vmatpush.bf16.msra.mxu0 %v1864
      %1915 = vmatpush.bf16.msra.mxu0 %v1863
      %1916 = vmatpush.bf16.msra.mxu0 %v1862
      %1917 = vmatpush.bf16.msra.mxu0 %v1861
      %1918 = vmatpush.bf16.msra.mxu0 %v1860
      %1919 = vmatpush.bf16.msra.mxu0 %v1859
      %1920 = vmatpush.bf16.msra.mxu0 %v1858
      %1921 = vmatpush.bf16.msra.mxu0 %v1857
      %1922 = vmatmul.bf16.gmra.mxu0 %v1834
      %v1923 = vpop.f32.mrf.mxu0
      %v1924 = vadd.f32 %v1875, %v1923
      %v1925 = vpop.f32.mrf.mxu0
      %v1926 = vadd.f32 %v1877, %v1925
      %1927 = vmatmul.bf16.gmra.mxu0 %v1836
      %v1928 = vpop.f32.mrf.mxu0
      %v1929 = vadd.f32 %v1880, %v1928
      %v1930 = vpop.f32.mrf.mxu0
      %v1931 = vadd.f32 %v1882, %v1930
      %1932 = vmatmul.bf16.gmra.mxu0 %v1838
      %v1933 = vpop.f32.mrf.mxu0
      %v1934 = vadd.f32 %v1885, %v1933
      %v1935 = vpop.f32.mrf.mxu0
      %v1936 = vadd.f32 %v1887, %v1935
      %1937 = vmatmul.bf16.gmra.mxu0 %v1840
      %v1938 = vpop.f32.mrf.mxu0
      %v1939 = vadd.f32 %v1890, %v1938
      %v1940 = vpop.f32.mrf.mxu0
      %v1941 = vadd.f32 %v1892, %v1940
      %1942 = vmatmul.bf16.gmra.mxu0 %v1842
      %v1943 = vpop.f32.mrf.mxu0
      %v1944 = vadd.f32 %v1895, %v1943
      %v1945 = vpop.f32.mrf.mxu0
      %v1946 = vadd.f32 %v1897, %v1945
      %1947 = vmatmul.bf16.gmra.mxu0 %v1844
      %v1948 = vpop.f32.mrf.mxu0
      %v1949 = vadd.f32 %v1900, %v1948
      %v1950 = vpop.f32.mrf.mxu0
      %v1951 = vadd.f32 %v1902, %v1950
      %1952 = vmatmul.bf16.gmra.mxu0 %v1846
      %v1953 = vpop.f32.mrf.mxu0
      %v1954 = vadd.f32 %v1905, %v1953
      %v1955 = vpop.f32.mrf.mxu0
      %v1956 = vadd.f32 %v1907, %v1955
      %1957 = vmatmul.bf16.gmra.mxu0 %v1848
      %v1958 = vpop.f32.mrf.mxu0
      %v1959 = vadd.f32 %v1910, %v1958
      %v1960 = vpop.f32.mrf.mxu0
      %v1961 = vadd.f32 %v1912, %v1960
      %1962 = vdwg.mxu0
      %v1963 = vadd.f32 %v1817, %v1924
      %v1964 = vadd.f32 %v1818, %v1926
      %v1965 = vadd.f32 %v1819, %v1929
      %v1966 = vadd.f32 %v1820, %v1931
      %v1967 = vadd.f32 %v1821, %v1934
      %v1968 = vadd.f32 %v1822, %v1936
      %v1969 = vadd.f32 %v1823, %v1939
      %v1970 = vadd.f32 %v1824, %v1941
      %v1971 = vadd.f32 %v1825, %v1944
      %v1972 = vadd.f32 %v1826, %v1946
      %v1973 = vadd.f32 %v1827, %v1949
      %v1974 = vadd.f32 %v1828, %v1951
      %v1975 = vadd.f32 %v1829, %v1954
      %v1976 = vadd.f32 %v1830, %v1956
      %v1977 = vadd.f32 %v1831, %v1959
      %v1978 = vadd.f32 %v1832, %v1961
      %vm1979 = vcmask 261120
      %1980 = vst.msk [vmem:[#allocation4] sm:$0xff] %vm1979, %v1963
      %1981 = vst.msk [vmem:[#allocation4 + $0x8] sm:$0xff] %vm1979, %v1964
      %1982 = vst.msk [vmem:[#allocation4 + $0x10] sm:$0xff] %vm1979, %v1965
      %1983 = vst.msk [vmem:[#allocation4 + $0x18] sm:$0xff] %vm1979, %v1966
      %1984 = vst.msk [vmem:[#allocation4 + $0x20] sm:$0xff] %vm1979, %v1967
      %1985 = vst.msk [vmem:[#allocation4 + $0x28] sm:$0xff] %vm1979, %v1968
      %1986 = vst.msk [vmem:[#allocation4 + $0x30] sm:$0xff] %vm1979, %v1969
      %1987 = vst.msk [vmem:[#allocation4 + $0x38] sm:$0xff] %vm1979, %v1970
      %1988 = vst.msk [vmem:[#allocation4 + $0x40] sm:$0xff] %vm1979, %v1971
      %1989 = vst.msk [vmem:[#allocation4 + $0x48] sm:$0xff] %vm1979, %v1972
      %1990 = vst.msk [vmem:[#allocation4 + $0x50] sm:$0xff] %vm1979, %v1973
      %1991 = vst.msk [vmem:[#allocation4 + $0x58] sm:$0xff] %vm1979, %v1974
      %1992 = vst.msk [vmem:[#allocation4 + $0x60] sm:$0xff] %vm1979, %v1975
      %1993 = vst.msk [vmem:[#allocation4 + $0x68] sm:$0xff] %vm1979, %v1976
      %1994 = vst.msk [vmem:[#allocation4 + $0x70] sm:$0xff] %vm1979, %v1977
      %1995 = vst.msk [vmem:[#allocation4 + $0x78] sm:$0xff] %vm1979, %v1978
      %1996 = vst.msk [vmem:[#allocation2] sm:$0xff] %vm1704, %v1368
      %1997 = vst.msk [vmem:[#allocation2 + $0x8] sm:$0xff] %vm1704, %v1369
      %1998 = vst.msk [vmem:[#allocation2 + $0x10] sm:$0xff] %vm1704, %v1370
      %1999 = vst.msk [vmem:[#allocation2 + $0x18] sm:$0xff] %vm1704, %v1371
      %2000 = vst.msk [vmem:[#allocation2 + $0x20] sm:$0xff] %vm1704, %v1372
      %2001 = vst.msk [vmem:[#allocation2 + $0x28] sm:$0xff] %vm1704, %v1373
      %2002 = vst.msk [vmem:[#allocation2 + $0x30] sm:$0xff] %vm1704, %v1374
      %2003 = vst.msk [vmem:[#allocation2 + $0x38] sm:$0xff] %vm1704, %v1375
      %2004 = vst.msk [vmem:[#allocation2 + $0x40] sm:$0xff] %vm1704, %v1376
      %2005 = vst.msk [vmem:[#allocation2 + $0x48] sm:$0xff] %vm1704, %v1377
      %2006 = vst.msk [vmem:[#allocation2 + $0x50] sm:$0xff] %vm1704, %v1378
      %2007 = vst.msk [vmem:[#allocation2 + $0x58] sm:$0xff] %vm1704, %v1379
      %2008 = vst.msk [vmem:[#allocation2 + $0x60] sm:$0xff] %vm1704, %v1380
      %2009 = vst.msk [vmem:[#allocation2 + $0x68] sm:$0xff] %vm1704, %v1381
      %2010 = vst.msk [vmem:[#allocation2 + $0x70] sm:$0xff] %vm1704, %v1382
      %2011 = vst.msk [vmem:[#allocation2 + $0x78] sm:$0xff] %vm1704, %v1383
      // Predicated region
      $region49: #{gat_forward.2} parent=43 // pred_check
        %p2012 = pneg %p332
      $region50: #{gat_forward.2} parent=43 // pred_check_branch
        %2014 = sbr.rel (%p2012) target = $region52
      $region51: #{gat_forward.2} parent=43 // pred_region
        %v2015 = vld [vmem:[#allocation3] sm:$0xff]
        %v2016 = vld [vmem:[#allocation3 + $0x8] sm:$0xff]
        %v2017 = vld [vmem:[#allocation3 + $0x10] sm:$0xff]
        %v2018 = vld [vmem:[#allocation3 + $0x18] sm:$0xff]
        %v2019 = vld [vmem:[#allocation3 + $0x20] sm:$0xff]
        %v2020 = vld [vmem:[#allocation3 + $0x28] sm:$0xff]
        %v2021 = vld [vmem:[#allocation3 + $0x30] sm:$0xff]
        %v2022 = vld [vmem:[#allocation3 + $0x38] sm:$0xff]
        %v2023 = vld [vmem:[#allocation3 + $0x40] sm:$0xff]
        %v2024 = vld [vmem:[#allocation3 + $0x48] sm:$0xff]
        %v2025 = vld [vmem:[#allocation3 + $0x50] sm:$0xff]
        %v2026 = vld [vmem:[#allocation3 + $0x58] sm:$0xff]
        %v2027 = vld [vmem:[#allocation3 + $0x60] sm:$0xff]
        %v2028 = vld [vmem:[#allocation3 + $0x68] sm:$0xff]
        %v2029 = vld [vmem:[#allocation3 + $0x70] sm:$0xff]
        %v2030 = vld [vmem:[#allocation3 + $0x78] sm:$0xff]
        %v2031 = vrcp.pop %v2015
        %v2032 = vrcp.pop %v2016
        %v2033 = vrcp.pop %v2017
        %v2034 = vrcp.pop %v2018
        %v2035 = vrcp.pop %v2019
        %v2036 = vrcp.pop %v2020
        %v2037 = vrcp.pop %v2021
        %v2038 = vrcp.pop %v2022
        %v2039 = vrcp.pop %v2023
        %v2040 = vrcp.pop %v2024
        %v2041 = vrcp.pop %v2025
        %v2042 = vrcp.pop %v2026
        %v2043 = vrcp.pop %v2027
        %v2044 = vrcp.pop %v2028
        %v2045 = vrcp.pop %v2029
        %v2046 = vrcp.pop %v2030
        %v2047 = vld [vmem:[#allocation4] sm:$0xff]
        %v2048 = vld [vmem:[#allocation4 + $0x8] sm:$0xff]
        %v2049 = vld [vmem:[#allocation4 + $0x10] sm:$0xff]
        %v2050 = vld [vmem:[#allocation4 + $0x18] sm:$0xff]
        %v2051 = vld [vmem:[#allocation4 + $0x20] sm:$0xff]
        %v2052 = vld [vmem:[#allocation4 + $0x28] sm:$0xff]
        %v2053 = vld [vmem:[#allocation4 + $0x30] sm:$0xff]
        %v2054 = vld [vmem:[#allocation4 + $0x38] sm:$0xff]
        %v2055 = vld [vmem:[#allocation4 + $0x40] sm:$0xff]
        %v2056 = vld [vmem:[#allocation4 + $0x48] sm:$0xff]
        %v2057 = vld [vmem:[#allocation4 + $0x50] sm:$0xff]
        %v2058 = vld [vmem:[#allocation4 + $0x58] sm:$0xff]
        %v2059 = vld [vmem:[#allocation4 + $0x60] sm:$0xff]
        %v2060 = vld [vmem:[#allocation4 + $0x68] sm:$0xff]
        %v2061 = vld [vmem:[#allocation4 + $0x70] sm:$0xff]
        %v2062 = vld [vmem:[#allocation4 + $0x78] sm:$0xff]
        %2064 = vset.pattern.permute.xlu0 0
        %2065 = vperm.xlu0 %2064, %v2031
        %v2066 = vpop.permute.xlu0 %2065
        %2069 = vset.pattern.permute.xlu0 0
        %2070 = vperm.xlu0 %2069, %v2032
        %v2071 = vpop.permute.xlu0 %2070
        %2074 = vset.pattern.permute.xlu0 0
        %2075 = vperm.xlu0 %2074, %v2033
        %v2076 = vpop.permute.xlu0 %2075
        %2079 = vset.pattern.permute.xlu0 0
        %2080 = vperm.xlu0 %2079, %v2034
        %v2081 = vpop.permute.xlu0 %2080
        %2084 = vset.pattern.permute.xlu0 0
        %2085 = vperm.xlu0 %2084, %v2035
        %v2086 = vpop.permute.xlu0 %2085
        %2089 = vset.pattern.permute.xlu0 0
        %2090 = vperm.xlu0 %2089, %v2036
        %v2091 = vpop.permute.xlu0 %2090
        %2094 = vset.pattern.permute.xlu0 0
        %2095 = vperm.xlu0 %2094, %v2037
        %v2096 = vpop.permute.xlu0 %2095
        %2099 = vset.pattern.permute.xlu0 0
        %2100 = vperm.xlu0 %2099, %v2038
        %v2101 = vpop.permute.xlu0 %2100
        %2104 = vset.pattern.permute.xlu0 0
        %2105 = vperm.xlu0 %2104, %v2039
        %v2106 = vpop.permute.xlu0 %2105
        %2109 = vset.pattern.permute.xlu0 0
        %2110 = vperm.xlu0 %2109, %v2040
        %v2111 = vpop.permute.xlu0 %2110
        %2114 = vset.pattern.permute.xlu0 0
        %2115 = vperm.xlu0 %2114, %v2041
        %v2116 = vpop.permute.xlu0 %2115
        %2119 = vset.pattern.permute.xlu0 0
        %2120 = vperm.xlu0 %2119, %v2042
        %v2121 = vpop.permute.xlu0 %2120
        %2124 = vset.pattern.permute.xlu0 0
        %2125 = vperm.xlu0 %2124, %v2043
        %v2126 = vpop.permute.xlu0 %2125
        %2129 = vset.pattern.permute.xlu0 0
        %2130 = vperm.xlu0 %2129, %v2044
        %v2131 = vpop.permute.xlu0 %2130
        %2134 = vset.pattern.permute.xlu0 0
        %2135 = vperm.xlu0 %2134, %v2045
        %v2136 = vpop.permute.xlu0 %2135
        %2139 = vset.pattern.permute.xlu0 0
        %2140 = vperm.xlu0 %2139, %v2046
        %v2141 = vpop.permute.xlu0 %2140
        %v2143 = vmul.f32 %v2047, %v2066
        %v2144 = vmul.f32 %v2048, %v2071
        %v2145 = vmul.f32 %v2049, %v2076
        %v2146 = vmul.f32 %v2050, %v2081
        %v2147 = vmul.f32 %v2051, %v2086
        %v2148 = vmul.f32 %v2052, %v2091
        %v2149 = vmul.f32 %v2053, %v2096
        %v2150 = vmul.f32 %v2054, %v2101
        %v2151 = vmul.f32 %v2055, %v2106
        %v2152 = vmul.f32 %v2056, %v2111
        %v2153 = vmul.f32 %v2057, %v2116
        %v2154 = vmul.f32 %v2058, %v2121
        %v2155 = vmul.f32 %v2059, %v2126
        %v2156 = vmul.f32 %v2060, %v2131
        %v2157 = vmul.f32 %v2061, %v2136
        %v2158 = vmul.f32 %v2062, %v2141
        %v2159 = vld [vmem:[%s4] sm:$0x1]
        %v2161 = vperm.slane %v2159, 0
        %v2163 = vadd.f32 %v2143, %v2161
        %v2164 = vadd.f32 %v2144, %v2161
        %v2165 = vadd.f32 %v2145, %v2161
        %v2166 = vadd.f32 %v2146, %v2161
        %v2167 = vadd.f32 %v2147, %v2161
        %v2168 = vadd.f32 %v2148, %v2161
        %v2169 = vadd.f32 %v2149, %v2161
        %v2170 = vadd.f32 %v2150, %v2161
        %v2171 = vadd.f32 %v2151, %v2161
        %v2172 = vadd.f32 %v2152, %v2161
        %v2173 = vadd.f32 %v2153, %v2161
        %v2174 = vadd.f32 %v2154, %v2161
        %v2175 = vadd.f32 %v2155, %v2161
        %v2176 = vadd.f32 %v2156, %v2161
        %v2177 = vadd.f32 %v2157, %v2161
        %v2178 = vadd.f32 %v2158, %v2161
        %vm2179 = vcmp.gt.f32.partialorder %v2163, 0.0
        %vm2180 = vcmp.gt.f32.partialorder %v2164, 0.0
        %vm2181 = vcmp.gt.f32.partialorder %v2165, 0.0
        %vm2182 = vcmp.gt.f32.partialorder %v2166, 0.0
        %vm2183 = vcmp.gt.f32.partialorder %v2167, 0.0
        %vm2184 = vcmp.gt.f32.partialorder %v2168, 0.0
        %vm2185 = vcmp.gt.f32.partialorder %v2169, 0.0
        %vm2186 = vcmp.gt.f32.partialorder %v2170, 0.0
        %vm2187 = vcmp.gt.f32.partialorder %v2171, 0.0
        %vm2188 = vcmp.gt.f32.partialorder %v2172, 0.0
        %vm2189 = vcmp.gt.f32.partialorder %v2173, 0.0
        %vm2190 = vcmp.gt.f32.partialorder %v2174, 0.0
        %vm2191 = vcmp.gt.f32.partialorder %v2175, 0.0
        %vm2192 = vcmp.gt.f32.partialorder %v2176, 0.0
        %vm2193 = vcmp.gt.f32.partialorder %v2177, 0.0
        %vm2194 = vcmp.gt.f32.partialorder %v2178, 0.0
        %v2195 = vmin.f32 %v2163, 0.0
        %v2196 = vmin.f32 %v2164, 0.0
        %v2197 = vmin.f32 %v2165, 0.0
        %v2198 = vmin.f32 %v2166, 0.0
        %v2199 = vmin.f32 %v2167, 0.0
        %v2200 = vmin.f32 %v2168, 0.0
        %v2201 = vmin.f32 %v2169, 0.0
        %v2202 = vmin.f32 %v2170, 0.0
        %v2203 = vmin.f32 %v2171, 0.0
        %v2204 = vmin.f32 %v2172, 0.0
        %v2205 = vmin.f32 %v2173, 0.0
        %v2206 = vmin.f32 %v2174, 0.0
        %v2207 = vmin.f32 %v2175, 0.0
        %v2208 = vmin.f32 %v2176, 0.0
        %v2209 = vmin.f32 %v2177, 0.0
        %v2210 = vmin.f32 %v2178, 0.0
        %v2211 = vmul.f32 %v2195, 1.442695
        %v2212 = vpow.pop %v2211
        %v2213 = vmul.f32 %v2196, 1.442695
        %v2214 = vpow.pop %v2213
        %v2215 = vmul.f32 %v2197, 1.442695
        %v2216 = vpow.pop %v2215
        %v2217 = vmul.f32 %v2198, 1.442695
        %v2218 = vpow.pop %v2217
        %v2219 = vmul.f32 %v2199, 1.442695
        %v2220 = vpow.pop %v2219
        %v2221 = vmul.f32 %v2200, 1.442695
        %v2222 = vpow.pop %v2221
        %v2223 = vmul.f32 %v2201, 1.442695
        %v2224 = vpow.pop %v2223
        %v2225 = vmul.f32 %v2202, 1.442695
        %v2226 = vpow.pop %v2225
        %v2227 = vmul.f32 %v2203, 1.442695
        %v2228 = vpow.pop %v2227
        %v2229 = vmul.f32 %v2204, 1.442695
        %v2230 = vpow.pop %v2229
        %v2231 = vmul.f32 %v2205, 1.442695
        %v2232 = vpow.pop %v2231
        %v2233 = vmul.f32 %v2206, 1.442695
        %v2234 = vpow.pop %v2233
        %v2235 = vmul.f32 %v2207, 1.442695
        %v2236 = vpow.pop %v2235
        %v2237 = vmul.f32 %v2208, 1.442695
        %v2238 = vpow.pop %v2237
        %v2239 = vmul.f32 %v2209, 1.442695
        %v2240 = vpow.pop %v2239
        %v2241 = vmul.f32 %v2210, 1.442695
        %v2242 = vpow.pop %v2241
        %v2243 = vsub.f32 %v2212, 1.0
        %v2244 = vsub.f32 %v2214, 1.0
        %v2245 = vsub.f32 %v2216, 1.0
        %v2246 = vsub.f32 %v2218, 1.0
        %v2247 = vsub.f32 %v2220, 1.0
        %v2248 = vsub.f32 %v2222, 1.0
        %v2249 = vsub.f32 %v2224, 1.0
        %v2250 = vsub.f32 %v2226, 1.0
        %v2251 = vsub.f32 %v2228, 1.0
        %v2252 = vsub.f32 %v2230, 1.0
        %v2253 = vsub.f32 %v2232, 1.0
        %v2254 = vsub.f32 %v2234, 1.0
        %v2255 = vsub.f32 %v2236, 1.0
        %v2256 = vsub.f32 %v2238, 1.0
        %v2257 = vsub.f32 %v2240, 1.0
        %v2258 = vsub.f32 %v2242, 1.0
        %v2259 = vsel %vm2179, %v2163, %v2243
        %v2260 = vsel %vm2180, %v2164, %v2244
        %v2261 = vsel %vm2181, %v2165, %v2245
        %v2262 = vsel %vm2182, %v2166, %v2246
        %v2263 = vsel %vm2183, %v2167, %v2247
        %v2264 = vsel %vm2184, %v2168, %v2248
        %v2265 = vsel %vm2185, %v2169, %v2249
        %v2266 = vsel %vm2186, %v2170, %v2250
        %v2267 = vsel %vm2187, %v2171, %v2251
        %v2268 = vsel %vm2188, %v2172, %v2252
        %v2269 = vsel %vm2189, %v2173, %v2253
        %v2270 = vsel %vm2190, %v2174, %v2254
        %v2271 = vsel %vm2191, %v2175, %v2255
        %v2272 = vsel %vm2192, %v2176, %v2256
        %v2273 = vsel %vm2193, %v2177, %v2257
        %v2274 = vsel %vm2194, %v2178, %v2258
        %v2275 = vld [vmem:[%s5] sm:$0xff]
        %v2276 = vld [vmem:[%s5 + $0x8] sm:$0xff]
        %v2277 = vld [vmem:[%s5 + $0x10] sm:$0xff]
        %v2278 = vld [vmem:[%s5 + $0x18] sm:$0xff]
        %v2280 = vsel %vm1979, %v2259, 0
        %v2283 = vsel %vm1979, %v2260, 0
        %v2286 = vsel %vm1979, %v2261, 0
        %v2289 = vsel %vm1979, %v2262, 0
        %v2292 = vsel %vm1979, %v2263, 0
        %v2295 = vsel %vm1979, %v2264, 0
        %v2298 = vsel %vm1979, %v2265, 0
        %v2301 = vsel %vm1979, %v2266, 0
        %v2304 = vsel %vm1979, %v2267, 0
        %v2307 = vsel %vm1979, %v2268, 0
        %v2310 = vsel %vm1979, %v2269, 0
        %v2313 = vsel %vm1979, %v2270, 0
        %v2316 = vsel %vm1979, %v2271, 0
        %v2319 = vsel %vm1979, %v2272, 0
        %v2322 = vsel %vm1979, %v2273, 0
        %v2325 = vsel %vm1979, %v2274, 0
        %2327 = vmatpush.msra.mxu0 0.0
        %2328 = vmatpush.msra.mxu0 0.0
        %2329 = vmatpush.msra.mxu0 0.0
        %2330 = vmatpush.msra.mxu0 0.0
        %2331 = vmatpush.msra.mxu0 0.0
        %2332 = vmatpush.msra.mxu0 0.0
        %2333 = vmatpush.msra.mxu0 0.0
        %2334 = vmatpush.msra.mxu0 0.0
        %2335 = vmatpush.msra.mxu0 0.0
        %2336 = vmatpush.msra.mxu0 0.0
        %2337 = vmatpush.msra.mxu0 0.0
        %2338 = vmatpush.msra.mxu0 0.0
        %2339 = vmatpush.msra.mxu0 %v2278
        %2340 = vmatpush.msra.mxu0 %v2277
        %2341 = vmatpush.msra.mxu0 %v2276
        %2342 = vmatpush.msra.mxu0 %v2275
        %2343 = vmatmul.f32.gmra.mxu0 %v2280
        %v2344 = vpop.f32.mrf.mxu0
        %v2345 = vadd.f32 0.0, %v2344
        %2346 = vmatmul.f32.gmra.mxu0 %v2283
        %v2347 = vpop.f32.mrf.mxu0
        %v2348 = vadd.f32 0.0, %v2347
        %2349 = vmatmul.f32.gmra.mxu0 %v2286
        %v2350 = vpop.f32.mrf.mxu0
        %v2351 = vadd.f32 0.0, %v2350
        %2352 = vmatmul.f32.gmra.mxu0 %v2289
        %v2353 = vpop.f32.mrf.mxu0
        %v2354 = vadd.f32 0.0, %v2353
        %2355 = vmatmul.f32.gmra.mxu0 %v2292
        %v2356 = vpop.f32.mrf.mxu0
        %v2357 = vadd.f32 0.0, %v2356
        %2358 = vmatmul.f32.gmra.mxu0 %v2295
        %v2359 = vpop.f32.mrf.mxu0
        %v2360 = vadd.f32 0.0, %v2359
        %2361 = vmatmul.f32.gmra.mxu0 %v2298
        %v2362 = vpop.f32.mrf.mxu0
        %v2363 = vadd.f32 0.0, %v2362
        %2364 = vmatmul.f32.gmra.mxu0 %v2301
        %v2365 = vpop.f32.mrf.mxu0
        %v2366 = vadd.f32 0.0, %v2365
        %2367 = vmatmul.f32.gmra.mxu0 %v2304
        %v2368 = vpop.f32.mrf.mxu0
        %v2369 = vadd.f32 0.0, %v2368
        %2370 = vmatmul.f32.gmra.mxu0 %v2307
        %v2371 = vpop.f32.mrf.mxu0
        %v2372 = vadd.f32 0.0, %v2371
        %2373 = vmatmul.f32.gmra.mxu0 %v2310
        %v2374 = vpop.f32.mrf.mxu0
        %v2375 = vadd.f32 0.0, %v2374
        %2376 = vmatmul.f32.gmra.mxu0 %v2313
        %v2377 = vpop.f32.mrf.mxu0
        %v2378 = vadd.f32 0.0, %v2377
        %2379 = vmatmul.f32.gmra.mxu0 %v2316
        %v2380 = vpop.f32.mrf.mxu0
        %v2381 = vadd.f32 0.0, %v2380
        %2382 = vmatmul.f32.gmra.mxu0 %v2319
        %v2383 = vpop.f32.mrf.mxu0
        %v2384 = vadd.f32 0.0, %v2383
        %2385 = vmatmul.f32.gmra.mxu0 %v2322
        %v2386 = vpop.f32.mrf.mxu0
        %v2387 = vadd.f32 0.0, %v2386
        %2388 = vmatmul.f32.gmra.mxu0 %v2325
        %v2389 = vpop.f32.mrf.mxu0
        %v2390 = vadd.f32 0.0, %v2389
        %2391 = vdwg.mxu0
        %vm2392 = vcmask 80896
        %2393 = vst.msk [vmem:[%s328] sm:$0xff] %vm2392, %v2345
        %2394 = vst.msk [vmem:[%s328 + $0x8] sm:$0xff] %vm2392, %v2348
        %2395 = vst.msk [vmem:[%s328 + $0x10] sm:$0xff] %vm2392, %v2351
        %2396 = vst.msk [vmem:[%s328 + $0x18] sm:$0xff] %vm2392, %v2354
        %2397 = vst.msk [vmem:[%s328 + $0x20] sm:$0xff] %vm2392, %v2357
        %2398 = vst.msk [vmem:[%s328 + $0x28] sm:$0xff] %vm2392, %v2360
        %2399 = vst.msk [vmem:[%s328 + $0x30] sm:$0xff] %vm2392, %v2363
        %2400 = vst.msk [vmem:[%s328 + $0x38] sm:$0xff] %vm2392, %v2366
        %2401 = vst.msk [vmem:[%s328 + $0x40] sm:$0xff] %vm2392, %v2369
        %2402 = vst.msk [vmem:[%s328 + $0x48] sm:$0xff] %vm2392, %v2372
        %2403 = vst.msk [vmem:[%s328 + $0x50] sm:$0xff] %vm2392, %v2375
        %2404 = vst.msk [vmem:[%s328 + $0x58] sm:$0xff] %vm2392, %v2378
        %2405 = vst.msk [vmem:[%s328 + $0x60] sm:$0xff] %vm2392, %v2381
        %2406 = vst.msk [vmem:[%s328 + $0x68] sm:$0xff] %vm2392, %v2384
        %2407 = vst.msk [vmem:[%s328 + $0x70] sm:$0xff] %vm2392, %v2387
        %2408 = vst.msk [vmem:[%s328 + $0x78] sm:$0xff] %vm2392, %v2390
      $region52: #{gat_forward.2} parent=43 // pred_fallthru
        _
      %s2409 = smul.u32 16, %s21
      %p2410 = scmp.lt.s32.totalorder %s2409, 31
      %s2411 = scalar_select %p2410, %s2409, 31
      %s2412 = smul.addr %s2411, 8
      %s2413 = scalar_lea.vmem %s6, %s2412
      // Predicated region
      $region53: #{gat_forward.2} parent=43 // pred_check
        %p2414 = pneg %p190
      $region54: #{gat_forward.2} parent=43 // pred_check_branch
        %2416 = sbr.rel (%p2414) target = $region56
      $region55: #{gat_forward.2} parent=43 // pred_region
        %s2417 = smul.u32 16, %s21
      $region56: #{gat_forward.2} parent=43 // pred_fallthru
        _
    $region44: #{gat_forward.2} parent=5 // pred_fallthru
      _
    %p2418 = scmp.le.s32.totalorder 2, %s12
    // Predicated region
    $region57: #{gat_forward.2} parent=5 // pred_check
      %p2419 = pneg %p2418
    $region58: #{gat_forward.2} parent=5 // pred_check_branch
      %2421 = sbr.rel (%p2419) target = $region60
    $region59: #{gat_forward.2} parent=5 // pred_region
      %s2422 = ssub.s32 %s12, 2
      // Predicated region
      $region61: #{gat_forward.2} parent=59 // pred_check
        %p2423 = pneg %p196
      $region62: #{gat_forward.2} parent=59 // pred_check_branch
        %2425 = sbr.rel (%p2423) target = $region64
      $region63: #{gat_forward.2} parent=59 // pred_region
        %s2426 = smul.u32 16, %s23
        %p2427 = scmp.lt.s32.totalorder %s2426, 31
        %s2428 = scalar_select %p2427, %s2426, 31
        %s2429 = smul.addr %s2428, 8
        %s2430 = scalar_lea.vmem %s6, %s2429
      $region64: #{gat_forward.2} parent=59 // pred_fallthru
        _
    $region60: #{gat_forward.2} parent=5 // pred_fallthru
      _
  $region6: #{gat_forward.2} parent=0 // loop_footer
    %s16 = sadd.s32 1, %s12
  $region7: #{gat_forward.2} parent=0 // loop_footer_branch
    %11 = sbr.rel target = $region3
  $region8: #{gat_forward.2} parent=0 // loop_exit
    _

</llo_original>
